<compile_context>
chip_gen: v7x
topology: tpu7x:2x2x1
jax: 0.10.0
libtpu: 0.0.40
codegen_flags: <defaults>
</compile_context>

<pallas_src>
import math

import jax
import jax.numpy as jnp
from jax.experimental import pallas as pl
from jax.experimental.pallas import tpu as pltpu

# ----------------------------------------------------------------------------
# Hyper-parameters (BIOTClassifier(emb_size=256, heads=8, depth=4, n_fft=200,
# hop_length=100, n_channels=18)).
# ----------------------------------------------------------------------------
EMB = 256
HEADS = 8
DEPTH = 4
N_FFT = 200
HOP = 100
N_FREQ = N_FFT // 2 + 1          # 101 onesided rFFT bins
PAD_FREQ = 128                   # lane-dense padding of the frequency axis
N_CHANNEL_TOKENS = 18
N_CLASSES = 6                    # args.n_class
CLS_PAD = 128                    # lane-dense padding of the class axis
FF_MULT = 4
FF_DIM = EMB * FF_MULT
D_HEAD = EMB // HEADS
LN_EPS = 1e-5
MAX_POS = 1024

VMEM_LIMIT = 32 * 1024 * 1024    # portable across v5e / v6e / v7x (64 MiB VMEM)
K1_BLOCK_M = 512                 # row tile for the spectrogram/embedding kernel


def _round_up(n, m):
    return ((n + m - 1) // m) * m


# ----------------------------------------------------------------------------
# In-kernel helpers
# ----------------------------------------------------------------------------
def _layernorm(x, g, b):
    mu = jnp.mean(x, axis=-1, keepdims=True)
    var = jnp.mean(jnp.square(x - mu), axis=-1, keepdims=True)
    return (x - mu) * jax.lax.rsqrt(var + LN_EPS) * g + b


def _gelu_tanh(x):
    # tanh-approximation GELU: the tanh runs on the EUP slot, leaving the VPU free.
    return 0.5 * x * (1.0 + jnp.tanh(0.7978845608028654 * (x + 0.044715 * x * x * x)))


def _const_spec(shape):
    return pl.BlockSpec(shape, lambda *_: (0,) * len(shape))


# ----------------------------------------------------------------------------
# K1: |STFT| + patch frequency embedding + channel token + positional encoding
#     rows = flattened (batch, channel, frame); row-tiled for full MXU tiles.
# ----------------------------------------------------------------------------
def _spectro_embed_kernel(fr_ref, basis_ref, pw_ref, pb_ref, add_ref, o_ref):
    spec = jnp.dot(fr_ref[...], basis_ref[...],
                   preferred_element_type=jnp.float32)         # [bm, 256] (cos|sin)
    re = spec[:, :PAD_FREQ]
    im = spec[:, PAD_FREQ:]
    mag = jnp.sqrt(re * re + im * im)                          # [bm, 128] |STFT|
    emb = jnp.dot(mag.astype(jnp.bfloat16), pw_ref[...],
                  preferred_element_type=jnp.float32)          # [bm, 256]
    o_ref[...] = (emb + pb_ref[...] + add_ref[...]).astype(o_ref.dtype)


def spectro_embed(frames2d, basis, pw, pb, add_full):
    M = frames2d.shape[0]
    bm = min(K1_BLOCK_M, _round_up(M, 8))
    Mp = _round_up(M, bm)
    if Mp != M:
        frames2d = jnp.pad(frames2d, ((0, Mp - M), (0, 0)))
        add_full = jnp.pad(add_full, ((0, Mp - M), (0, 0)))
    out = pl.pallas_call(
        _spectro_embed_kernel,
        grid=(Mp // bm,),
        in_specs=[pl.BlockSpec((bm, N_FFT), lambda i: (i, 0)),
                  _const_spec(basis.shape),
                  _const_spec(pw.shape),
                  _const_spec(pb.shape),
                  pl.BlockSpec((bm, EMB), lambda i: (i, 0))],
        out_specs=pl.BlockSpec((bm, EMB), lambda i: (i, 0)),
        out_shape=jax.ShapeDtypeStruct((Mp, EMB), jnp.bfloat16),
        compiler_params=pltpu.CompilerParams(
            dimension_semantics=("parallel",),
            vmem_limit_bytes=VMEM_LIMIT),
    )(frames2d, basis, pw, pb, add_full)
    return out[:M]


# ----------------------------------------------------------------------------
# K2: fused transformer stack (+ mean-pool + ELU + classifier head)
#     grid = (B, DEPTH); residual carried in VMEM scratch across the depth axis.
# ----------------------------------------------------------------------------
def _stack_kernel(h_ref, g1_ref, bb1_ref, wqkv_ref, wo_ref, bo_ref,
                  g2_ref, bb2_ref, w1_ref, fb1_ref, w2_ref, fb2_ref,
                  mask_ref, cw_ref, cb_ref, o_ref, acc_ref):
    d = pl.program_id(1)

    @pl.when(d == 0)
    def _():
        acc_ref[...] = h_ref[0].astype(jnp.float32)

    x = acc_ref[...]                                           # [N, 256] f32 residual
    mask = mask_ref[...]                                       # [256, 256] block-diag 0/1

    # ---- PreNorm linear attention -------------------------------------------
    xn = _layernorm(x, g1_ref[d], bb1_ref[d])
    qkv = jnp.dot(xn.astype(jnp.bfloat16), wqkv_ref[d],
                  preferred_element_type=jnp.float32)          # [N, 768]
    q = qkv[:, :EMB]
    k = qkv[:, EMB:2 * EMB]
    v = qkv[:, 2 * EMB:]

    # q: softmax over each head's 32 features.  Softmax is shift-invariant, so a
    # shared per-row max only changes rounding; the per-head sums are computed on
    # the MXU with the block-diagonal ones mask (broadcast back to all 32 lanes).
    qe = jnp.exp(q - jnp.max(q, axis=-1, keepdims=True))
    qden = jnp.dot(qe, mask, preferred_element_type=jnp.float32)
    qs = qe * pl.reciprocal(qden, approx=True) * (D_HEAD ** -0.5)

    # k: softmax over the sequence axis (per-lane, no head slicing needed)
    ke = jnp.exp(k - jnp.max(k, axis=0, keepdims=True))
    ks = ke * pl.reciprocal(jnp.sum(ke, axis=0, keepdims=True), approx=True)

    # full-width context, masked to the eight diagonal 32x32 head blocks
    ctx = jax.lax.dot_general(ks, v, (((0,), (0,)), ((), ())),
                              preferred_element_type=jnp.float32)   # [256, 256]
    attn = jnp.dot(qs, ctx * mask, preferred_element_type=jnp.float32)  # [N, 256]

    proj = jnp.dot(attn.astype(jnp.bfloat16), wo_ref[d],
                   preferred_element_type=jnp.float32) + bo_ref[d]
    x = x + proj

    # ---- PreNorm feed-forward -----------------------------------------------
    xn2 = _layernorm(x, g2_ref[d], bb2_ref[d])
    f = jnp.dot(xn2.astype(jnp.bfloat16), w1_ref[d],
                preferred_element_type=jnp.float32) + fb1_ref[d]    # [N, 1024]
    f = _gelu_tanh(f)
    y = jnp.dot(f.astype(jnp.bfloat16), w2_ref[d],
                preferred_element_type=jnp.float32) + fb2_ref[d]
    x = x + y
    acc_ref[...] = x

    # ---- mean-pool + ELU + classification head at the last depth step -------
    @pl.when(d == DEPTH - 1)
    def _():
        xm = jnp.mean(x, axis=0, keepdims=True)                # [1, 256]
        feat = jnp.where(xm > 0.0, xm, jnp.exp(xm) - 1.0)      # ELU(alpha=1)
        logits = jnp.dot(feat, cw_ref[...],
                         preferred_element_type=jnp.float32) + cb_ref[...]
        o_ref[0] = jnp.broadcast_to(logits, (8, CLS_PAD)).astype(o_ref.dtype)


def transformer_stack(h, p):
    B, N, E = h.shape
    wbytes = 2 * int(p["wqkv"].size + p["wo"].size + p["w1"].size + p["w2"].size)
    flops = 2 * B * DEPTH * N * E * (3 * E + 4 * E + 2 * FF_DIM)
    ce = pl.CostEstimate(flops=int(flops),
                         transcendentals=int(B * DEPTH * N * (2 * E + FF_DIM)),
                         bytes_accessed=int(B * N * E * 2 + B * 8 * CLS_PAD * 4 + wbytes))
    in_specs = [pl.BlockSpec((1, N, E), lambda b, d: (b, 0, 0))]
    const_names = ("ln1_g", "ln1_b", "wqkv", "wo", "bo",
                   "ln2_g", "ln2_b", "w1", "b1", "w2", "b2",
                   "head_mask", "clf_w", "clf_b")
    in_specs += [_const_spec(p[name].shape) for name in const_names]
    return pl.pallas_call(
        _stack_kernel,
        grid=(B, DEPTH),
        in_specs=in_specs,
        out_specs=pl.BlockSpec((1, 8, CLS_PAD), lambda b, d: (b, 0, 0)),
        out_shape=jax.ShapeDtypeStruct((B, 8, CLS_PAD), jnp.float32),
        scratch_shapes=[pltpu.VMEM((N, E), jnp.float32)],
        compiler_params=pltpu.CompilerParams(
            dimension_semantics=("parallel", "arbitrary"),
            vmem_limit_bytes=VMEM_LIMIT),
        cost_estimate=ce,
    )(h, *[p[name] for name in const_names])


# ----------------------------------------------------------------------------
# Deterministic parameter construction (synthetic; no checkpoint loading)
# ----------------------------------------------------------------------------
def _sinusoidal_pe(max_len, d_model):
    position = jnp.arange(max_len, dtype=jnp.float32)[:, None]
    div_term = jnp.exp(jnp.arange(0, d_model, 2, dtype=jnp.float32)
                       * (-math.log(10000.0) / d_model))
    pe = jnp.zeros((max_len, d_model), jnp.float32)
    pe = pe.at[:, 0::2].set(jnp.sin(position * div_term))
    pe = pe.at[:, 1::2].set(jnp.cos(position * div_term))
    return pe


def _dft_basis():
    n = jnp.arange(N_FFT, dtype=jnp.float32)[:, None]
    f = jnp.arange(N_FREQ, dtype=jnp.float32)[None, :]
    ang = 2.0 * math.pi * n * f / N_FFT
    return jnp.cos(ang), jnp.sin(ang)          # each [n_fft, n_freq]


def init_params(key):
    def dense(k, shape, scale=0.02):
        return scale * jax.random.normal(k, shape, jnp.float32)

    cos_b, sin_b = _dft_basis()
    # lane-dense packed DFT basis: cos in lanes [0,101), sin in lanes [128,229)
    basis = jnp.zeros((N_FFT, 2 * PAD_FREQ), jnp.float32)
    basis = basis.at[:, :N_FREQ].set(cos_b)
    basis = basis.at[:, PAD_FREQ:PAD_FREQ + N_FREQ].set(sin_b)

    keys = jax.random.split(key, 3 + DEPTH)
    patch_w = dense(keys[0], (N_FREQ, EMB))
    patch_w_pad = jnp.zeros((PAD_FREQ, EMB), jnp.float32).at[:N_FREQ].set(patch_w)

    clf_w = dense(keys[2], (EMB, N_CLASSES))
    clf_w_pad = jnp.zeros((EMB, CLS_PAD), jnp.float32).at[:, :N_CLASSES].set(clf_w)

    lane = jnp.arange(EMB)
    head_mask = (lane[:, None] // D_HEAD == lane[None, :] // D_HEAD).astype(jnp.float32)

    ln1_g, ln1_b, wqkv, wo, bo = [], [], [], [], []
    ln2_g, ln2_b, w1, b1, w2, b2 = [], [], [], [], [], []
    for d in range(DEPTH):
        lk = jax.random.split(keys[3 + d], 6)
        wq = dense(lk[0], (EMB, EMB))
        wk = dense(lk[1], (EMB, EMB))
        wv = dense(lk[2], (EMB, EMB))
        ln1_g.append(jnp.ones((1, EMB), jnp.float32))
        ln1_b.append(jnp.zeros((1, EMB), jnp.float32))
        wqkv.append(jnp.concatenate([wq, wk, wv], axis=1).astype(jnp.bfloat16))
        wo.append(dense(lk[3], (EMB, EMB)).astype(jnp.bfloat16))
        bo.append(jnp.zeros((1, EMB), jnp.float32))
        ln2_g.append(jnp.ones((1, EMB), jnp.float32))
        ln2_b.append(jnp.zeros((1, EMB), jnp.float32))
        w1.append(dense(lk[4], (EMB, FF_DIM)).astype(jnp.bfloat16))
        b1.append(jnp.zeros((1, FF_DIM), jnp.float32))
        w2.append(dense(lk[5], (FF_DIM, EMB)).astype(jnp.bfloat16))
        b2.append(jnp.zeros((1, EMB), jnp.float32))

    return {
        "basis": basis.astype(jnp.bfloat16),
        "patch_w": patch_w_pad.astype(jnp.bfloat16),
        "patch_b": jnp.zeros((1, EMB), jnp.float32),
        "channel_tokens": dense(keys[1], (N_CHANNEL_TOKENS, EMB)),
        "pos_pe": _sinusoidal_pe(MAX_POS, EMB),
        "head_mask": head_mask,
        "clf_w": clf_w_pad,
        "clf_b": jnp.zeros((1, CLS_PAD), jnp.float32),
        "ln1_g": jnp.stack(ln1_g), "ln1_b": jnp.stack(ln1_b),
        "wqkv": jnp.stack(wqkv), "wo": jnp.stack(wo), "bo": jnp.stack(bo),
        "ln2_g": jnp.stack(ln2_g), "ln2_b": jnp.stack(ln2_b),
        "w1": jnp.stack(w1), "b1": jnp.stack(b1),
        "w2": jnp.stack(w2), "b2": jnp.stack(b2),
    }


# ----------------------------------------------------------------------------
# Forward pass (BIOT.forward, ch_num <= 18 path)
# ----------------------------------------------------------------------------
def biot_forward(params, x):
    B, C, S, P = x.shape
    if C > 18:
        # TODO(synk): ConvNet channel-reduction branch (ch_num > 18) not
        # implemented — ConvNet definition is not provided in the module source.
        raise NotImplementedError("ch_num > 18 branch requires ConvNet definition")

    # rearrange 'b c s p -> b c (s p)'
    sig = x.reshape(B, C, S * P).astype(jnp.float32)
    L = S * P
    # TODO(synk): torch.stft framing assumed rectangular window, center=False,
    # normalized=False, onesided=True — verify against the pretrained BIOTEncoder.
    T = 1 + (L - N_FFT) // HOP
    idx = (jnp.arange(T) * HOP)[:, None] + jnp.arange(N_FFT)[None, :]   # [T, n_fft]
    frames = sig[:, :, idx].reshape(B * C * T, N_FFT).astype(jnp.bfloat16)

    # per-(channel, frame) additive table: channel token + sinusoidal PE
    add_table = (params["channel_tokens"][:C][:, None, :]
                 + params["pos_pe"][:T][None, :, :]).reshape(C * T, EMB)
    add_full = jnp.tile(add_table, (B, 1))                               # [B*C*T, EMB]

    # K1: |STFT| + patch embedding + token/PE adds  -> h: [B, C*T, 256] bf16
    h = spectro_embed(frames, params["basis"], params["patch_w"],
                      params["patch_b"], add_full).reshape(B, C * T, EMB)

    # K2: fused 4-layer linear-attention transformer + mean-pool + ELU + head
    logits_pad = transformer_stack(h, params)                           # [B, 8, 128]
    return logits_pad[:, 0, :N_CLASSES]


# ----------------------------------------------------------------------------
if __name__ == "__main__":
    key = jax.random.PRNGKey(0)
    pkey, xkey = jax.random.split(key)
    params = init_params(pkey)

    # small but consistent input: [batch=2, ch=4 (<=18), seq=4, patch=100]
    # => time series length 400 per channel, 3 STFT frames, transformer seq = 12
    B, C, S, P = 2, 4, 4, 100
    x = jax.random.normal(xkey, (B, C, S, P), jnp.float32)

    fwd = jax.jit(biot_forward)
    logit = fwd(params, x)
    jax.block_until_ready(logit)
    assert logit.shape == (B, N_CLASSES), logit.shape
    assert bool(jnp.all(jnp.isfinite(logit)))
    print("KERNEL_OK")
</pallas_src>

<mosaic_0001>
module attributes {stable_mosaic.version = 11 : i64} {
  func.func @_stack_kernel(%arg0: i32, %arg1: i32, %arg2: memref<1x12x256xbf16, #tpu.memory_space<vmem>>, %arg3: memref<4x1x256xf32, #tpu.memory_space<vmem>>, %arg4: memref<4x1x256xf32, #tpu.memory_space<vmem>>, %arg5: memref<4x256x768xbf16, #tpu.memory_space<vmem>>, %arg6: memref<4x256x256xbf16, #tpu.memory_space<vmem>>, %arg7: memref<4x1x256xf32, #tpu.memory_space<vmem>>, %arg8: memref<4x1x256xf32, #tpu.memory_space<vmem>>, %arg9: memref<4x1x256xf32, #tpu.memory_space<vmem>>, %arg10: memref<4x256x1024xbf16, #tpu.memory_space<vmem>>, %arg11: memref<4x1x1024xf32, #tpu.memory_space<vmem>>, %arg12: memref<4x1024x256xbf16, #tpu.memory_space<vmem>>, %arg13: memref<4x1x256xf32, #tpu.memory_space<vmem>>, %arg14: memref<256x256xf32, #tpu.memory_space<vmem>>, %arg15: memref<256x128xf32, #tpu.memory_space<vmem>>, %arg16: memref<1x128xf32, #tpu.memory_space<vmem>>, %arg17: memref<1x8x128xf32, #tpu.memory_space<vmem>>, %arg18: memref<12x256xf32, #tpu.memory_space<vmem>>) attributes {dimension_semantics = [#tpu.dimension_semantics<parallel>, #tpu.dimension_semantics<arbitrary>], iteration_bounds = array<i64: 2, 4>, scalar_prefetch = 0 : i64, scratch_operands = 1 : i64, tpu.core_type = #tpu.core_type<tc>, window_params = [{transform_indices = @transform_0, window_bounds = array<i64: 1, 12, 256>}, {pipeline_mode = #tpu.pipeline_mode<synchronous>, transform_indices = @transform_1, window_bounds = array<i64: 4, 1, 256>}, {pipeline_mode = #tpu.pipeline_mode<synchronous>, transform_indices = @transform_2, window_bounds = array<i64: 4, 1, 256>}, {pipeline_mode = #tpu.pipeline_mode<synchronous>, transform_indices = @transform_3, window_bounds = array<i64: 4, 256, 768>}, {pipeline_mode = #tpu.pipeline_mode<synchronous>, transform_indices = @transform_4, window_bounds = array<i64: 4, 256, 256>}, {pipeline_mode = #tpu.pipeline_mode<synchronous>, transform_indices = @transform_5, window_bounds = array<i64: 4, 1, 256>}, {pipeline_mode = #tpu.pipeline_mode<synchronous>, transform_indices = @transform_6, window_bounds = array<i64: 4, 1, 256>}, {pipeline_mode = #tpu.pipeline_mode<synchronous>, transform_indices = @transform_7, window_bounds = array<i64: 4, 1, 256>}, {pipeline_mode = #tpu.pipeline_mode<synchronous>, transform_indices = @transform_8, window_bounds = array<i64: 4, 256, 1024>}, {pipeline_mode = #tpu.pipeline_mode<synchronous>, transform_indices = @transform_9, window_bounds = array<i64: 4, 1, 1024>}, {pipeline_mode = #tpu.pipeline_mode<synchronous>, transform_indices = @transform_10, window_bounds = array<i64: 4, 1024, 256>}, {pipeline_mode = #tpu.pipeline_mode<synchronous>, transform_indices = @transform_11, window_bounds = array<i64: 4, 1, 256>}, {pipeline_mode = #tpu.pipeline_mode<synchronous>, transform_indices = @transform_12, window_bounds = array<i64: 256, 256>}, {pipeline_mode = #tpu.pipeline_mode<synchronous>, transform_indices = @transform_13, window_bounds = array<i64: 256, 128>}, {pipeline_mode = #tpu.pipeline_mode<synchronous>, transform_indices = @transform_14, window_bounds = array<i64: 1, 128>}, {transform_indices = @transform_15, window_bounds = array<i64: 1, 8, 128>}]} {
    %c0_i32 = arith.constant 0 : i32
    %0 = arith.cmpi eq, %arg1, %c0_i32 : i32
    %1 = arith.extui %0 : i1 to i32
    %c0_i32_0 = arith.constant 0 : i32
    %2 = arith.cmpi ne, %1, %c0_i32_0 : i32
    scf.if %2 {
      %c0_53 = arith.constant 0 : index
      %c0_54 = arith.constant 0 : index
      %c0_55 = arith.constant 0 : index
      %141 = vector.load %arg2[%c0_53, %c0_54, %c0_55] : memref<1x12x256xbf16, #tpu.memory_space<vmem>>, vector<1x12x256xbf16>
      %142 = vector.shape_cast %141 : vector<1x12x256xbf16> to vector<12x256xbf16>
      %143 = arith.extf %142 : vector<12x256xbf16> to vector<12x256xf32>
      %c0_56 = arith.constant 0 : index
      %c0_57 = arith.constant 0 : index
      %144 = vector.load %arg18[%c0_56, %c0_57] : memref<12x256xf32, #tpu.memory_space<vmem>>, vector<12x256xf32>
      tpu.vector_store %arg18[%c0_56, %c0_57], %143 {strides = array<i32>} : memref<12x256xf32, #tpu.memory_space<vmem>>, vector<12x256xf32>,
    } else {
    }
    %c0 = arith.constant 0 : index
    %c0_1 = arith.constant 0 : index
    %3 = vector.load %arg18[%c0, %c0_1] : memref<12x256xf32, #tpu.memory_space<vmem>>, vector<12x256xf32>
    %c0_2 = arith.constant 0 : index
    %c0_3 = arith.constant 0 : index
    %4 = vector.load %arg14[%c0_2, %c0_3] : memref<256x256xf32, #tpu.memory_space<vmem>>, vector<256x256xf32>
    %5 = arith.index_cast %arg1 : i32 to index
    %c0_4 = arith.constant 0 : index
    %c0_5 = arith.constant 0 : index
    %6 = vector.load %arg3[%5, %c0_4, %c0_5] : memref<4x1x256xf32, #tpu.memory_space<vmem>>, vector<1x1x256xf32>
    %7 = vector.shape_cast %6 : vector<1x1x256xf32> to vector<1x256xf32>
    %8 = arith.index_cast %arg1 : i32 to index
    %c0_6 = arith.constant 0 : index
    %c0_7 = arith.constant 0 : index
    %9 = vector.load %arg4[%8, %c0_6, %c0_7] : memref<4x1x256xf32, #tpu.memory_space<vmem>>, vector<1x1x256xf32>
    %10 = vector.shape_cast %9 : vector<1x1x256xf32> to vector<1x256xf32>
    %cst = arith.constant dense<0.000000e+00> : vector<12xf32>
    %11 = vector.multi_reduction <add>, %3, %cst [1] : vector<12x256xf32> to vector<12xf32>
    %12 = vector.shape_cast %11 : vector<12xf32> to vector<12x1xf32>
    %cst_8 = arith.constant 2.560000e+02 : f32
    %13 = vector.broadcast %cst_8 : f32 to vector<12x1xf32>
    %14 = arith.divf %12, %13 : vector<12x1xf32>
    %15 = vector.broadcast %14 : vector<12x1xf32> to vector<12x256xf32>
    %16 = arith.subf %3, %15 : vector<12x256xf32>
    %17 = arith.mulf %16, %16 : vector<12x256xf32>
    %cst_9 = arith.constant dense<0.000000e+00> : vector<12xf32>
    %18 = vector.multi_reduction <add>, %17, %cst_9 [1] : vector<12x256xf32> to vector<12xf32>
    %19 = vector.shape_cast %18 : vector<12xf32> to vector<12x1xf32>
    %cst_10 = arith.constant 2.560000e+02 : f32
    %20 = vector.broadcast %cst_10 : f32 to vector<12x1xf32>
    %21 = arith.divf %19, %20 : vector<12x1xf32>
    %22 = vector.broadcast %14 : vector<12x1xf32> to vector<12x256xf32>
    %23 = arith.subf %3, %22 : vector<12x256xf32>
    %cst_11 = arith.constant 9.99999974E-6 : f32
    %24 = vector.broadcast %cst_11 : f32 to vector<12x1xf32>
    %25 = arith.addf %21, %24 : vector<12x1xf32>
    %26 = math.rsqrt %25 : vector<12x1xf32>
    %27 = vector.broadcast %26 : vector<12x1xf32> to vector<12x256xf32>
    %28 = arith.mulf %23, %27 : vector<12x256xf32>
    %29 = vector.broadcast %7 : vector<1x256xf32> to vector<12x256xf32>
    %30 = arith.mulf %28, %29 : vector<12x256xf32>
    %31 = vector.broadcast %10 : vector<1x256xf32> to vector<12x256xf32>
    %32 = arith.addf %30, %31 : vector<12x256xf32>
    %33 = arith.truncf %32 : vector<12x256xf32> to vector<12x256xbf16>
    %34 = arith.index_cast %arg1 : i32 to index
    %c0_12 = arith.constant 0 : index
    %c0_13 = arith.constant 0 : index
    %35 = vector.load %arg5[%34, %c0_12, %c0_13] : memref<4x256x768xbf16, #tpu.memory_space<vmem>>, vector<1x256x768xbf16>
    %36 = vector.shape_cast %35 : vector<1x256x768xbf16> to vector<256x768xbf16>
    %cst_14 = arith.constant dense<0.000000e+00> : vector<12x768xf32>
    %37 = tpu.matmul %33, %36, %cst_14 {dimension_numbers = #tpu.dot_dimension_numbers<[1], [0], [0], [1], [0, 0, 1, 1], [], []>} : vector<12x256xbf16>, vector<256x768xbf16>, vector<12x768xf32> -> vector<12x768xf32>
    %38 = vector.extract_strided_slice %37 {offsets = [0, 0], sizes = [12, 256], strides = [1, 1]} : vector<12x768xf32> to vector<12x256xf32>
    %39 = vector.extract_strided_slice %37 {offsets = [0, 256], sizes = [12, 256], strides = [1, 1]} : vector<12x768xf32> to vector<12x256xf32>
    %40 = vector.extract_strided_slice %37 {offsets = [0, 512], sizes = [12, 256], strides = [1, 1]} : vector<12x768xf32> to vector<12x256xf32>
    %cst_15 = arith.constant dense<0xFF800000> : vector<12xf32>
    %41 = vector.multi_reduction <maximumf>, %38, %cst_15 [1] : vector<12x256xf32> to vector<12xf32>
    %42 = vector.shape_cast %41 : vector<12xf32> to vector<12x1xf32>
    %43 = vector.broadcast %42 : vector<12x1xf32> to vector<12x256xf32>
    %44 = arith.subf %38, %43 : vector<12x256xf32>
    %45 = math.exp %44 : vector<12x256xf32>
    %cst_16 = arith.constant dense<0.000000e+00> : vector<12x256xf32>
    %46 = tpu.matmul %45, %4, %cst_16 {dimension_numbers = #tpu.dot_dimension_numbers<[1], [0], [0], [1], [0, 0, 1, 1], [], []>} : vector<12x256xf32>, vector<256x256xf32>, vector<12x256xf32> -> vector<12x256xf32>
    %47 = tpu.reciprocal %46 {approx = true} : vector<12x256xf32> -> vector<12x256xf32>
    %48 = arith.mulf %45, %47 : vector<12x256xf32>
    %cst_17 = arith.constant 0.176776692 : f32
    %49 = vector.broadcast %cst_17 : f32 to vector<12x256xf32>
    %50 = arith.mulf %48, %49 : vector<12x256xf32>
    %cst_18 = arith.constant dense<0xFF800000> : vector<256xf32>
    %51 = vector.multi_reduction <maximumf>, %39, %cst_18 [0] : vector<12x256xf32> to vector<256xf32>
    %52 = vector.shape_cast %51 : vector<256xf32> to vector<1x256xf32>
    %53 = vector.broadcast %52 : vector<1x256xf32> to vector<12x256xf32>
    %54 = arith.subf %39, %53 : vector<12x256xf32>
    %55 = math.exp %54 : vector<12x256xf32>
    %cst_19 = arith.constant dense<0.000000e+00> : vector<256xf32>
    %56 = vector.multi_reduction <add>, %55, %cst_19 [0] : vector<12x256xf32> to vector<256xf32>
    %57 = vector.shape_cast %56 : vector<256xf32> to vector<1x256xf32>
    %58 = tpu.reciprocal %57 {approx = true} : vector<1x256xf32> -> vector<1x256xf32>
    %59 = vector.broadcast %58 : vector<1x256xf32> to vector<12x256xf32>
    %60 = arith.mulf %55, %59 : vector<12x256xf32>
    %cst_20 = arith.constant dense<0.000000e+00> : vector<256x256xf32>
    %61 = tpu.matmul %60, %40, %cst_20 {dimension_numbers = #tpu.dot_dimension_numbers<[0], [0], [1], [1], [0, 1, 1, 1], [], []>} : vector<12x256xf32>, vector<12x256xf32>, vector<256x256xf32> -> vector<256x256xf32>
    %62 = arith.mulf %61, %4 : vector<256x256xf32>
    %cst_21 = arith.constant dense<0.000000e+00> : vector<12x256xf32>
    %63 = tpu.matmul %50, %62, %cst_21 {dimension_numbers = #tpu.dot_dimension_numbers<[1], [0], [0], [1], [0, 0, 1, 1], [], []>} : vector<12x256xf32>, vector<256x256xf32>, vector<12x256xf32> -> vector<12x256xf32>
    %64 = arith.truncf %63 : vector<12x256xf32> to vector<12x256xbf16>
    %65 = arith.index_cast %arg1 : i32 to index
    %c0_22 = arith.constant 0 : index
    %c0_23 = arith.constant 0 : index
    %66 = vector.load %arg6[%65, %c0_22, %c0_23] : memref<4x256x256xbf16, #tpu.memory_space<vmem>>, vector<1x256x256xbf16>
    %67 = vector.shape_cast %66 : vector<1x256x256xbf16> to vector<256x256xbf16>
    %cst_24 = arith.constant dense<0.000000e+00> : vector<12x256xf32>
    %68 = tpu.matmul %64, %67, %cst_24 {dimension_numbers = #tpu.dot_dimension_numbers<[1], [0], [0], [1], [0, 0, 1, 1], [], []>} : vector<12x256xbf16>, vector<256x256xbf16>, vector<12x256xf32> -> vector<12x256xf32>
    %69 = arith.index_cast %arg1 : i32 to index
    %c0_25 = arith.constant 0 : index
    %c0_26 = arith.constant 0 : index
    %70 = vector.load %arg7[%69, %c0_25, %c0_26] : memref<4x1x256xf32, #tpu.memory_space<vmem>>, vector<1x1x256xf32>
    %71 = vector.shape_cast %70 : vector<1x1x256xf32> to vector<1x256xf32>
    %72 = vector.broadcast %71 : vector<1x256xf32> to vector<12x256xf32>
    %73 = arith.addf %68, %72 : vector<12x256xf32>
    %74 = arith.addf %3, %73 : vector<12x256xf32>
    %75 = arith.index_cast %arg1 : i32 to index
    %c0_27 = arith.constant 0 : index
    %c0_28 = arith.constant 0 : index
    %76 = vector.load %arg8[%75, %c0_27, %c0_28] : memref<4x1x256xf32, #tpu.memory_space<vmem>>, vector<1x1x256xf32>
    %77 = vector.shape_cast %76 : vector<1x1x256xf32> to vector<1x256xf32>
    %78 = arith.index_cast %arg1 : i32 to index
    %c0_29 = arith.constant 0 : index
    %c0_30 = arith.constant 0 : index
    %79 = vector.load %arg9[%78, %c0_29, %c0_30] : memref<4x1x256xf32, #tpu.memory_space<vmem>>, vector<1x1x256xf32>
    %80 = vector.shape_cast %79 : vector<1x1x256xf32> to vector<1x256xf32>
    %cst_31 = arith.constant dense<0.000000e+00> : vector<12xf32>
    %81 = vector.multi_reduction <add>, %74, %cst_31 [1] : vector<12x256xf32> to vector<12xf32>
    %82 = vector.shape_cast %81 : vector<12xf32> to vector<12x1xf32>
    %cst_32 = arith.constant 2.560000e+02 : f32
    %83 = vector.broadcast %cst_32 : f32 to vector<12x1xf32>
    %84 = arith.divf %82, %83 : vector<12x1xf32>
    %85 = vector.broadcast %84 : vector<12x1xf32> to vector<12x256xf32>
    %86 = arith.subf %74, %85 : vector<12x256xf32>
    %87 = arith.mulf %86, %86 : vector<12x256xf32>
    %cst_33 = arith.constant dense<0.000000e+00> : vector<12xf32>
    %88 = vector.multi_reduction <add>, %87, %cst_33 [1] : vector<12x256xf32> to vector<12xf32>
    %89 = vector.shape_cast %88 : vector<12xf32> to vector<12x1xf32>
    %cst_34 = arith.constant 2.560000e+02 : f32
    %90 = vector.broadcast %cst_34 : f32 to vector<12x1xf32>
    %91 = arith.divf %89, %90 : vector<12x1xf32>
    %92 = vector.broadcast %84 : vector<12x1xf32> to vector<12x256xf32>
    %93 = arith.subf %74, %92 : vector<12x256xf32>
    %cst_35 = arith.constant 9.99999974E-6 : f32
    %94 = vector.broadcast %cst_35 : f32 to vector<12x1xf32>
    %95 = arith.addf %91, %94 : vector<12x1xf32>
    %96 = math.rsqrt %95 : vector<12x1xf32>
    %97 = vector.broadcast %96 : vector<12x1xf32> to vector<12x256xf32>
    %98 = arith.mulf %93, %97 : vector<12x256xf32>
    %99 = vector.broadcast %77 : vector<1x256xf32> to vector<12x256xf32>
    %100 = arith.mulf %98, %99 : vector<12x256xf32>
    %101 = vector.broadcast %80 : vector<1x256xf32> to vector<12x256xf32>
    %102 = arith.addf %100, %101 : vector<12x256xf32>
    %103 = arith.truncf %102 : vector<12x256xf32> to vector<12x256xbf16>
    %104 = arith.index_cast %arg1 : i32 to index
    %c0_36 = arith.constant 0 : index
    %c0_37 = arith.constant 0 : index
    %105 = vector.load %arg10[%104, %c0_36, %c0_37] : memref<4x256x1024xbf16, #tpu.memory_space<vmem>>, vector<1x256x1024xbf16>
    %106 = vector.shape_cast %105 : vector<1x256x1024xbf16> to vector<256x1024xbf16>
    %cst_38 = arith.constant dense<0.000000e+00> : vector<12x1024xf32>
    %107 = tpu.matmul %103, %106, %cst_38 {dimension_numbers = #tpu.dot_dimension_numbers<[1], [0], [0], [1], [0, 0, 1, 1], [], []>} : vector<12x256xbf16>, vector<256x1024xbf16>, vector<12x1024xf32> -> vector<12x1024xf32>
    %108 = arith.index_cast %arg1 : i32 to index
    %c0_39 = arith.constant 0 : index
    %c0_40 = arith.constant 0 : index
    %109 = vector.load %arg11[%108, %c0_39, %c0_40] : memref<4x1x1024xf32, #tpu.memory_space<vmem>>, vector<1x1x1024xf32>
    %110 = vector.shape_cast %109 : vector<1x1x1024xf32> to vector<1x1024xf32>
    %111 = vector.broadcast %110 : vector<1x1024xf32> to vector<12x1024xf32>
    %112 = arith.addf %107, %111 : vector<12x1024xf32>
    %cst_41 = arith.constant 5.000000e-01 : f32
    %113 = vector.broadcast %cst_41 : f32 to vector<12x1024xf32>
    %114 = arith.mulf %113, %112 : vector<12x1024xf32>
    %cst_42 = arith.constant 4.471500e-02 : f32
    %115 = vector.broadcast %cst_42 : f32 to vector<12x1024xf32>
    %116 = arith.mulf %115, %112 : vector<12x1024xf32>
    %117 = arith.mulf %116, %112 : vector<12x1024xf32>
    %118 = arith.mulf %117, %112 : vector<12x1024xf32>
    %119 = arith.addf %112, %118 : vector<12x1024xf32>
    %cst_43 = arith.constant 0.797884583 : f32
    %120 = vector.broadcast %cst_43 : f32 to vector<12x1024xf32>
    %121 = arith.mulf %120, %119 : vector<12x1024xf32>
    %122 = math.tanh %121 : vector<12x1024xf32>
    %cst_44 = arith.constant 1.000000e+00 : f32
    %123 = vector.broadcast %cst_44 : f32 to vector<12x1024xf32>
    %124 = arith.addf %123, %122 : vector<12x1024xf32>
    %125 = arith.mulf %114, %124 : vector<12x1024xf32>
    %126 = arith.truncf %125 : vector<12x1024xf32> to vector<12x1024xbf16>
    %127 = arith.index_cast %arg1 : i32 to index
    %c0_45 = arith.constant 0 : index
    %c0_46 = arith.constant 0 : index
    %128 = vector.load %arg12[%127, %c0_45, %c0_46] : memref<4x1024x256xbf16, #tpu.memory_space<vmem>>, vector<1x1024x256xbf16>
    %129 = vector.shape_cast %128 : vector<1x1024x256xbf16> to vector<1024x256xbf16>
    %cst_47 = arith.constant dense<0.000000e+00> : vector<12x256xf32>
    %130 = tpu.matmul %126, %129, %cst_47 {dimension_numbers = #tpu.dot_dimension_numbers<[1], [0], [0], [1], [0, 0, 1, 1], [], []>} : vector<12x1024xbf16>, vector<1024x256xbf16>, vector<12x256xf32> -> vector<12x256xf32>
    %131 = arith.index_cast %arg1 : i32 to index
    %c0_48 = arith.constant 0 : index
    %c0_49 = arith.constant 0 : index
    %132 = vector.load %arg13[%131, %c0_48, %c0_49] : memref<4x1x256xf32, #tpu.memory_space<vmem>>, vector<1x1x256xf32>
    %133 = vector.shape_cast %132 : vector<1x1x256xf32> to vector<1x256xf32>
    %134 = vector.broadcast %133 : vector<1x256xf32> to vector<12x256xf32>
    %135 = arith.addf %130, %134 : vector<12x256xf32>
    %136 = arith.addf %74, %135 : vector<12x256xf32>
    %c0_50 = arith.constant 0 : index
    %c0_51 = arith.constant 0 : index
    %137 = vector.load %arg18[%c0_50, %c0_51] : memref<12x256xf32, #tpu.memory_space<vmem>>, vector<12x256xf32>
    tpu.vector_store %arg18[%c0_50, %c0_51], %136 {strides = array<i32>} : memref<12x256xf32, #tpu.memory_space<vmem>>, vector<12x256xf32>,
    %c3_i32 = arith.constant 3 : i32
    %138 = arith.cmpi eq, %arg1, %c3_i32 : i32
    %139 = arith.extui %138 : i1 to i32
    %c0_i32_52 = arith.constant 0 : i32
    %140 = arith.cmpi ne, %139, %c0_i32_52 : i32
    scf.if %140 {
      %cst_53 = arith.constant dense<0.000000e+00> : vector<256xf32>
      %141 = vector.multi_reduction <add>, %136, %cst_53 [0] : vector<12x256xf32> to vector<256xf32>
      %142 = vector.shape_cast %141 : vector<256xf32> to vector<1x256xf32>
      %cst_54 = arith.constant 1.200000e+01 : f32
      %143 = vector.broadcast %cst_54 : f32 to vector<1x256xf32>
      %144 = arith.divf %142, %143 : vector<1x256xf32>
      %cst_55 = arith.constant 0.000000e+00 : f32
      %145 = vector.broadcast %cst_55 : f32 to vector<1x256xf32>
      %146 = arith.cmpf ogt, %144, %145 : vector<1x256xf32>
      %147 = math.exp %144 : vector<1x256xf32>
      %cst_56 = arith.constant 1.000000e+00 : f32
      %148 = vector.broadcast %cst_56 : f32 to vector<1x256xf32>
      %149 = arith.subf %147, %148 : vector<1x256xf32>
      %150 = arith.select %146, %144, %149 : vector<1x256xi1>, vector<1x256xf32>
      %c0_57 = arith.constant 0 : index
      %c0_58 = arith.constant 0 : index
      %151 = vector.load %arg15[%c0_57, %c0_58] : memref<256x128xf32, #tpu.memory_space<vmem>>, vector<256x128xf32>
      %cst_59 = arith.constant dense<0.000000e+00> : vector<1x128xf32>
      %152 = tpu.matmul %150, %151, %cst_59 {dimension_numbers = #tpu.dot_dimension_numbers<[1], [0], [0], [1], [0, 0, 1, 1], [], []>} : vector<1x256xf32>, vector<256x128xf32>, vector<1x128xf32> -> vector<1x128xf32>
      %c0_60 = arith.constant 0 : index
      %c0_61 = arith.constant 0 : index
      %153 = vector.load %arg16[%c0_60, %c0_61] : memref<1x128xf32, #tpu.memory_space<vmem>>, vector<1x128xf32>
      %154 = arith.addf %152, %153 : vector<1x128xf32>
      %155 = vector.shape_cast %154 : vector<1x128xf32> to vector<1x128xf32>
      %156 = vector.broadcast %155 : vector<1x128xf32> to vector<8x128xf32>
      %c0_62 = arith.constant 0 : index
      %c0_63 = arith.constant 0 : index
      %c0_64 = arith.constant 0 : index
      %157 = vector.load %arg17[%c0_62, %c0_63, %c0_64] : memref<1x8x128xf32, #tpu.memory_space<vmem>>, vector<1x8x128xf32>
      %158 = vector.shape_cast %157 : vector<1x8x128xf32> to vector<8x128xf32>
      %159 = vector.shape_cast %156 : vector<8x128xf32> to vector<1x8x128xf32>
      tpu.vector_store %arg17[%c0_62, %c0_63, %c0_64], %159 {strides = array<i32>} : memref<1x8x128xf32, #tpu.memory_space<vmem>>, vector<1x8x128xf32>,
    } else {
    }
    return
  }
  func.func @transform_0(%arg0: i32, %arg1: i32) -> (i32, i32, i32) {
    %c0_i32 = arith.constant 0 : i32
    %c0_i32_0 = arith.constant 0 : i32
    %c0_i32_1 = arith.constant 0 : i32
    return %arg0, %c0_i32, %c0_i32_0 : i32, i32, i32
  }
  func.func @transform_1(%arg0: i32, %arg1: i32) -> (i32, i32, i32) {
    %c0_i32 = arith.constant 0 : i32
    %c0_i32_0 = arith.constant 0 : i32
    %c0_i32_1 = arith.constant 0 : i32
    %c0_i32_2 = arith.constant 0 : i32
    return %c0_i32, %c0_i32_0, %c0_i32_1 : i32, i32, i32
  }
  func.func @transform_2(%arg0: i32, %arg1: i32) -> (i32, i32, i32) {
    %c0_i32 = arith.constant 0 : i32
    %c0_i32_0 = arith.constant 0 : i32
    %c0_i32_1 = arith.constant 0 : i32
    %c0_i32_2 = arith.constant 0 : i32
    return %c0_i32, %c0_i32_0, %c0_i32_1 : i32, i32, i32
  }
  func.func @transform_3(%arg0: i32, %arg1: i32) -> (i32, i32, i32) {
    %c0_i32 = arith.constant 0 : i32
    %c0_i32_0 = arith.constant 0 : i32
    %c0_i32_1 = arith.constant 0 : i32
    %c0_i32_2 = arith.constant 0 : i32
    return %c0_i32, %c0_i32_0, %c0_i32_1 : i32, i32, i32
  }
  func.func @transform_4(%arg0: i32, %arg1: i32) -> (i32, i32, i32) {
    %c0_i32 = arith.constant 0 : i32
    %c0_i32_0 = arith.constant 0 : i32
    %c0_i32_1 = arith.constant 0 : i32
    %c0_i32_2 = arith.constant 0 : i32
    return %c0_i32, %c0_i32_0, %c0_i32_1 : i32, i32, i32
  }
  func.func @transform_5(%arg0: i32, %arg1: i32) -> (i32, i32, i32) {
    %c0_i32 = arith.constant 0 : i32
    %c0_i32_0 = arith.constant 0 : i32
    %c0_i32_1 = arith.constant 0 : i32
    %c0_i32_2 = arith.constant 0 : i32
    return %c0_i32, %c0_i32_0, %c0_i32_1 : i32, i32, i32
  }
  func.func @transform_6(%arg0: i32, %arg1: i32) -> (i32, i32, i32) {
    %c0_i32 = arith.constant 0 : i32
    %c0_i32_0 = arith.constant 0 : i32
    %c0_i32_1 = arith.constant 0 : i32
    %c0_i32_2 = arith.constant 0 : i32
    return %c0_i32, %c0_i32_0, %c0_i32_1 : i32, i32, i32
  }
  func.func @transform_7(%arg0: i32, %arg1: i32) -> (i32, i32, i32) {
    %c0_i32 = arith.constant 0 : i32
    %c0_i32_0 = arith.constant 0 : i32
    %c0_i32_1 = arith.constant 0 : i32
    %c0_i32_2 = arith.constant 0 : i32
    return %c0_i32, %c0_i32_0, %c0_i32_1 : i32, i32, i32
  }
  func.func @transform_8(%arg0: i32, %arg1: i32) -> (i32, i32, i32) {
    %c0_i32 = arith.constant 0 : i32
    %c0_i32_0 = arith.constant 0 : i32
    %c0_i32_1 = arith.constant 0 : i32
    %c0_i32_2 = arith.constant 0 : i32
    return %c0_i32, %c0_i32_0, %c0_i32_1 : i32, i32, i32
  }
  func.func @transform_9(%arg0: i32, %arg1: i32) -> (i32, i32, i32) {
    %c0_i32 = arith.constant 0 : i32
    %c0_i32_0 = arith.constant 0 : i32
    %c0_i32_1 = arith.constant 0 : i32
    %c0_i32_2 = arith.constant 0 : i32
    return %c0_i32, %c0_i32_0, %c0_i32_1 : i32, i32, i32
  }
  func.func @transform_10(%arg0: i32, %arg1: i32) -> (i32, i32, i32) {
    %c0_i32 = arith.constant 0 : i32
    %c0_i32_0 = arith.constant 0 : i32
    %c0_i32_1 = arith.constant 0 : i32
    %c0_i32_2 = arith.constant 0 : i32
    return %c0_i32, %c0_i32_0, %c0_i32_1 : i32, i32, i32
  }
  func.func @transform_11(%arg0: i32, %arg1: i32) -> (i32, i32, i32) {
    %c0_i32 = arith.constant 0 : i32
    %c0_i32_0 = arith.constant 0 : i32
    %c0_i32_1 = arith.constant 0 : i32
    %c0_i32_2 = arith.constant 0 : i32
    return %c0_i32, %c0_i32_0, %c0_i32_1 : i32, i32, i32
  }
  func.func @transform_12(%arg0: i32, %arg1: i32) -> (i32, i32) {
    %c0_i32 = arith.constant 0 : i32
    %c0_i32_0 = arith.constant 0 : i32
    %c0_i32_1 = arith.constant 0 : i32
    return %c0_i32, %c0_i32_0 : i32, i32
  }
  func.func @transform_13(%arg0: i32, %arg1: i32) -> (i32, i32) {
    %c0_i32 = arith.constant 0 : i32
    %c0_i32_0 = arith.constant 0 : i32
    %c0_i32_1 = arith.constant 0 : i32
    return %c0_i32, %c0_i32_0 : i32, i32
  }
  func.func @transform_14(%arg0: i32, %arg1: i32) -> (i32, i32) {
    %c0_i32 = arith.constant 0 : i32
    %c0_i32_0 = arith.constant 0 : i32
    %c0_i32_1 = arith.constant 0 : i32
    return %c0_i32, %c0_i32_0 : i32, i32
  }
  func.func @transform_15(%arg0: i32, %arg1: i32) -> (i32, i32, i32) {
    %c0_i32 = arith.constant 0 : i32
    %c0_i32_0 = arith.constant 0 : i32
    %c0_i32_1 = arith.constant 0 : i32
    return %arg0, %c0_i32, %c0_i32_0 : i32, i32, i32
  }
}

module attributes {stable_mosaic.version = 11 : i64} {
  func.func @_spectro_embed_kernel(%arg0: i32, %arg1: memref<24x200xbf16, #tpu.memory_space<vmem>>, %arg2: memref<200x256xbf16, #tpu.memory_space<vmem>>, %arg3: memref<128x256xbf16, #tpu.memory_space<vmem>>, %arg4: memref<1x256xf32, #tpu.memory_space<vmem>>, %arg5: memref<24x256xf32, #tpu.memory_space<vmem>>, %arg6: memref<24x256xbf16, #tpu.memory_space<vmem>>) attributes {dimension_semantics = [#tpu.dimension_semantics<parallel>], iteration_bounds = array<i64: 1>, scalar_prefetch = 0 : i64, scratch_operands = 0 : i64, tpu.core_type = #tpu.core_type<tc>, window_params = [{transform_indices = @transform_0, window_bounds = array<i64: 24, 200>}, {pipeline_mode = #tpu.pipeline_mode<synchronous>, transform_indices = @transform_1, window_bounds = array<i64: 200, 256>}, {pipeline_mode = #tpu.pipeline_mode<synchronous>, transform_indices = @transform_2, window_bounds = array<i64: 128, 256>}, {pipeline_mode = #tpu.pipeline_mode<synchronous>, transform_indices = @transform_3, window_bounds = array<i64: 1, 256>}, {transform_indices = @transform_4, window_bounds = array<i64: 24, 256>}, {transform_indices = @transform_5, window_bounds = array<i64: 24, 256>}]} {
    %c0 = arith.constant 0 : index
    %c0_0 = arith.constant 0 : index
    %0 = vector.load %arg1[%c0, %c0_0] : memref<24x200xbf16, #tpu.memory_space<vmem>>, vector<24x200xbf16>
    %c0_1 = arith.constant 0 : index
    %c0_2 = arith.constant 0 : index
    %1 = vector.load %arg2[%c0_1, %c0_2] : memref<200x256xbf16, #tpu.memory_space<vmem>>, vector<200x256xbf16>
    %cst = arith.constant dense<0.000000e+00> : vector<24x256xf32>
    %2 = tpu.matmul %0, %1, %cst {dimension_numbers = #tpu.dot_dimension_numbers<[1], [0], [0], [1], [0, 0, 1, 1], [], []>} : vector<24x200xbf16>, vector<200x256xbf16>, vector<24x256xf32> -> vector<24x256xf32>
    %3 = vector.extract_strided_slice %2 {offsets = [0, 0], sizes = [24, 128], strides = [1, 1]} : vector<24x256xf32> to vector<24x128xf32>
    %4 = vector.extract_strided_slice %2 {offsets = [0, 128], sizes = [24, 128], strides = [1, 1]} : vector<24x256xf32> to vector<24x128xf32>
    %5 = arith.mulf %3, %3 : vector<24x128xf32>
    %6 = arith.mulf %4, %4 : vector<24x128xf32>
    %7 = arith.addf %5, %6 : vector<24x128xf32>
    %8 = math.sqrt %7 : vector<24x128xf32>
    %9 = arith.truncf %8 : vector<24x128xf32> to vector<24x128xbf16>
    %c0_3 = arith.constant 0 : index
    %c0_4 = arith.constant 0 : index
    %10 = vector.load %arg3[%c0_3, %c0_4] : memref<128x256xbf16, #tpu.memory_space<vmem>>, vector<128x256xbf16>
    %cst_5 = arith.constant dense<0.000000e+00> : vector<24x256xf32>
    %11 = tpu.matmul %9, %10, %cst_5 {dimension_numbers = #tpu.dot_dimension_numbers<[1], [0], [0], [1], [0, 0, 1, 1], [], []>} : vector<24x128xbf16>, vector<128x256xbf16>, vector<24x256xf32> -> vector<24x256xf32>
    %c0_6 = arith.constant 0 : index
    %c0_7 = arith.constant 0 : index
    %12 = vector.load %arg4[%c0_6, %c0_7] : memref<1x256xf32, #tpu.memory_space<vmem>>, vector<1x256xf32>
    %13 = vector.broadcast %12 : vector<1x256xf32> to vector<24x256xf32>
    %14 = arith.addf %11, %13 : vector<24x256xf32>
    %c0_8 = arith.constant 0 : index
    %c0_9 = arith.constant 0 : index
    %15 = vector.load %arg5[%c0_8, %c0_9] : memref<24x256xf32, #tpu.memory_space<vmem>>, vector<24x256xf32>
    %16 = arith.addf %14, %15 : vector<24x256xf32>
    %17 = arith.truncf %16 : vector<24x256xf32> to vector<24x256xbf16>
    %c0_10 = arith.constant 0 : index
    %c0_11 = arith.constant 0 : index
    %18 = vector.load %arg6[%c0_10, %c0_11] : memref<24x256xbf16, #tpu.memory_space<vmem>>, vector<24x256xbf16>
    tpu.vector_store %arg6[%c0_10, %c0_11], %17 {strides = array<i32>} : memref<24x256xbf16, #tpu.memory_space<vmem>>, vector<24x256xbf16>,
    return
  }
  func.func @transform_0(%arg0: i32) -> (i32, i32) {
    %c0_i32 = arith.constant 0 : i32
    %c0_i32_0 = arith.constant 0 : i32
    return %arg0, %c0_i32 : i32, i32
  }
  func.func @transform_1(%arg0: i32) -> (i32, i32) {
    %c0_i32 = arith.constant 0 : i32
    %c0_i32_0 = arith.constant 0 : i32
    %c0_i32_1 = arith.constant 0 : i32
    return %c0_i32, %c0_i32_0 : i32, i32
  }
  func.func @transform_2(%arg0: i32) -> (i32, i32) {
    %c0_i32 = arith.constant 0 : i32
    %c0_i32_0 = arith.constant 0 : i32
    %c0_i32_1 = arith.constant 0 : i32
    return %c0_i32, %c0_i32_0 : i32, i32
  }
  func.func @transform_3(%arg0: i32) -> (i32, i32) {
    %c0_i32 = arith.constant 0 : i32
    %c0_i32_0 = arith.constant 0 : i32
    %c0_i32_1 = arith.constant 0 : i32
    return %c0_i32, %c0_i32_0 : i32, i32
  }
  func.func @transform_4(%arg0: i32) -> (i32, i32) {
    %c0_i32 = arith.constant 0 : i32
    %c0_i32_0 = arith.constant 0 : i32
    return %arg0, %c0_i32 : i32, i32
  }
  func.func @transform_5(%arg0: i32) -> (i32, i32) {
    %c0_i32 = arith.constant 0 : i32
    %c0_i32_0 = arith.constant 0 : i32
    return %arg0, %c0_i32 : i32, i32
  }
}

</mosaic_0001>

<llo_original>
// kernel: tile.7
$region0: #{tile.7}
  %s0 = inlined_call_operand.vmem [shape: f32[2,12,256], index: 0, kind: input, shape index: {}]
  %s1 = inlined_call_operand.vmem [shape: f32[24,256], index: 1, kind: output, shape index: {}]
  %v2 = vld [vmem:[%s0] sm:$0xff]
  %3 = vst [vmem:[%s1] sm:$0xff] %v2
  %s4 = scalar_lea.vmem %s0, 8
  %v5 = vld [vmem:[%s4] sm:$0xff]
  %s6 = scalar_lea.vmem %s1, 8
  %7 = vst [vmem:[%s6] sm:$0xff] %v5
  %s8 = scalar_lea.vmem %s0, 16
  %v9 = vld [vmem:[%s8] sm:$0xf]
  %s10 = scalar_lea.vmem %s1, 16
  %11 = vst [vmem:[%s10] sm:$0xf] %v9
  %s12 = scalar_lea.vmem %s0, 24
  %v13 = vld [vmem:[%s12] sm:$0xf]
  %s14 = scalar_lea.vmem %s1, 24
  %15 = vst [vmem:[%s14] sm:$0xf] %v13
  %s16 = scalar_lea.vmem %s0, 32
  %v17 = vld [vmem:[%s16] sm:$0xff]
  %s18 = scalar_lea.vmem %s1, 20
  %19 = vst [vmem:[%s18] sm:$0xf] %v17
  %s20 = scalar_lea.vmem %s1, 28
  %21 = vst [vmem:[%s20] sm:$0xf0] %v17
  %s22 = scalar_lea.vmem %s0, 40
  %v23 = vld [vmem:[%s22] sm:$0xff]
  %s24 = scalar_lea.vmem %s1, 28
  %25 = vst [vmem:[%s24] sm:$0xf] %v23
  %s26 = scalar_lea.vmem %s1, 36
  %27 = vst [vmem:[%s26] sm:$0xf0] %v23
  %s28 = scalar_lea.vmem %s0, 48
  %v29 = vld [vmem:[%s28] sm:$0xf]
  %s30 = scalar_lea.vmem %s1, 36
  %31 = vst [vmem:[%s30] sm:$0xf] %v29
  %s32 = scalar_lea.vmem %s0, 56
  %v33 = vld [vmem:[%s32] sm:$0xf]
  %s34 = scalar_lea.vmem %s1, 44
  %35 = vst [vmem:[%s34] sm:$0xf] %v33

// kernel: biot_forward.2
$region0: #{biot_forward.2}
  #allocation0 [shape = 'u32[]', space=smem, size = 0x4, offset = 0x4, fixed_abs, tag = 'smem constant byte address 0x4 - core index']
  #allocation1 [shape = 'u32[144,128]{1,0:T(1,128)}', space=vmem, size = 0x12000, scoped, tag = 'internal scratch']
  %s0 = inlined_call_operand.vmem [shape: bf16[24,200], index: 0, kind: input, shape index: {}]
  %s1 = inlined_call_operand.hbm [shape: bf16[200,256], index: 1, kind: input, shape index: {}]
  %s2 = inlined_call_operand.hbm [shape: bf16[128,256], index: 2, kind: input, shape index: {}]
  %s3 = inlined_call_operand.hbm [shape: f32[1,256], index: 3, kind: input, shape index: {}]
  %s4 = inlined_call_operand.vmem [shape: f32[24,256], index: 4, kind: input, shape index: {}]
  %s5 = inlined_call_operand.vmem [shape: bf16[24,256], index: 5, kind: output, shape index: {}]
  %s6 = sld [smem:[#allocation0]]
  $region42: #{biot_forward.2} parent=0
    _
  %s8 = ssub.s32 1, %s6
  %s9 = scalar_select 0, %s8, %s6
  $region1: #{biot_forward.2} parent=0
    #allocation2 [shape = 'u8[102400]{0}', space=vmem, size = 0x19000, scoped, tag = 'input window, operand 1, single buffered']
    #allocation3 [shape = 's32[1]{0}', space=sflag, size = 0x4, scoped, tag = 'scoped memory for biot_forward.2']
    #allocation4 [shape = 'u8[65536]{0}', space=vmem, size = 0x10000, scoped, tag = 'input window, operand 2, single buffered']
    #allocation5 [shape = 's32[1]{0}', space=sflag, size = 0x4, scoped, tag = 'scoped memory for biot_forward.2']
    #allocation6 [shape = 'u8[1024]{0}', space=vmem, size = 0x400, scoped, tag = 'input window, operand 3, single buffered']
    %10 = vsyncpa [#allocation3], 0
    %11 = vsyncpa [#allocation5], 0
    // Predicated region
    $region2: #{biot_forward.2} parent=1 // pred_check
      _
    $region3: #{biot_forward.2} parent=1 // pred_check_branch
      %13 = sbr.rel (0) target = $region5
    $region4: #{biot_forward.2} parent=1 // pred_region
      _
    $region5: #{biot_forward.2} parent=1 // pred_fallthru
      _
    // Predicated region
    $region6: #{biot_forward.2} parent=1 // pred_check
      _
    $region7: #{biot_forward.2} parent=1 // pred_check_branch
      %15 = sbr.rel (0) target = $region9
    $region8: #{biot_forward.2} parent=1 // pred_region
      %s17 = ssub.s32 3200, 3200
      %18 = vsyncadd [#allocation3], %s17
      %s19 = sshll.u32 [#allocation2], 4
      %s20 = int_to_ptr.vmem [resolvable:$true] %s19
      %25 = dma.hbm_to_vmem [thread:$0]  %s1, 3200, %s20, [#allocation3], 128, 128, 8
    $region9: #{biot_forward.2} parent=1 // pred_fallthru
      _
    // Predicated region
    $region10: #{biot_forward.2} parent=1 // pred_check
      _
    $region11: #{biot_forward.2} parent=1 // pred_check_branch
      %27 = sbr.rel (0) target = $region13
    $region12: #{biot_forward.2} parent=1 // pred_region
      %s29 = ssub.s32 2048, 2048
      %30 = vsyncadd [#allocation5], %s29
      %s31 = sshll.u32 [#allocation4], 4
      %s32 = int_to_ptr.vmem [resolvable:$true] %s31
      %37 = dma.hbm_to_vmem [thread:$0]  %s2, 2048, %s32, [#allocation5], 128, 128, 8
    $region13: #{biot_forward.2} parent=1 // pred_fallthru
      _
    // Predicated region
    $region14: #{biot_forward.2} parent=1 // pred_check
      _
    $region15: #{biot_forward.2} parent=1 // pred_check_branch
      %39 = sbr.rel (0) target = $region17
    $region16: #{biot_forward.2} parent=1 // pred_region
      %s41 = ssub.s32 32, 32
      %42 = vsyncadd [#allocation5], %s41
      %s44 = sshll.u32 [#allocation6], 4
      %s45 = int_to_ptr.vmem [resolvable:$true] %s44
      %47 = dma.hbm_to_vmem [thread:$0]  %s3, 32, %s45, [#allocation5]
    $region17: #{biot_forward.2} parent=1 // pred_fallthru
      _
    // Predicated region
    $region18: #{biot_forward.2} parent=1 // pred_check
      _
    $region19: #{biot_forward.2} parent=1 // pred_check_branch
      %49 = sbr.rel (0) target = $region21
    $region20: #{biot_forward.2} parent=1 // pred_region
      _
    $region21: #{biot_forward.2} parent=1 // pred_fallthru
      _
    // Predicated region
    $region22: #{biot_forward.2} parent=1 // pred_check
      _
    $region23: #{biot_forward.2} parent=1 // pred_check_branch
      %51 = sbr.rel (0) target = $region25
    $region24: #{biot_forward.2} parent=1 // pred_region
      %52 = dma.done [#allocation3], 3200
    $region25: #{biot_forward.2} parent=1 // pred_fallthru
      _
    // Predicated region
    $region26: #{biot_forward.2} parent=1 // pred_check
      _
    $region27: #{biot_forward.2} parent=1 // pred_check_branch
      %54 = sbr.rel (0) target = $region29
    $region28: #{biot_forward.2} parent=1 // pred_region
      %55 = dma.done [#allocation5], 2048
    $region29: #{biot_forward.2} parent=1 // pred_fallthru
      _
    // Predicated region
    $region30: #{biot_forward.2} parent=1 // pred_check
      _
    $region31: #{biot_forward.2} parent=1 // pred_check_branch
      %57 = sbr.rel (0) target = $region33
    $region32: #{biot_forward.2} parent=1 // pred_region
      %58 = dma.done [#allocation5], 32
    $region33: #{biot_forward.2} parent=1 // pred_fallthru
      _
    %v60 = vld [vmem:[%s0] sm:$0xff]
    %v61 = vld [vmem:[%s0 + $0x8] sm:$0xff]
    %v62 = vld [vmem:[%s0 + $0x10] sm:$0xff]
    %v63 = vld [vmem:[#allocation2] sm:$0xff]
    %v64 = vld [vmem:[#allocation2 + $0x8] sm:$0xff]
    %v65 = vld [vmem:[#allocation2 + $0x10] sm:$0xff]
    %v66 = vld [vmem:[#allocation2 + $0x18] sm:$0xff]
    %v67 = vld [vmem:[#allocation2 + $0x20] sm:$0xff]
    %v68 = vld [vmem:[#allocation2 + $0x28] sm:$0xff]
    %v69 = vld [vmem:[#allocation2 + $0x30] sm:$0xff]
    %v70 = vld [vmem:[#allocation2 + $0x38] sm:$0xff]
    %v71 = vld [vmem:[#allocation2 + $0x40] sm:$0xff]
    %v72 = vld [vmem:[#allocation2 + $0x48] sm:$0xff]
    %v73 = vld [vmem:[#allocation2 + $0x50] sm:$0xff]
    %v74 = vld [vmem:[#allocation2 + $0x58] sm:$0xff]
    %v75 = vld [vmem:[#allocation2 + $0x60] sm:$0xff]
    %v76 = vld [vmem:[#allocation2 + $0x68] sm:$0xff]
    %v77 = vld [vmem:[#allocation2 + $0x70] sm:$0xff]
    %v78 = vld [vmem:[#allocation2 + $0x78] sm:$0xff]
    %v79 = vld [vmem:[#allocation2 + $0x80] sm:$0xff]
    %v80 = vld [vmem:[#allocation2 + $0x88] sm:$0xff]
    %v81 = vld [vmem:[#allocation2 + $0x90] sm:$0xff]
    %v82 = vld [vmem:[#allocation2 + $0x98] sm:$0xff]
    %v83 = vld [vmem:[#allocation2 + $0xa0] sm:$0xff]
    %v84 = vld [vmem:[#allocation2 + $0xa8] sm:$0xff]
    %v85 = vld [vmem:[#allocation2 + $0xb0] sm:$0xff]
    %v86 = vld [vmem:[#allocation2 + $0xb8] sm:$0xff]
    %v87 = vld [vmem:[#allocation2 + $0xc0] sm:$0xff]
    %v91 = vunpack.c.l.b16 %v60
    %v92 = vunpack.c.h.b16 %v60
    %v93 = vunpack.c.l.b16 %v61
    %v94 = vunpack.c.h.b16 %v61
    %v95 = vunpack.c.l.b16 %v62
    %v96 = vunpack.c.h.b16 %v62
    %v97 = vpack.c.b16 %v93, %v91
    %v98 = vpack.c.b16 %v94, %v92
    %v99 = vpack.c.b16 %v95, %v95
    %v100 = vpack.c.b16 %v96, %v96
    %v128 = vunpack.c.l.b16 %v63
    %v129 = vunpack.c.h.b16 %v63
    %v130 = vunpack.c.l.b16 %v64
    %v131 = vunpack.c.h.b16 %v64
    %v132 = vunpack.c.l.b16 %v65
    %v133 = vunpack.c.h.b16 %v65
    %v134 = vunpack.c.l.b16 %v66
    %v135 = vunpack.c.h.b16 %v66
    %v136 = vunpack.c.l.b16 %v67
    %v137 = vunpack.c.h.b16 %v67
    %v138 = vunpack.c.l.b16 %v68
    %v139 = vunpack.c.h.b16 %v68
    %v140 = vunpack.c.l.b16 %v69
    %v141 = vunpack.c.h.b16 %v69
    %v142 = vunpack.c.l.b16 %v70
    %v143 = vunpack.c.h.b16 %v70
    %v144 = vunpack.c.l.b16 %v71
    %v145 = vunpack.c.h.b16 %v71
    %v146 = vunpack.c.l.b16 %v72
    %v147 = vunpack.c.h.b16 %v72
    %v148 = vunpack.c.l.b16 %v73
    %v149 = vunpack.c.h.b16 %v73
    %v150 = vunpack.c.l.b16 %v74
    %v151 = vunpack.c.h.b16 %v74
    %v152 = vunpack.c.l.b16 %v75
    %v153 = vunpack.c.h.b16 %v75
    %v154 = vunpack.c.l.b16 %v76
    %v155 = vunpack.c.h.b16 %v76
    %v156 = vunpack.c.l.b16 %v77
    %v157 = vunpack.c.h.b16 %v77
    %v158 = vunpack.c.l.b16 %v78
    %v159 = vunpack.c.h.b16 %v78
    %v160 = vunpack.c.l.b16 %v79
    %v161 = vunpack.c.h.b16 %v79
    %v162 = vunpack.c.l.b16 %v80
    %v163 = vunpack.c.h.b16 %v80
    %v164 = vunpack.c.l.b16 %v81
    %v165 = vunpack.c.h.b16 %v81
    %v166 = vunpack.c.l.b16 %v82
    %v167 = vunpack.c.h.b16 %v82
    %v168 = vunpack.c.l.b16 %v83
    %v169 = vunpack.c.h.b16 %v83
    %v170 = vunpack.c.l.b16 %v84
    %v171 = vunpack.c.h.b16 %v84
    %v172 = vunpack.c.l.b16 %v85
    %v173 = vunpack.c.h.b16 %v85
    %v174 = vunpack.c.l.b16 %v86
    %v175 = vunpack.c.h.b16 %v86
    %v176 = vunpack.c.l.b16 %v87
    %v177 = vunpack.c.h.b16 %v87
    %v178 = vpack.c.b16 %v130, %v128
    %v179 = vpack.c.b16 %v131, %v129
    %v180 = vpack.c.b16 %v134, %v132
    %v181 = vpack.c.b16 %v135, %v133
    %v182 = vpack.c.b16 %v138, %v136
    %v183 = vpack.c.b16 %v139, %v137
    %v184 = vpack.c.b16 %v142, %v140
    %v185 = vpack.c.b16 %v143, %v141
    %v186 = vpack.c.b16 %v146, %v144
    %v187 = vpack.c.b16 %v147, %v145
    %v188 = vpack.c.b16 %v150, %v148
    %v189 = vpack.c.b16 %v151, %v149
    %v190 = vpack.c.b16 %v154, %v152
    %v191 = vpack.c.b16 %v155, %v153
    %v192 = vpack.c.b16 %v158, %v156
    %v193 = vpack.c.b16 %v159, %v157
    %v194 = vpack.c.b16 %v162, %v160
    %v195 = vpack.c.b16 %v163, %v161
    %v196 = vpack.c.b16 %v166, %v164
    %v197 = vpack.c.b16 %v167, %v165
    %v198 = vpack.c.b16 %v170, %v168
    %v199 = vpack.c.b16 %v171, %v169
    %v200 = vpack.c.b16 %v174, %v172
    %v201 = vpack.c.b16 %v175, %v173
    %v202 = vpack.c.b16 %v176, %v176
    %v203 = vpack.c.b16 %v177, %v177
    %vm228 = vcmask 588800
    %v230 = vsel %vm228, %v98, 0
    %v233 = vsel %vm228, %v100, 0
    %vm235 = vcmask 1043456
    %v237 = vsel %vm235, %v202, 0
    %v240 = vsel %vm235, %v203, 0
    %242 = vmatprep.subr.bf16.mxu0 %v179
    %243 = vmatpush1.bf16.msra.mxu0 %v178
    %244 = vmatprep.subr.bf16.mxu0 %v181
    %245 = vmatpush1.bf16.msra.mxu0 %v180
    %246 = vmatprep.subr.bf16.mxu0 %v183
    %247 = vmatpush1.bf16.msra.mxu0 %v182
    %248 = vmatprep.subr.bf16.mxu0 %v185
    %249 = vmatpush1.bf16.msra.mxu0 %v184
    %250 = vmatprep.subr.bf16.mxu0 %v187
    %251 = vmatpush1.bf16.msra.mxu0 %v186
    %252 = vmatprep.subr.bf16.mxu0 %v189
    %253 = vmatpush1.bf16.msra.mxu0 %v188
    %254 = vmatprep.subr.bf16.mxu0 %v191
    %255 = vmatpush1.bf16.msra.mxu0 %v190
    %256 = vmatprep.subr.bf16.mxu0 %v193
    %257 = vmatpush1.bf16.msra.mxu0 %v192
    %258 = vmatprep.subr.bf16.mxu0 %v195
    %259 = vmatpush1.bf16.msra.mxu0 %v194
    %260 = vmatprep.subr.bf16.mxu0 %v197
    %261 = vmatpush1.bf16.msra.mxu0 %v196
    %262 = vmatprep.subr.bf16.mxu0 %v199
    %263 = vmatpush1.bf16.msra.mxu0 %v198
    %264 = vmatprep.subr.bf16.mxu0 %v201
    %265 = vmatpush1.bf16.msra.mxu0 %v200
    %266 = vmatprep.subr.bf16.mxu0 %v240
    %267 = vmatpush1.bf16.msra.mxu0 %v237
    %268 = vmatprep.subr.bf16.mxu0 0
    %269 = vmatpush1.bf16.msra.mxu0 0
    %270 = vmatprep.subr.bf16.mxu0 0
    %271 = vmatpush1.bf16.msra.mxu0 0
    %272 = vmatprep.subr.bf16.mxu0 0
    %273 = vmatpush1.bf16.msra.mxu0 0
    %274 = vmatprep.mubr.bf16.mxu0 %v230
    %275 = vmatmul.mubr.bf16.gmra.mrb[0].mxu0 %v97
    %v276 = vpop.f32.mrb[0].mxu0
    %v277 = vadd.f32 0.0, %v276
    %v278 = vpop.f32.mrb[0].mxu0
    %v279 = vadd.f32 0.0, %v278
    %v280 = vpop.f32.mrb[0].mxu0
    %v281 = vadd.f32 0.0, %v280
    %v282 = vpop.f32.mrb[0].mxu0
    %v283 = vadd.f32 0.0, %v282
    %284 = vmatprep.mubr.bf16.mxu0 %v233
    %285 = vmatmul.mubr.bf16.gmra.mrb[0].mxu0 %v99
    %v286 = vpop.f32.mrb[0].mxu0
    %v287 = vadd.f32 0.0, %v286
    %v288 = vpop.f32.mrb[0].mxu0
    %v289 = vadd.f32 0.0, %v288
    %v290 = vpop.f32.mrb[0].mxu0
    %v291 = vpop.f32.mrb[0].mxu0
    %292 = vdwg.mxu0
    %v293 = vmul.f32 %v277, %v277
    %v294 = vmul.f32 %v281, %v281
    %v295 = vmul.f32 %v287, %v287
    %v296 = vmul.f32 %v279, %v279
    %v297 = vmul.f32 %v283, %v283
    %v298 = vmul.f32 %v289, %v289
    %v299 = vadd.f32 %v293, %v296
    %v300 = vadd.f32 %v294, %v297
    %v301 = vadd.f32 %v295, %v298
    %v302 = vrsqrt.pop %v299
    %v303 = vmul.f32 %v299, %v302
    %vm304 = vcmp.eq.f32.partialorder %v299, inf
    %v305 = vsel %vm304, %v299, %v303
    %vm306 = vcmp.eq.f32.partialorder %v299, 0.0
    %v307 = vand.u32 %v299, 2147483648
    %v308 = vsel %vm306, %v307, %v305
    %v309 = vrsqrt.pop %v300
    %v310 = vmul.f32 %v300, %v309
    %vm311 = vcmp.eq.f32.partialorder %v300, inf
    %v312 = vsel %vm311, %v300, %v310
    %vm313 = vcmp.eq.f32.partialorder %v300, 0.0
    %v314 = vand.u32 %v300, 2147483648
    %v315 = vsel %vm313, %v314, %v312
    %v316 = vrsqrt.pop %v301
    %v317 = vmul.f32 %v301, %v316
    %vm318 = vcmp.eq.f32.partialorder %v301, inf
    %v319 = vsel %vm318, %v301, %v317
    %vm320 = vcmp.eq.f32.partialorder %v301, 0.0
    %v321 = vand.u32 %v301, 2147483648
    %v322 = vsel %vm320, %v321, %v319
    %v323 = vpack.c.bf16 %v315, %v308
    %v324 = vpack.c.bf16 %v322, %v322
    %v325 = vld [vmem:[#allocation4] sm:$0xff]
    %v326 = vld [vmem:[#allocation4 + $0x8] sm:$0xff]
    %v327 = vld [vmem:[#allocation4 + $0x10] sm:$0xff]
    %v328 = vld [vmem:[#allocation4 + $0x18] sm:$0xff]
    %v329 = vld [vmem:[#allocation4 + $0x20] sm:$0xff]
    %v330 = vld [vmem:[#allocation4 + $0x28] sm:$0xff]
    %v331 = vld [vmem:[#allocation4 + $0x30] sm:$0xff]
    %v332 = vld [vmem:[#allocation4 + $0x38] sm:$0xff]
    %v333 = vld [vmem:[#allocation4 + $0x40] sm:$0xff]
    %v334 = vld [vmem:[#allocation4 + $0x48] sm:$0xff]
    %v335 = vld [vmem:[#allocation4 + $0x50] sm:$0xff]
    %v336 = vld [vmem:[#allocation4 + $0x58] sm:$0xff]
    %v337 = vld [vmem:[#allocation4 + $0x60] sm:$0xff]
    %v338 = vld [vmem:[#allocation4 + $0x68] sm:$0xff]
    %v339 = vld [vmem:[#allocation4 + $0x70] sm:$0xff]
    %v340 = vld [vmem:[#allocation4 + $0x78] sm:$0xff]
    %v341 = vld [vmem:[#allocation6] sm:$0x3]
    %v343 = vlaneseq
    %v344 = vshrl.u32 %v343, 7
    %v345 = vsub.s32 0, %v344
    %v346 = vrot.slane %v341, %v345
    %v347 = vlaneseq
    %v348 = vshrl.u32 %v347, 7
    %v349 = vsub.s32 1, %v348
    %v350 = vrot.slane %v341, %v349
    %v369 = vunpack.c.l.b16 %v325
    %v370 = vunpack.c.h.b16 %v325
    %v371 = vunpack.c.l.b16 %v326
    %v372 = vunpack.c.h.b16 %v326
    %v373 = vunpack.c.l.b16 %v327
    %v374 = vunpack.c.h.b16 %v327
    %v375 = vunpack.c.l.b16 %v328
    %v376 = vunpack.c.h.b16 %v328
    %v377 = vunpack.c.l.b16 %v329
    %v378 = vunpack.c.h.b16 %v329
    %v379 = vunpack.c.l.b16 %v330
    %v380 = vunpack.c.h.b16 %v330
    %v381 = vunpack.c.l.b16 %v331
    %v382 = vunpack.c.h.b16 %v331
    %v383 = vunpack.c.l.b16 %v332
    %v384 = vunpack.c.h.b16 %v332
    %v385 = vunpack.c.l.b16 %v333
    %v386 = vunpack.c.h.b16 %v333
    %v387 = vunpack.c.l.b16 %v334
    %v388 = vunpack.c.h.b16 %v334
    %v389 = vunpack.c.l.b16 %v335
    %v390 = vunpack.c.h.b16 %v335
    %v391 = vunpack.c.l.b16 %v336
    %v392 = vunpack.c.h.b16 %v336
    %v393 = vunpack.c.l.b16 %v337
    %v394 = vunpack.c.h.b16 %v337
    %v395 = vunpack.c.l.b16 %v338
    %v396 = vunpack.c.h.b16 %v338
    %v397 = vunpack.c.l.b16 %v339
    %v398 = vunpack.c.h.b16 %v339
    %v399 = vunpack.c.l.b16 %v340
    %v400 = vunpack.c.h.b16 %v340
    %v401 = vpack.c.b16 %v371, %v369
    %v402 = vpack.c.b16 %v372, %v370
    %v403 = vpack.c.b16 %v375, %v373
    %v404 = vpack.c.b16 %v376, %v374
    %v405 = vpack.c.b16 %v379, %v377
    %v406 = vpack.c.b16 %v380, %v378
    %v407 = vpack.c.b16 %v383, %v381
    %v408 = vpack.c.b16 %v384, %v382
    %v409 = vpack.c.b16 %v387, %v385
    %v410 = vpack.c.b16 %v388, %v386
    %v411 = vpack.c.b16 %v391, %v389
    %v412 = vpack.c.b16 %v392, %v390
    %v413 = vpack.c.b16 %v395, %v393
    %v414 = vpack.c.b16 %v396, %v394
    %v415 = vpack.c.b16 %v399, %v397
    %v416 = vpack.c.b16 %v400, %v398
    %433 = vmatprep.subr.bf16.mxu0 %v402
    %434 = vmatpush1.bf16.msra.mxu0 %v401
    %435 = vmatprep.subr.bf16.mxu0 %v404
    %436 = vmatpush1.bf16.msra.mxu0 %v403
    %437 = vmatprep.subr.bf16.mxu0 %v406
    %438 = vmatpush1.bf16.msra.mxu0 %v405
    %439 = vmatprep.subr.bf16.mxu0 %v408
    %440 = vmatpush1.bf16.msra.mxu0 %v407
    %441 = vmatprep.subr.bf16.mxu0 %v410
    %442 = vmatpush1.bf16.msra.mxu0 %v409
    %443 = vmatprep.subr.bf16.mxu0 %v412
    %444 = vmatpush1.bf16.msra.mxu0 %v411
    %445 = vmatprep.subr.bf16.mxu0 %v414
    %446 = vmatpush1.bf16.msra.mxu0 %v413
    %447 = vmatprep.subr.bf16.mxu0 %v416
    %448 = vmatpush1.bf16.msra.mxu0 %v415
    %449 = vmatprep.subr.bf16.mxu0 0
    %450 = vmatpush1.bf16.msra.mxu0 0
    %451 = vmatprep.subr.bf16.mxu0 0
    %452 = vmatpush1.bf16.msra.mxu0 0
    %453 = vmatprep.subr.bf16.mxu0 0
    %454 = vmatpush1.bf16.msra.mxu0 0
    %455 = vmatprep.subr.bf16.mxu0 0
    %456 = vmatpush1.bf16.msra.mxu0 0
    %457 = vmatprep.subr.bf16.mxu0 0
    %458 = vmatpush1.bf16.msra.mxu0 0
    %459 = vmatprep.subr.bf16.mxu0 0
    %460 = vmatpush1.bf16.msra.mxu0 0
    %461 = vmatprep.subr.bf16.mxu0 0
    %462 = vmatpush1.bf16.msra.mxu0 0
    %463 = vmatprep.subr.bf16.mxu0 0
    %464 = vmatpush1.bf16.msra.mxu0 0
    %465 = vmatprep.mubr.bf16.mxu0 0
    %466 = vmatmul.mubr.bf16.gmra.mrb[0].mxu0 %v323
    %v467 = vpop.f32.mrb[0].mxu0
    %v468 = vadd.f32 %v346, %v467
    %v469 = vpop.f32.mrb[0].mxu0
    %v470 = vadd.f32 %v350, %v469
    %v471 = vpop.f32.mrb[0].mxu0
    %v472 = vadd.f32 %v346, %v471
    %v473 = vpop.f32.mrb[0].mxu0
    %v474 = vadd.f32 %v350, %v473
    %475 = vmatprep.mubr.bf16.mxu0 0
    %476 = vmatmul.mubr.bf16.gmra.mrb[0].mxu0 %v324
    %v477 = vpop.f32.mrb[0].mxu0
    %v478 = vadd.f32 %v346, %v477
    %v479 = vpop.f32.mrb[0].mxu0
    %v480 = vadd.f32 %v350, %v479
    %v481 = vpop.f32.mrb[0].mxu0
    %v482 = vpop.f32.mrb[0].mxu0
    %483 = vdwg.mxu0
    %v484 = vld [vmem:[%s4] sm:$0xff]
    %v485 = vld [vmem:[%s4 + $0x8] sm:$0xff]
    %v486 = vld [vmem:[%s4 + $0x10] sm:$0xff]
    %v487 = vld [vmem:[%s4 + $0x18] sm:$0xff]
    %v488 = vld [vmem:[%s4 + $0x20] sm:$0xff]
    %v489 = vld [vmem:[%s4 + $0x28] sm:$0xff]
    %v490 = vadd.f32 %v468, %v484
    %v491 = vadd.f32 %v470, %v485
    %v492 = vadd.f32 %v472, %v486
    %v493 = vadd.f32 %v474, %v487
    %v494 = vadd.f32 %v478, %v488
    %v495 = vadd.f32 %v480, %v489
    %v496 = vpack.c.bf16 %v492, %v490
    %v497 = vpack.c.bf16 %v493, %v491
    %v498 = vpack.c.bf16 %v494, %v494
    %v499 = vpack.c.bf16 %v495, %v495
    %v504 = vunpack.c.l.b16 %v496
    %v505 = vunpack.c.l.b16 %v497
    %v506 = vunpack.c.h.b16 %v496
    %v507 = vunpack.c.h.b16 %v497
    %v508 = vunpack.c.l.b16 %v498
    %v509 = vunpack.c.l.b16 %v499
    %v510 = vpack.c.b16 %v505, %v504
    %v511 = vpack.c.b16 %v507, %v506
    %v512 = vpack.c.b16 %v509, %v508
    %516 = vst [vmem:[%s5] sm:$0xff] %v510
    %517 = vst [vmem:[%s5 + $0x8] sm:$0xff] %v511
    %518 = vst [vmem:[%s5 + $0x10] sm:$0xff] %v512
    // Predicated region
    $region34: #{biot_forward.2} parent=1 // pred_check
      _
    $region35: #{biot_forward.2} parent=1 // pred_check_branch
      %520 = sbr.rel (0) target = $region37
    $region36: #{biot_forward.2} parent=1 // pred_region
      _
    $region37: #{biot_forward.2} parent=1 // pred_fallthru
      _
    // Predicated region
    $region38: #{biot_forward.2} parent=1 // pred_check
      _
    $region39: #{biot_forward.2} parent=1 // pred_check_branch
      %522 = sbr.rel (0) target = $region41
    $region40: #{biot_forward.2} parent=1 // pred_region
      _
    $region41: #{biot_forward.2} parent=1 // pred_fallthru
      _
    %523 = vsyncpa [#allocation3], 1
    %524 = vsyncpa [#allocation5], 1

// kernel: biot_forward.3
$region0: #{biot_forward.3}
  #allocation0 [shape = 'u32[]', space=smem, size = 0x4, offset = 0x4, fixed_abs, tag = 'smem constant byte address 0x4 - core index']
  #allocation1 [shape = 'u32[144,128]{1,0:T(1,128)}', space=vmem, size = 0x12000, scoped, tag = 'internal scratch']
  #allocation2 [shape = 'f32[12,256]{1,0:T(8,128)}', space=vmem, size = 0x4000, scoped, tag = 'scratch operand']
  %s0 = inlined_call_operand.vmem [shape: bf16[2,12,256], index: 0, kind: input, shape index: {}]
  %s1 = inlined_call_operand.hbm [shape: f32[4,1,256], index: 1, kind: input, shape index: {}]
  %s2 = inlined_call_operand.hbm [shape: f32[4,1,256], index: 2, kind: input, shape index: {}]
  %s3 = inlined_call_operand.hbm [shape: bf16[4,256,768], index: 3, kind: input, shape index: {}]
  %s4 = inlined_call_operand.hbm [shape: bf16[4,256,256], index: 4, kind: input, shape index: {}]
  %s5 = inlined_call_operand.hbm [shape: f32[4,1,256], index: 5, kind: input, shape index: {}]
  %s6 = inlined_call_operand.hbm [shape: f32[4,1,256], index: 6, kind: input, shape index: {}]
  %s7 = inlined_call_operand.hbm [shape: f32[4,1,256], index: 7, kind: input, shape index: {}]
  %s8 = inlined_call_operand.hbm [shape: bf16[4,256,1024], index: 8, kind: input, shape index: {}]
  %s9 = inlined_call_operand.hbm [shape: f32[4,1,1024], index: 9, kind: input, shape index: {}]
  %s10 = inlined_call_operand.hbm [shape: bf16[4,1024,256], index: 10, kind: input, shape index: {}]
  %s11 = inlined_call_operand.hbm [shape: f32[4,1,256], index: 11, kind: input, shape index: {}]
  %s12 = inlined_call_operand.hbm [shape: f32[256,256], index: 12, kind: input, shape index: {}]
  %s13 = inlined_call_operand.hbm [shape: f32[256,128], index: 13, kind: input, shape index: {}]
  %s14 = inlined_call_operand.hbm [shape: f32[1,128], index: 14, kind: input, shape index: {}]
  %s15 = inlined_call_operand.vmem [shape: f32[2,8,128], index: 15, kind: output, shape index: {}]
  %s16 = sld [smem:[#allocation0]]
  $region157: #{biot_forward.3} parent=0
    _
  %s18 = ssub.s32 1, %s16
  %s19 = scalar_select 0, %s18, %s16
  $region1: #{biot_forward.3} parent=0
    #allocation3 [shape = 'u8[4096]{0}', space=vmem, size = 0x1000, scoped, tag = 'input window, operand 1, single buffered']
    #allocation4 [shape = 's32[2]{0}', space=sflag, size = 0x8, scoped, tag = 'scoped memory for biot_forward.3']
    #allocation5 [shape = 'u8[4096]{0}', space=vmem, size = 0x1000, scoped, tag = 'input window, operand 2, single buffered']
    #allocation6 [shape = 's32[1]{0}', space=sflag, size = 0x4, scoped, tag = 'scoped memory for biot_forward.3']
    #allocation7 [shape = 'u8[1572864]{0}', space=vmem, size = 0x180000, scoped, tag = 'input window, operand 3, single buffered']
    #allocation8 [shape = 'u8[524288]{0}', space=vmem, size = 0x80000, scoped, tag = 'input window, operand 4, single buffered']
    #allocation9 [shape = 's32[1]{0}', space=sflag, size = 0x4, scoped, tag = 'scoped memory for biot_forward.3']
    #allocation10 [shape = 'u8[4096]{0}', space=vmem, size = 0x1000, scoped, tag = 'input window, operand 5, single buffered']
    #allocation11 [shape = 'u8[4096]{0}', space=vmem, size = 0x1000, scoped, tag = 'input window, operand 6, single buffered']
    #allocation12 [shape = 's32[1]{0}', space=sflag, size = 0x4, scoped, tag = 'scoped memory for biot_forward.3']
    #allocation13 [shape = 'u8[4096]{0}', space=vmem, size = 0x1000, scoped, tag = 'input window, operand 7, single buffered']
    #allocation14 [shape = 'u8[2097152]{0}', space=vmem, size = 0x200000, scoped, tag = 'input window, operand 8, single buffered']
    #allocation15 [shape = 's32[1]{0}', space=sflag, size = 0x4, scoped, tag = 'scoped memory for biot_forward.3']
    #allocation16 [shape = 'u8[16384]{0}', space=vmem, size = 0x4000, scoped, tag = 'input window, operand 9, single buffered']
    #allocation17 [shape = 'u8[2097152]{0}', space=vmem, size = 0x200000, scoped, tag = 'input window, operand 10, single buffered']
    #allocation18 [shape = 's32[1]{0}', space=sflag, size = 0x4, scoped, tag = 'scoped memory for biot_forward.3']
    #allocation19 [shape = 'u8[4096]{0}', space=vmem, size = 0x1000, scoped, tag = 'input window, operand 11, single buffered']
    #allocation20 [shape = 'u8[262144]{0}', space=vmem, size = 0x40000, scoped, tag = 'input window, operand 12, single buffered']
    #allocation21 [shape = 's32[1]{0}', space=sflag, size = 0x4, scoped, tag = 'scoped memory for biot_forward.3']
    #allocation22 [shape = 'u8[131072]{0}', space=vmem, size = 0x20000, scoped, tag = 'input window, operand 13, single buffered']
    #allocation23 [shape = 'u8[512]{0}', space=vmem, size = 0x400, scoped, tag = 'input window, operand 14, single buffered']
    #allocation24 [shape = 's32[1]{0}', space=sflag, size = 0x4, scoped, tag = 'scoped memory for biot_forward.3']
    %20 = vsyncpa [#allocation4], 0
    %21 = vsyncpa [#allocation6], 0
    %22 = vsyncpa [#allocation9], 0
    %23 = vsyncpa [#allocation12], 0
    %24 = vsyncpa [#allocation15], 0
    %25 = vsyncpa [#allocation18], 0
    %26 = vsyncpa [#allocation21], 0
    %27 = vsyncpa [#allocation24], 0
    loop: start=0, step=1, limit=10
    $region2: #{biot_forward.3} parent=1 // loop_pre_header
      _
    $region3: #{biot_forward.3} parent=1 // loop_header
      %s29 = sphi 0, %s33
      %p30 = scmp.ge.s32.totalorder %s29, 10
      %s36 = sphi 0, %s48
      %s37 = sphi 0, %s44
      %s38 = sphi 0, %s36
      %s39 = sphi 0, %s37
      %s40 = sphi 0, %s38
      %s41 = sphi 0, %s39
      %s51 = sphi 0, %s53
      %s54 = sphi 0, %s51
      %s55 = sphi 0, %s54
      %s71 = sphi 0, %s55
      %s75 = sphi 0, %s75
      %s77 = sphi 0, %s75
      %s78 = sphi 0, %s77
      %s92 = sphi 0, %s78
      %s96 = sphi 0, %s96
      %s98 = sphi 0, %s96
      %s99 = sphi 0, %s98
      %s113 = sphi 0, %s99
      %s117 = sphi 0, %s117
      %s119 = sphi 0, %s117
      %s120 = sphi 0, %s119
      %s134 = sphi 0, %s120
      %s138 = sphi 0, %s138
      %s140 = sphi 0, %s138
      %s141 = sphi 0, %s140
      %s155 = sphi 0, %s141
      %s159 = sphi 0, %s159
      %s161 = sphi 0, %s159
      %s162 = sphi 0, %s161
      %s176 = sphi 0, %s162
      %s180 = sphi 0, %s180
      %s182 = sphi 0, %s180
      %s183 = sphi 0, %s182
      %s197 = sphi 0, %s183
      %s201 = sphi 0, %s201
      %s203 = sphi 0, %s201
      %s204 = sphi 0, %s203
      %s218 = sphi 0, %s204
      %s222 = sphi 0, %s222
      %s224 = sphi 0, %s222
      %s225 = sphi 0, %s224
      %s239 = sphi 0, %s225
      %s243 = sphi 0, %s243
      %s245 = sphi 0, %s243
      %s246 = sphi 0, %s245
      %s260 = sphi 0, %s246
      %s264 = sphi 0, %s264
      %s266 = sphi 0, %s264
      %s267 = sphi 0, %s266
      %s281 = sphi 0, %s267
      %s285 = sphi 0, %s285
      %s287 = sphi 0, %s285
      %s288 = sphi 0, %s287
      %s302 = sphi 0, %s288
      %s306 = sphi 0, %s306
      %s308 = sphi 0, %s306
      %s309 = sphi 0, %s308
      %s323 = sphi 0, %s309
      %s327 = sphi 0, %s327
      %s329 = sphi 0, %s327
      %s330 = sphi 0, %s329
      %s344 = sphi 0, %s330
      %s348 = sphi 0, %s348
      %s350 = sphi 0, %s348
      %s351 = sphi 0, %s350
      %s365 = sphi 0, %s351
      %s371 = sphi 0, %s373
      %s374 = sphi 0, %s371
      %s375 = sphi 0, %s374
      %s391 = sphi 0, %s375
    $region4: #{biot_forward.3} parent=1 // loop_header_branch
      %32 = sbr.rel (%p30) target = $region8
    $region5: #{biot_forward.3} parent=1 // loop_body
      %s34 = ssub.s32 %s29, 1
      %s35 = ssub.s32 %s29, 2
      %s42 = sadd.s32 1, %s37
      %p43 = scmp.ge.s32.totalorder %s42, 4
      %s44 = scalar_select %p43, 0, %s42
      %s45 = sadd.s32 1, %s36
      %s46 = scalar_select %p43, %s45, %s36
      %p47 = scmp.ge.s32.totalorder %s46, 2
      %s48 = scalar_select %p47, 0, %s46
      %s49 = ssub.s32 %s36, %s48
      %p50 = scmp.eq.s32.totalorder %s49, 0
      %s52 = sadd.s32 %s51, 1
      %s53 = scalar_select %p50, %s51, %s52
      %p56 = pneg %p50
      %p57 = scmp.eq.s32.totalorder %s29, 7
      %p58 = por %p56, %p57
      %p59 = scmp.ne.s32.totalorder %s51, %s54
      %p60 = scmp.eq.s32.totalorder %s29, 0
      %p61 = por %p59, %p60
      %p62 = scmp.ne.s32.totalorder %s51, %s54
      %p63 = scmp.eq.s32.totalorder %s34, 7
      %p64 = por %p62, %p63
      %p65 = scmp.ne.s32.totalorder %s54, %s55
      %p66 = scmp.eq.s32.totalorder %s34, 0
      %p67 = por %p65, %p66
      %p68 = scmp.ne.s32.totalorder %s54, %s55
      %p69 = scmp.eq.s32.totalorder %s35, 7
      %p70 = por %p68, %p69
      %p72 = scmp.ne.s32.totalorder %s55, %s71
      %p73 = scmp.eq.s32.totalorder %s35, 0
      %p74 = por %p72, %p73
      %s76 = sadd.s32 %s75, 1
      %p79 = scmp.eq.s32.totalorder %s29, 7
      %p80 = scmp.ne.s32.totalorder %s75, %s77
      %p81 = scmp.eq.s32.totalorder %s29, 0
      %p82 = por %p80, %p81
      %p83 = scmp.ne.s32.totalorder %s75, %s77
      %p84 = scmp.eq.s32.totalorder %s34, 7
      %p85 = por %p83, %p84
      %p86 = scmp.ne.s32.totalorder %s77, %s78
      %p87 = scmp.eq.s32.totalorder %s34, 0
      %p88 = por %p86, %p87
      %p89 = scmp.ne.s32.totalorder %s77, %s78
      %p90 = scmp.eq.s32.totalorder %s35, 7
      %p91 = por %p89, %p90
      %p93 = scmp.ne.s32.totalorder %s78, %s92
      %p94 = scmp.eq.s32.totalorder %s35, 0
      %p95 = por %p93, %p94
      %s97 = sadd.s32 %s96, 1
      %p100 = scmp.eq.s32.totalorder %s29, 7
      %p101 = scmp.ne.s32.totalorder %s96, %s98
      %p102 = scmp.eq.s32.totalorder %s29, 0
      %p103 = por %p101, %p102
      %p104 = scmp.ne.s32.totalorder %s96, %s98
      %p105 = scmp.eq.s32.totalorder %s34, 7
      %p106 = por %p104, %p105
      %p107 = scmp.ne.s32.totalorder %s98, %s99
      %p108 = scmp.eq.s32.totalorder %s34, 0
      %p109 = por %p107, %p108
      %p110 = scmp.ne.s32.totalorder %s98, %s99
      %p111 = scmp.eq.s32.totalorder %s35, 7
      %p112 = por %p110, %p111
      %p114 = scmp.ne.s32.totalorder %s99, %s113
      %p115 = scmp.eq.s32.totalorder %s35, 0
      %p116 = por %p114, %p115
      %s118 = sadd.s32 %s117, 1
      %p121 = scmp.eq.s32.totalorder %s29, 7
      %p122 = scmp.ne.s32.totalorder %s117, %s119
      %p123 = scmp.eq.s32.totalorder %s29, 0
      %p124 = por %p122, %p123
      %p125 = scmp.ne.s32.totalorder %s117, %s119
      %p126 = scmp.eq.s32.totalorder %s34, 7
      %p127 = por %p125, %p126
      %p128 = scmp.ne.s32.totalorder %s119, %s120
      %p129 = scmp.eq.s32.totalorder %s34, 0
      %p130 = por %p128, %p129
      %p131 = scmp.ne.s32.totalorder %s119, %s120
      %p132 = scmp.eq.s32.totalorder %s35, 7
      %p133 = por %p131, %p132
      %p135 = scmp.ne.s32.totalorder %s120, %s134
      %p136 = scmp.eq.s32.totalorder %s35, 0
      %p137 = por %p135, %p136
      %s139 = sadd.s32 %s138, 1
      %p142 = scmp.eq.s32.totalorder %s29, 7
      %p143 = scmp.ne.s32.totalorder %s138, %s140
      %p144 = scmp.eq.s32.totalorder %s29, 0
      %p145 = por %p143, %p144
      %p146 = scmp.ne.s32.totalorder %s138, %s140
      %p147 = scmp.eq.s32.totalorder %s34, 7
      %p148 = por %p146, %p147
      %p149 = scmp.ne.s32.totalorder %s140, %s141
      %p150 = scmp.eq.s32.totalorder %s34, 0
      %p151 = por %p149, %p150
      %p152 = scmp.ne.s32.totalorder %s140, %s141
      %p153 = scmp.eq.s32.totalorder %s35, 7
      %p154 = por %p152, %p153
      %p156 = scmp.ne.s32.totalorder %s141, %s155
      %p157 = scmp.eq.s32.totalorder %s35, 0
      %p158 = por %p156, %p157
      %s160 = sadd.s32 %s159, 1
      %p163 = scmp.eq.s32.totalorder %s29, 7
      %p164 = scmp.ne.s32.totalorder %s159, %s161
      %p165 = scmp.eq.s32.totalorder %s29, 0
      %p166 = por %p164, %p165
      %p167 = scmp.ne.s32.totalorder %s159, %s161
      %p168 = scmp.eq.s32.totalorder %s34, 7
      %p169 = por %p167, %p168
      %p170 = scmp.ne.s32.totalorder %s161, %s162
      %p171 = scmp.eq.s32.totalorder %s34, 0
      %p172 = por %p170, %p171
      %p173 = scmp.ne.s32.totalorder %s161, %s162
      %p174 = scmp.eq.s32.totalorder %s35, 7
      %p175 = por %p173, %p174
      %p177 = scmp.ne.s32.totalorder %s162, %s176
      %p178 = scmp.eq.s32.totalorder %s35, 0
      %p179 = por %p177, %p178
      %s181 = sadd.s32 %s180, 1
      %p184 = scmp.eq.s32.totalorder %s29, 7
      %p185 = scmp.ne.s32.totalorder %s180, %s182
      %p186 = scmp.eq.s32.totalorder %s29, 0
      %p187 = por %p185, %p186
      %p188 = scmp.ne.s32.totalorder %s180, %s182
      %p189 = scmp.eq.s32.totalorder %s34, 7
      %p190 = por %p188, %p189
      %p191 = scmp.ne.s32.totalorder %s182, %s183
      %p192 = scmp.eq.s32.totalorder %s34, 0
      %p193 = por %p191, %p192
      %p194 = scmp.ne.s32.totalorder %s182, %s183
      %p195 = scmp.eq.s32.totalorder %s35, 7
      %p196 = por %p194, %p195
      %p198 = scmp.ne.s32.totalorder %s183, %s197
      %p199 = scmp.eq.s32.totalorder %s35, 0
      %p200 = por %p198, %p199
      %s202 = sadd.s32 %s201, 1
      %p205 = scmp.eq.s32.totalorder %s29, 7
      %p206 = scmp.ne.s32.totalorder %s201, %s203
      %p207 = scmp.eq.s32.totalorder %s29, 0
      %p208 = por %p206, %p207
      %p209 = scmp.ne.s32.totalorder %s201, %s203
      %p210 = scmp.eq.s32.totalorder %s34, 7
      %p211 = por %p209, %p210
      %p212 = scmp.ne.s32.totalorder %s203, %s204
      %p213 = scmp.eq.s32.totalorder %s34, 0
      %p214 = por %p212, %p213
      %p215 = scmp.ne.s32.totalorder %s203, %s204
      %p216 = scmp.eq.s32.totalorder %s35, 7
      %p217 = por %p215, %p216
      %p219 = scmp.ne.s32.totalorder %s204, %s218
      %p220 = scmp.eq.s32.totalorder %s35, 0
      %p221 = por %p219, %p220
      %s223 = sadd.s32 %s222, 1
      %p226 = scmp.eq.s32.totalorder %s29, 7
      %p227 = scmp.ne.s32.totalorder %s222, %s224
      %p228 = scmp.eq.s32.totalorder %s29, 0
      %p229 = por %p227, %p228
      %p230 = scmp.ne.s32.totalorder %s222, %s224
      %p231 = scmp.eq.s32.totalorder %s34, 7
      %p232 = por %p230, %p231
      %p233 = scmp.ne.s32.totalorder %s224, %s225
      %p234 = scmp.eq.s32.totalorder %s34, 0
      %p235 = por %p233, %p234
      %p236 = scmp.ne.s32.totalorder %s224, %s225
      %p237 = scmp.eq.s32.totalorder %s35, 7
      %p238 = por %p236, %p237
      %p240 = scmp.ne.s32.totalorder %s225, %s239
      %p241 = scmp.eq.s32.totalorder %s35, 0
      %p242 = por %p240, %p241
      %s244 = sadd.s32 %s243, 1
      %p247 = scmp.eq.s32.totalorder %s29, 7
      %p248 = scmp.ne.s32.totalorder %s243, %s245
      %p249 = scmp.eq.s32.totalorder %s29, 0
      %p250 = por %p248, %p249
      %p251 = scmp.ne.s32.totalorder %s243, %s245
      %p252 = scmp.eq.s32.totalorder %s34, 7
      %p253 = por %p251, %p252
      %p254 = scmp.ne.s32.totalorder %s245, %s246
      %p255 = scmp.eq.s32.totalorder %s34, 0
      %p256 = por %p254, %p255
      %p257 = scmp.ne.s32.totalorder %s245, %s246
      %p258 = scmp.eq.s32.totalorder %s35, 7
      %p259 = por %p257, %p258
      %p261 = scmp.ne.s32.totalorder %s246, %s260
      %p262 = scmp.eq.s32.totalorder %s35, 0
      %p263 = por %p261, %p262
      %s265 = sadd.s32 %s264, 1
      %p268 = scmp.eq.s32.totalorder %s29, 7
      %p269 = scmp.ne.s32.totalorder %s264, %s266
      %p270 = scmp.eq.s32.totalorder %s29, 0
      %p271 = por %p269, %p270
      %p272 = scmp.ne.s32.totalorder %s264, %s266
      %p273 = scmp.eq.s32.totalorder %s34, 7
      %p274 = por %p272, %p273
      %p275 = scmp.ne.s32.totalorder %s266, %s267
      %p276 = scmp.eq.s32.totalorder %s34, 0
      %p277 = por %p275, %p276
      %p278 = scmp.ne.s32.totalorder %s266, %s267
      %p279 = scmp.eq.s32.totalorder %s35, 7
      %p280 = por %p278, %p279
      %p282 = scmp.ne.s32.totalorder %s267, %s281
      %p283 = scmp.eq.s32.totalorder %s35, 0
      %p284 = por %p282, %p283
      %s286 = sadd.s32 %s285, 1
      %p289 = scmp.eq.s32.totalorder %s29, 7
      %p290 = scmp.ne.s32.totalorder %s285, %s287
      %p291 = scmp.eq.s32.totalorder %s29, 0
      %p292 = por %p290, %p291
      %p293 = scmp.ne.s32.totalorder %s285, %s287
      %p294 = scmp.eq.s32.totalorder %s34, 7
      %p295 = por %p293, %p294
      %p296 = scmp.ne.s32.totalorder %s287, %s288
      %p297 = scmp.eq.s32.totalorder %s34, 0
      %p298 = por %p296, %p297
      %p299 = scmp.ne.s32.totalorder %s287, %s288
      %p300 = scmp.eq.s32.totalorder %s35, 7
      %p301 = por %p299, %p300
      %p303 = scmp.ne.s32.totalorder %s288, %s302
      %p304 = scmp.eq.s32.totalorder %s35, 0
      %p305 = por %p303, %p304
      %s307 = sadd.s32 %s306, 1
      %p310 = scmp.eq.s32.totalorder %s29, 7
      %p311 = scmp.ne.s32.totalorder %s306, %s308
      %p312 = scmp.eq.s32.totalorder %s29, 0
      %p313 = por %p311, %p312
      %p314 = scmp.ne.s32.totalorder %s306, %s308
      %p315 = scmp.eq.s32.totalorder %s34, 7
      %p316 = por %p314, %p315
      %p317 = scmp.ne.s32.totalorder %s308, %s309
      %p318 = scmp.eq.s32.totalorder %s34, 0
      %p319 = por %p317, %p318
      %p320 = scmp.ne.s32.totalorder %s308, %s309
      %p321 = scmp.eq.s32.totalorder %s35, 7
      %p322 = por %p320, %p321
      %p324 = scmp.ne.s32.totalorder %s309, %s323
      %p325 = scmp.eq.s32.totalorder %s35, 0
      %p326 = por %p324, %p325
      %s328 = sadd.s32 %s327, 1
      %p331 = scmp.eq.s32.totalorder %s29, 7
      %p332 = scmp.ne.s32.totalorder %s327, %s329
      %p333 = scmp.eq.s32.totalorder %s29, 0
      %p334 = por %p332, %p333
      %p335 = scmp.ne.s32.totalorder %s327, %s329
      %p336 = scmp.eq.s32.totalorder %s34, 7
      %p337 = por %p335, %p336
      %p338 = scmp.ne.s32.totalorder %s329, %s330
      %p339 = scmp.eq.s32.totalorder %s34, 0
      %p340 = por %p338, %p339
      %p341 = scmp.ne.s32.totalorder %s329, %s330
      %p342 = scmp.eq.s32.totalorder %s35, 7
      %p343 = por %p341, %p342
      %p345 = scmp.ne.s32.totalorder %s330, %s344
      %p346 = scmp.eq.s32.totalorder %s35, 0
      %p347 = por %p345, %p346
      %s349 = sadd.s32 %s348, 1
      %p352 = scmp.eq.s32.totalorder %s29, 7
      %p353 = scmp.ne.s32.totalorder %s348, %s350
      %p354 = scmp.eq.s32.totalorder %s29, 0
      %p355 = por %p353, %p354
      %p356 = scmp.ne.s32.totalorder %s348, %s350
      %p357 = scmp.eq.s32.totalorder %s34, 7
      %p358 = por %p356, %p357
      %p359 = scmp.ne.s32.totalorder %s350, %s351
      %p360 = scmp.eq.s32.totalorder %s34, 0
      %p361 = por %p359, %p360
      %p362 = scmp.ne.s32.totalorder %s350, %s351
      %p363 = scmp.eq.s32.totalorder %s35, 7
      %p364 = por %p362, %p363
      %p366 = scmp.ne.s32.totalorder %s351, %s365
      %p367 = scmp.eq.s32.totalorder %s35, 0
      %p368 = por %p366, %p367
      %s369 = ssub.s32 %s36, %s48
      %p370 = scmp.eq.s32.totalorder %s369, 0
      %s372 = sadd.s32 %s371, 1
      %s373 = scalar_select %p370, %s371, %s372
      %p376 = pneg %p370
      %p377 = scmp.eq.s32.totalorder %s29, 7
      %p378 = por %p376, %p377
      %p379 = scmp.ne.s32.totalorder %s371, %s374
      %p380 = scmp.eq.s32.totalorder %s29, 0
      %p381 = por %p379, %p380
      %p382 = scmp.ne.s32.totalorder %s371, %s374
      %p383 = scmp.eq.s32.totalorder %s34, 7
      %p384 = por %p382, %p383
      %p385 = scmp.ne.s32.totalorder %s374, %s375
      %p386 = scmp.eq.s32.totalorder %s34, 0
      %p387 = por %p385, %p386
      %p388 = scmp.ne.s32.totalorder %s374, %s375
      %p389 = scmp.eq.s32.totalorder %s35, 7
      %p390 = por %p388, %p389
      %p392 = scmp.ne.s32.totalorder %s375, %s391
      %p393 = scmp.eq.s32.totalorder %s35, 0
      %p394 = por %p392, %p393
      %p395 = scmp.le.s32.totalorder 1, %s29
      %p396 = scmp.lt.s32.totalorder %s29, 9
      %p397 = pnand %p395, %p396
      %p398 = pneg %p397
      // Predicated region
      $region9: #{biot_forward.3} parent=5 // pred_check
        _
      $region10: #{biot_forward.3} parent=5 // pred_check_branch
        %400 = sbr.rel (%p397) target = $region12
      $region11: #{biot_forward.3} parent=5 // pred_region
        %s401 = ssub.s32 %s29, 1
        // Predicated region
        $region13: #{biot_forward.3} parent=11 // pred_check
          %p402 = pneg %p88
        $region14: #{biot_forward.3} parent=11 // pred_check_branch
          %404 = sbr.rel (%p402) target = $region16
        $region15: #{biot_forward.3} parent=11 // pred_region
          %s406 = ssub.s32 128, 128
          %407 = vsyncadd [#allocation4], %s406
          %s408 = sshll.u32 [#allocation3], 4
          %s409 = int_to_ptr.vmem [resolvable:$true] %s408
          %414 = dma.hbm_to_vmem [thread:$0]  %s1, 128, %s409, [#allocation4], 32, 32, 2
        $region16: #{biot_forward.3} parent=11 // pred_fallthru
          _
        // Predicated region
        $region17: #{biot_forward.3} parent=11 // pred_check
          %p415 = pneg %p109
        $region18: #{biot_forward.3} parent=11 // pred_check_branch
          %417 = sbr.rel (%p415) target = $region20
        $region19: #{biot_forward.3} parent=11 // pred_region
          %s419 = ssub.s32 128, 128
          %420 = vsyncadd [#allocation6], %s419
          %s421 = sshll.u32 [#allocation5], 4
          %s422 = int_to_ptr.vmem [resolvable:$true] %s421
          %427 = dma.hbm_to_vmem [thread:$0]  %s2, 128, %s422, [#allocation6], 32, 32, 2
        $region20: #{biot_forward.3} parent=11 // pred_fallthru
          _
        // Predicated region
        $region21: #{biot_forward.3} parent=11 // pred_check
          %p428 = pneg %p130
        $region22: #{biot_forward.3} parent=11 // pred_check_branch
          %430 = sbr.rel (%p428) target = $region24
        $region23: #{biot_forward.3} parent=11 // pred_region
          %s432 = ssub.s32 49152, 49152
          %433 = vsyncadd [#allocation6], %s432
          %s434 = sshll.u32 [#allocation7], 4
          %s435 = int_to_ptr.vmem [resolvable:$true] %s434
          %440 = dma.hbm_to_vmem [thread:$0]  %s3, 49152, %s435, [#allocation6], 384, 384, 24
        $region24: #{biot_forward.3} parent=11 // pred_fallthru
          _
        // Predicated region
        $region25: #{biot_forward.3} parent=11 // pred_check
          %p441 = pneg %p151
        $region26: #{biot_forward.3} parent=11 // pred_check_branch
          %443 = sbr.rel (%p441) target = $region28
        $region27: #{biot_forward.3} parent=11 // pred_region
          %s445 = ssub.s32 16384, 16384
          %446 = vsyncadd [#allocation9], %s445
          %s447 = sshll.u32 [#allocation8], 4
          %s448 = int_to_ptr.vmem [resolvable:$true] %s447
          %453 = dma.hbm_to_vmem [thread:$0]  %s4, 16384, %s448, [#allocation9], 128, 128, 8
        $region28: #{biot_forward.3} parent=11 // pred_fallthru
          _
        // Predicated region
        $region29: #{biot_forward.3} parent=11 // pred_check
          %p454 = pneg %p172
        $region30: #{biot_forward.3} parent=11 // pred_check_branch
          %456 = sbr.rel (%p454) target = $region32
        $region31: #{biot_forward.3} parent=11 // pred_region
          %s458 = ssub.s32 128, 128
          %459 = vsyncadd [#allocation9], %s458
          %s460 = sshll.u32 [#allocation10], 4
          %s461 = int_to_ptr.vmem [resolvable:$true] %s460
          %466 = dma.hbm_to_vmem [thread:$0]  %s5, 128, %s461, [#allocation9], 32, 32, 2
        $region32: #{biot_forward.3} parent=11 // pred_fallthru
          _
        // Predicated region
        $region33: #{biot_forward.3} parent=11 // pred_check
          %p467 = pneg %p193
        $region34: #{biot_forward.3} parent=11 // pred_check_branch
          %469 = sbr.rel (%p467) target = $region36
        $region35: #{biot_forward.3} parent=11 // pred_region
          %s471 = ssub.s32 128, 128
          %472 = vsyncadd [#allocation12], %s471
          %s473 = sshll.u32 [#allocation11], 4
          %s474 = int_to_ptr.vmem [resolvable:$true] %s473
          %479 = dma.hbm_to_vmem [thread:$0]  %s6, 128, %s474, [#allocation12], 32, 32, 2
        $region36: #{biot_forward.3} parent=11 // pred_fallthru
          _
        // Predicated region
        $region37: #{biot_forward.3} parent=11 // pred_check
          %p480 = pneg %p214
        $region38: #{biot_forward.3} parent=11 // pred_check_branch
          %482 = sbr.rel (%p480) target = $region40
        $region39: #{biot_forward.3} parent=11 // pred_region
          %s484 = ssub.s32 128, 128
          %485 = vsyncadd [#allocation12], %s484
          %s486 = sshll.u32 [#allocation13], 4
          %s487 = int_to_ptr.vmem [resolvable:$true] %s486
          %492 = dma.hbm_to_vmem [thread:$0]  %s7, 128, %s487, [#allocation12], 32, 32, 2
        $region40: #{biot_forward.3} parent=11 // pred_fallthru
          _
        // Predicated region
        $region41: #{biot_forward.3} parent=11 // pred_check
          %p493 = pneg %p235
        $region42: #{biot_forward.3} parent=11 // pred_check_branch
          %495 = sbr.rel (%p493) target = $region44
        $region43: #{biot_forward.3} parent=11 // pred_region
          %s497 = ssub.s32 65536, 65536
          %498 = vsyncadd [#allocation15], %s497
          %s499 = sshll.u32 [#allocation14], 4
          %s500 = int_to_ptr.vmem [resolvable:$true] %s499
          %505 = dma.hbm_to_vmem [thread:$0]  %s8, 65536, %s500, [#allocation15], 512, 512, 32
        $region44: #{biot_forward.3} parent=11 // pred_fallthru
          _
        // Predicated region
        $region45: #{biot_forward.3} parent=11 // pred_check
          %p506 = pneg %p256
        $region46: #{biot_forward.3} parent=11 // pred_check_branch
          %508 = sbr.rel (%p506) target = $region48
        $region47: #{biot_forward.3} parent=11 // pred_region
          %s510 = ssub.s32 512, 512
          %511 = vsyncadd [#allocation15], %s510
          %s512 = sshll.u32 [#allocation16], 4
          %s513 = int_to_ptr.vmem [resolvable:$true] %s512
          %518 = dma.hbm_to_vmem [thread:$0]  %s9, 512, %s513, [#allocation15], 128, 128, 8
        $region48: #{biot_forward.3} parent=11 // pred_fallthru
          _
        // Predicated region
        $region49: #{biot_forward.3} parent=11 // pred_check
          %p519 = pneg %p277
        $region50: #{biot_forward.3} parent=11 // pred_check_branch
          %521 = sbr.rel (%p519) target = $region52
        $region51: #{biot_forward.3} parent=11 // pred_region
          %s523 = ssub.s32 65536, 65536
          %524 = vsyncadd [#allocation18], %s523
          %s525 = sshll.u32 [#allocation17], 4
          %s526 = int_to_ptr.vmem [resolvable:$true] %s525
          %531 = dma.hbm_to_vmem [thread:$0]  %s10, 65536, %s526, [#allocation18], 128, 128, 8
        $region52: #{biot_forward.3} parent=11 // pred_fallthru
          _
        // Predicated region
        $region53: #{biot_forward.3} parent=11 // pred_check
          %p532 = pneg %p298
        $region54: #{biot_forward.3} parent=11 // pred_check_branch
          %534 = sbr.rel (%p532) target = $region56
        $region55: #{biot_forward.3} parent=11 // pred_region
          %s536 = ssub.s32 128, 128
          %537 = vsyncadd [#allocation18], %s536
          %s538 = sshll.u32 [#allocation19], 4
          %s539 = int_to_ptr.vmem [resolvable:$true] %s538
          %544 = dma.hbm_to_vmem [thread:$0]  %s11, 128, %s539, [#allocation18], 32, 32, 2
        $region56: #{biot_forward.3} parent=11 // pred_fallthru
          _
        // Predicated region
        $region57: #{biot_forward.3} parent=11 // pred_check
          %p545 = pneg %p319
        $region58: #{biot_forward.3} parent=11 // pred_check_branch
          %547 = sbr.rel (%p545) target = $region60
        $region59: #{biot_forward.3} parent=11 // pred_region
          %s549 = ssub.s32 8192, 8192
          %550 = vsyncadd [#allocation21], %s549
          %s551 = sshll.u32 [#allocation20], 4
          %s552 = int_to_ptr.vmem [resolvable:$true] %s551
          %557 = dma.hbm_to_vmem [thread:$0]  %s12, 8192, %s552, [#allocation21], 256, 256, 16
        $region60: #{biot_forward.3} parent=11 // pred_fallthru
          _
        // Predicated region
        $region61: #{biot_forward.3} parent=11 // pred_check
          %p558 = pneg %p340
        $region62: #{biot_forward.3} parent=11 // pred_check_branch
          %560 = sbr.rel (%p558) target = $region64
        $region63: #{biot_forward.3} parent=11 // pred_region
          %s562 = ssub.s32 4096, 4096
          %563 = vsyncadd [#allocation21], %s562
          %s564 = sshll.u32 [#allocation22], 4
          %s565 = int_to_ptr.vmem [resolvable:$true] %s564
          %570 = dma.hbm_to_vmem [thread:$0]  %s13, 4096, %s565, [#allocation21], 128, 128, 8
        $region64: #{biot_forward.3} parent=11 // pred_fallthru
          _
        // Predicated region
        $region65: #{biot_forward.3} parent=11 // pred_check
          %p571 = pneg %p361
        $region66: #{biot_forward.3} parent=11 // pred_check_branch
          %573 = sbr.rel (%p571) target = $region68
        $region67: #{biot_forward.3} parent=11 // pred_region
          %s575 = ssub.s32 16, 16
          %576 = vsyncadd [#allocation24], %s575
          %s578 = sshll.u32 [#allocation23], 4
          %s579 = int_to_ptr.vmem [resolvable:$true] %s578
          %581 = dma.hbm_to_vmem [thread:$0]  %s14, 16, %s579, [#allocation24]
        $region68: #{biot_forward.3} parent=11 // pred_fallthru
          _
      $region12: #{biot_forward.3} parent=5 // pred_fallthru
        _
      %p582 = scmp.lt.s32.totalorder %s29, 8
      // Predicated region
      $region69: #{biot_forward.3} parent=5 // pred_check
        %p583 = pneg %p582
      $region70: #{biot_forward.3} parent=5 // pred_check_branch
        %585 = sbr.rel (%p583) target = $region72
      $region71: #{biot_forward.3} parent=5 // pred_region
        // Predicated region
        $region73: #{biot_forward.3} parent=71 // pred_check
          %p586 = pneg %p61
        $region74: #{biot_forward.3} parent=71 // pred_check_branch
          %588 = sbr.rel (%p586) target = $region76
        $region75: #{biot_forward.3} parent=71 // pred_region
          %p589 = scmp.lt.s32.totalorder %s36, 1
          %s590 = scalar_select %p589, %s36, 1
          %s591 = smul.addr %s590, 4
          %s592 = smul.addr %s591, 4
          %s593 = scalar_lea.vmem %s0, %s592
        $region76: #{biot_forward.3} parent=71 // pred_fallthru
          _
      $region72: #{biot_forward.3} parent=5 // pred_fallthru
        _
      %p594 = scmp.le.s32.totalorder 1, %s29
      %p595 = scmp.lt.s32.totalorder %s29, 9
      %p596 = pnand %p594, %p595
      %p597 = pneg %p596
      // Predicated region
      $region77: #{biot_forward.3} parent=5 // pred_check
        _
      $region78: #{biot_forward.3} parent=5 // pred_check_branch
        %599 = sbr.rel (%p596) target = $region80
      $region79: #{biot_forward.3} parent=5 // pred_region
        %s600 = ssub.s32 %s29, 1
        // Predicated region
        $region81: #{biot_forward.3} parent=79 // pred_check
          %p601 = pneg %p88
        $region82: #{biot_forward.3} parent=79 // pred_check_branch
          %603 = sbr.rel (%p601) target = $region84
        $region83: #{biot_forward.3} parent=79 // pred_region
          %604 = dma.done [#allocation4], 128
        $region84: #{biot_forward.3} parent=79 // pred_fallthru
          _
        // Predicated region
        $region85: #{biot_forward.3} parent=79 // pred_check
          %p605 = pneg %p109
        $region86: #{biot_forward.3} parent=79 // pred_check_branch
          %607 = sbr.rel (%p605) target = $region88
        $region87: #{biot_forward.3} parent=79 // pred_region
          %608 = dma.done [#allocation6], 128
        $region88: #{biot_forward.3} parent=79 // pred_fallthru
          _
        // Predicated region
        $region89: #{biot_forward.3} parent=79 // pred_check
          %p609 = pneg %p130
        $region90: #{biot_forward.3} parent=79 // pred_check_branch
          %611 = sbr.rel (%p609) target = $region92
        $region91: #{biot_forward.3} parent=79 // pred_region
          %612 = dma.done [#allocation6], 49152
        $region92: #{biot_forward.3} parent=79 // pred_fallthru
          _
        // Predicated region
        $region93: #{biot_forward.3} parent=79 // pred_check
          %p613 = pneg %p151
        $region94: #{biot_forward.3} parent=79 // pred_check_branch
          %615 = sbr.rel (%p613) target = $region96
        $region95: #{biot_forward.3} parent=79 // pred_region
          %616 = dma.done [#allocation9], 16384
        $region96: #{biot_forward.3} parent=79 // pred_fallthru
          _
        // Predicated region
        $region97: #{biot_forward.3} parent=79 // pred_check
          %p617 = pneg %p172
        $region98: #{biot_forward.3} parent=79 // pred_check_branch
          %619 = sbr.rel (%p617) target = $region100
        $region99: #{biot_forward.3} parent=79 // pred_region
          %620 = dma.done [#allocation9], 128
        $region100: #{biot_forward.3} parent=79 // pred_fallthru
          _
        // Predicated region
        $region101: #{biot_forward.3} parent=79 // pred_check
          %p621 = pneg %p193
        $region102: #{biot_forward.3} parent=79 // pred_check_branch
          %623 = sbr.rel (%p621) target = $region104
        $region103: #{biot_forward.3} parent=79 // pred_region
          %624 = dma.done [#allocation12], 128
        $region104: #{biot_forward.3} parent=79 // pred_fallthru
          _
        // Predicated region
        $region105: #{biot_forward.3} parent=79 // pred_check
          %p625 = pneg %p214
        $region106: #{biot_forward.3} parent=79 // pred_check_branch
          %627 = sbr.rel (%p625) target = $region108
        $region107: #{biot_forward.3} parent=79 // pred_region
          %628 = dma.done [#allocation12], 128
        $region108: #{biot_forward.3} parent=79 // pred_fallthru
          _
        // Predicated region
        $region109: #{biot_forward.3} parent=79 // pred_check
          %p629 = pneg %p235
        $region110: #{biot_forward.3} parent=79 // pred_check_branch
          %631 = sbr.rel (%p629) target = $region112
        $region111: #{biot_forward.3} parent=79 // pred_region
          %632 = dma.done [#allocation15], 65536
        $region112: #{biot_forward.3} parent=79 // pred_fallthru
          _
        // Predicated region
        $region113: #{biot_forward.3} parent=79 // pred_check
          %p633 = pneg %p256
        $region114: #{biot_forward.3} parent=79 // pred_check_branch
          %635 = sbr.rel (%p633) target = $region116
        $region115: #{biot_forward.3} parent=79 // pred_region
          %636 = dma.done [#allocation15], 512
        $region116: #{biot_forward.3} parent=79 // pred_fallthru
          _
        // Predicated region
        $region117: #{biot_forward.3} parent=79 // pred_check
          %p637 = pneg %p277
        $region118: #{biot_forward.3} parent=79 // pred_check_branch
          %639 = sbr.rel (%p637) target = $region120
        $region119: #{biot_forward.3} parent=79 // pred_region
          %640 = dma.done [#allocation18], 65536
        $region120: #{biot_forward.3} parent=79 // pred_fallthru
          _
        // Predicated region
        $region121: #{biot_forward.3} parent=79 // pred_check
          %p641 = pneg %p298
        $region122: #{biot_forward.3} parent=79 // pred_check_branch
          %643 = sbr.rel (%p641) target = $region124
        $region123: #{biot_forward.3} parent=79 // pred_region
          %644 = dma.done [#allocation18], 128
        $region124: #{biot_forward.3} parent=79 // pred_fallthru
          _
        // Predicated region
        $region125: #{biot_forward.3} parent=79 // pred_check
          %p645 = pneg %p319
        $region126: #{biot_forward.3} parent=79 // pred_check_branch
          %647 = sbr.rel (%p645) target = $region128
        $region127: #{biot_forward.3} parent=79 // pred_region
          %648 = dma.done [#allocation21], 8192
        $region128: #{biot_forward.3} parent=79 // pred_fallthru
          _
        // Predicated region
        $region129: #{biot_forward.3} parent=79 // pred_check
          %p649 = pneg %p340
        $region130: #{biot_forward.3} parent=79 // pred_check_branch
          %651 = sbr.rel (%p649) target = $region132
        $region131: #{biot_forward.3} parent=79 // pred_region
          %652 = dma.done [#allocation21], 4096
        $region132: #{biot_forward.3} parent=79 // pred_fallthru
          _
        // Predicated region
        $region133: #{biot_forward.3} parent=79 // pred_check
          %p653 = pneg %p361
        $region134: #{biot_forward.3} parent=79 // pred_check_branch
          %655 = sbr.rel (%p653) target = $region136
        $region135: #{biot_forward.3} parent=79 // pred_region
          %656 = dma.done [#allocation24], 16
        $region136: #{biot_forward.3} parent=79 // pred_fallthru
          _
        %p657 = scmp.lt.s32.totalorder %s38, 1
        %s658 = scalar_select %p657, %s38, 1
        %s659 = smul.addr %s658, 4
        %s660 = smul.addr %s659, 4
        %s661 = scalar_lea.vmem %s0, %s660
        %p662 = pneg %p67
        %p663 = pneg %p64
        %p664 = pneg %p88
        %p665 = pneg %p85
        %p666 = pneg %p109
        %p667 = pneg %p106
        %p668 = pneg %p130
        %p669 = pneg %p127
        %p670 = pneg %p151
        %p671 = pneg %p148
        %p672 = pneg %p172
        %p673 = pneg %p169
        %p674 = pneg %p193
        %p675 = pneg %p190
        %p676 = pneg %p214
        %p677 = pneg %p211
        %p678 = pneg %p235
        %p679 = pneg %p232
        %p680 = pneg %p256
        %p681 = pneg %p253
        %p682 = pneg %p277
        %p683 = pneg %p274
        %p684 = pneg %p298
        %p685 = pneg %p295
        %p686 = pneg %p319
        %p687 = pneg %p316
        %p688 = pneg %p340
        %p689 = pneg %p337
        %p690 = pneg %p361
        %p691 = pneg %p358
        %p692 = pneg %p387
        %p693 = pneg %p384
        %p694 = scmp.lt.s32.totalorder %s38, 1
        %s695 = scalar_select %p694, %s38, 1
        %s696 = smul.addr %s695, 8
        %s697 = scalar_lea.vmem %s15, %s696
        %p698 = scmp.lt.s32.totalorder %s38, 1
        %s699 = scalar_select %p698, %s38, 1
        %s700 = smul.addr %s699, 4
        %s701 = smul.addr %s700, 4
        %s702 = scalar_lea.vmem %s0, %s701
        %p703 = scmp.lt.s32.totalorder %s38, 1
        %s704 = scalar_select %p703, %s38, 1
        %s705 = smul.addr %s704, 8
        %s706 = scalar_lea.vmem %s15, %s705
        %p707 = scmp.eq.s32.totalorder %s39, 0
        // Predicated region
        $region137: #{biot_forward.3} parent=79 // pred_check
          %p708 = pneg %p707
        $region138: #{biot_forward.3} parent=79 // pred_check_branch
          %710 = sbr.rel (%p708) target = $region140
        $region139: #{biot_forward.3} parent=79 // pred_region
          %v711 = vld [vmem:[%s702] sm:$0xff]
          %v712 = vld [vmem:[%s702 + $0x8] sm:$0x33]
          %v713 = vunpack.c.l.bf16 %v711
          %v714 = vunpack.c.h.bf16 %v711
          %v715 = vunpack.c.l.bf16 %v712
          %v716 = vunpack.c.h.bf16 %v712
          %717 = vst [vmem:[#allocation2] sm:$0xff] %v713
          %718 = vst [vmem:[#allocation2 + $0x8] sm:$0xff] %v714
          %719 = vst [vmem:[#allocation2 + $0x10] sm:$0xf] %v715
          %720 = vst [vmem:[#allocation2 + $0x18] sm:$0xf] %v716
        $region140: #{biot_forward.3} parent=79 // pred_fallthru
          _
        %v721 = vld [vmem:[#allocation2] sm:$0xff]
        %v722 = vld [vmem:[#allocation2 + $0x8] sm:$0xff]
        %v723 = vld [vmem:[#allocation2 + $0x10] sm:$0xf]
        %v724 = vld [vmem:[#allocation2 + $0x18] sm:$0xf]
        %v725 = vld [vmem:[#allocation20] sm:$0xff]
        %v726 = vld [vmem:[#allocation20 + $0x8] sm:$0xff]
        %v727 = vld [vmem:[#allocation20 + $0x10] sm:$0xff]
        %v728 = vld [vmem:[#allocation20 + $0x18] sm:$0xff]
        %v729 = vld [vmem:[#allocation20 + $0x20] sm:$0xff]
        %v730 = vld [vmem:[#allocation20 + $0x28] sm:$0xff]
        %v731 = vld [vmem:[#allocation20 + $0x30] sm:$0xff]
        %v732 = vld [vmem:[#allocation20 + $0x38] sm:$0xff]
        %v733 = vld [vmem:[#allocation20 + $0x40] sm:$0xff]
        %v734 = vld [vmem:[#allocation20 + $0x48] sm:$0xff]
        %v735 = vld [vmem:[#allocation20 + $0x50] sm:$0xff]
        %v736 = vld [vmem:[#allocation20 + $0x58] sm:$0xff]
        %v737 = vld [vmem:[#allocation20 + $0x60] sm:$0xff]
        %v738 = vld [vmem:[#allocation20 + $0x68] sm:$0xff]
        %v739 = vld [vmem:[#allocation20 + $0x70] sm:$0xff]
        %v740 = vld [vmem:[#allocation20 + $0x78] sm:$0xff]
        %v741 = vld [vmem:[#allocation20 + $0x80] sm:$0xff]
        %v742 = vld [vmem:[#allocation20 + $0x88] sm:$0xff]
        %v743 = vld [vmem:[#allocation20 + $0x90] sm:$0xff]
        %v744 = vld [vmem:[#allocation20 + $0x98] sm:$0xff]
        %v745 = vld [vmem:[#allocation20 + $0xa0] sm:$0xff]
        %v746 = vld [vmem:[#allocation20 + $0xa8] sm:$0xff]
        %v747 = vld [vmem:[#allocation20 + $0xb0] sm:$0xff]
        %v748 = vld [vmem:[#allocation20 + $0xb8] sm:$0xff]
        %v749 = vld [vmem:[#allocation20 + $0xc0] sm:$0xff]
        %v750 = vld [vmem:[#allocation20 + $0xc8] sm:$0xff]
        %v751 = vld [vmem:[#allocation20 + $0xd0] sm:$0xff]
        %v752 = vld [vmem:[#allocation20 + $0xd8] sm:$0xff]
        %v753 = vld [vmem:[#allocation20 + $0xe0] sm:$0xff]
        %v754 = vld [vmem:[#allocation20 + $0xe8] sm:$0xff]
        %v755 = vld [vmem:[#allocation20 + $0xf0] sm:$0xff]
        %v756 = vld [vmem:[#allocation20 + $0xf8] sm:$0xff]
        %v757 = vld [vmem:[#allocation20 + $0x100] sm:$0xff]
        %v758 = vld [vmem:[#allocation20 + $0x108] sm:$0xff]
        %v759 = vld [vmem:[#allocation20 + $0x110] sm:$0xff]
        %v760 = vld [vmem:[#allocation20 + $0x118] sm:$0xff]
        %v761 = vld [vmem:[#allocation20 + $0x120] sm:$0xff]
        %v762 = vld [vmem:[#allocation20 + $0x128] sm:$0xff]
        %v763 = vld [vmem:[#allocation20 + $0x130] sm:$0xff]
        %v764 = vld [vmem:[#allocation20 + $0x138] sm:$0xff]
        %v765 = vld [vmem:[#allocation20 + $0x140] sm:$0xff]
        %v766 = vld [vmem:[#allocation20 + $0x148] sm:$0xff]
        %v767 = vld [vmem:[#allocation20 + $0x150] sm:$0xff]
        %v768 = vld [vmem:[#allocation20 + $0x158] sm:$0xff]
        %v769 = vld [vmem:[#allocation20 + $0x160] sm:$0xff]
        %v770 = vld [vmem:[#allocation20 + $0x168] sm:$0xff]
        %v771 = vld [vmem:[#allocation20 + $0x170] sm:$0xff]
        %v772 = vld [vmem:[#allocation20 + $0x178] sm:$0xff]
        %v773 = vld [vmem:[#allocation20 + $0x180] sm:$0xff]
        %v774 = vld [vmem:[#allocation20 + $0x188] sm:$0xff]
        %v775 = vld [vmem:[#allocation20 + $0x190] sm:$0xff]
        %v776 = vld [vmem:[#allocation20 + $0x198] sm:$0xff]
        %v777 = vld [vmem:[#allocation20 + $0x1a0] sm:$0xff]
        %v778 = vld [vmem:[#allocation20 + $0x1a8] sm:$0xff]
        %v779 = vld [vmem:[#allocation20 + $0x1b0] sm:$0xff]
        %v780 = vld [vmem:[#allocation20 + $0x1b8] sm:$0xff]
        %v781 = vld [vmem:[#allocation20 + $0x1c0] sm:$0xff]
        %v782 = vld [vmem:[#allocation20 + $0x1c8] sm:$0xff]
        %v783 = vld [vmem:[#allocation20 + $0x1d0] sm:$0xff]
        %v784 = vld [vmem:[#allocation20 + $0x1d8] sm:$0xff]
        %v785 = vld [vmem:[#allocation20 + $0x1e0] sm:$0xff]
        %v786 = vld [vmem:[#allocation20 + $0x1e8] sm:$0xff]
        %v787 = vld [vmem:[#allocation20 + $0x1f0] sm:$0xff]
        %v788 = vld [vmem:[#allocation20 + $0x1f8] sm:$0xff]
        %s789 = smul.u32 %s39, 2
        %s790 = scalar_lea.vmem [#allocation3], %s789
        %v791 = vld [vmem:[%s790] sm:$0x3]
        %s792 = scalar_lea.vmem [#allocation5], %s789
        %v793 = vld [vmem:[%s792] sm:$0x3]
        %v794 = vadd.f32 %v721, %v722
        %795 = vadd.xlane.f32.xlu0 %v794
        %v796 = vpop.xlane.xlu0 %795
        %vm797 = vcmask 1043456
        %v798 = vsel %vm797, %v723, 0.0
        %v799 = vsel %vm797, %v724, 0.0
        %v800 = vadd.f32 %v798, %v799
        %801 = vadd.xlane.f32.xlu0 %v800
        %v802 = vpop.xlane.xlu0 %801
        %v803 = vrcp.pop 256.0
        %v804 = vmul.f32 %v796, %v803
        %v805 = vmul.f32 %v802, %v803
        %v806 = vsub.f32 %v721, %v804
        %v807 = vsub.f32 %v722, %v804
        %v808 = vsub.f32 %v723, %v805
        %v809 = vsub.f32 %v724, %v805
        %v810 = vmul.f32 %v806, %v806
        %v811 = vmul.f32 %v807, %v807
        %v812 = vmul.f32 %v808, %v808
        %v813 = vmul.f32 %v809, %v809
        %v814 = vadd.f32 %v810, %v811
        %815 = vadd.xlane.f32.xlu0 %v814
        %v816 = vpop.xlane.xlu0 %815
        %v817 = vsel %vm797, %v812, 0.0
        %v818 = vsel %vm797, %v813, 0.0
        %v819 = vadd.f32 %v817, %v818
        %820 = vadd.xlane.f32.xlu0 %v819
        %v821 = vpop.xlane.xlu0 %820
        %v822 = vmul.f32 %v816, %v803
        %v823 = vmul.f32 %v821, %v803
        %v824 = vadd.f32 %v822, 1e-05
        %v825 = vadd.f32 %v823, 1e-05
        %v826 = vrsqrt.pop %v824
        %v827 = vrsqrt.pop %v825
        %v828 = vmul.f32 %v806, %v826
        %v829 = vmul.f32 %v807, %v826
        %v830 = vmul.f32 %v808, %v827
        %v831 = vmul.f32 %v809, %v827
        %v833 = vlaneseq
        %v834 = vshrl.u32 %v833, 7
        %v835 = vsub.s32 0, %v834
        %v836 = vrot.slane %v791, %v835
        %v837 = vlaneseq
        %v838 = vshrl.u32 %v837, 7
        %v839 = vsub.s32 1, %v838
        %v840 = vrot.slane %v791, %v839
        %v843 = vmul.f32 %v828, %v836
        %v844 = vmul.f32 %v829, %v840
        %v845 = vmul.f32 %v830, %v836
        %v846 = vmul.f32 %v831, %v840
        %v848 = vlaneseq
        %v849 = vshrl.u32 %v848, 7
        %v850 = vsub.s32 0, %v849
        %v851 = vrot.slane %v793, %v850
        %v852 = vlaneseq
        %v853 = vshrl.u32 %v852, 7
        %v854 = vsub.s32 1, %v853
        %v855 = vrot.slane %v793, %v854
        %v858 = vadd.f32 %v843, %v851
        %v859 = vadd.f32 %v844, %v855
        %v860 = vadd.f32 %v845, %v851
        %v861 = vadd.f32 %v846, %v855
        %v862 = vpack.c.bf16 %v860, %v858
        %v863 = vpack.c.bf16 %v861, %v859
        %s864 = smul.u32 %s39, 192
        %s865 = smul.addr %s864, 4
        %s866 = scalar_lea.vmem [#allocation7], %s865
        %v867 = vld [vmem:[%s866] sm:$0xff]
        %v868 = vld [vmem:[%s866 + $0x8] sm:$0xff]
        %v869 = vld [vmem:[%s866 + $0x10] sm:$0xff]
        %v870 = vld [vmem:[%s866 + $0x18] sm:$0xff]
        %v871 = vld [vmem:[%s866 + $0x20] sm:$0xff]
        %v872 = vld [vmem:[%s866 + $0x28] sm:$0xff]
        %v873 = vld [vmem:[%s866 + $0x30] sm:$0xff]
        %v874 = vld [vmem:[%s866 + $0x38] sm:$0xff]
        %v875 = vld [vmem:[%s866 + $0x40] sm:$0xff]
        %v876 = vld [vmem:[%s866 + $0x48] sm:$0xff]
        %v877 = vld [vmem:[%s866 + $0x50] sm:$0xff]
        %v878 = vld [vmem:[%s866 + $0x58] sm:$0xff]
        %v879 = vld [vmem:[%s866 + $0x60] sm:$0xff]
        %v880 = vld [vmem:[%s866 + $0x68] sm:$0xff]
        %v881 = vld [vmem:[%s866 + $0x70] sm:$0xff]
        %v882 = vld [vmem:[%s866 + $0x78] sm:$0xff]
        %v883 = vld [vmem:[%s866 + $0x80] sm:$0xff]
        %v884 = vld [vmem:[%s866 + $0x88] sm:$0xff]
        %v885 = vld [vmem:[%s866 + $0x90] sm:$0xff]
        %v886 = vld [vmem:[%s866 + $0x98] sm:$0xff]
        %v887 = vld [vmem:[%s866 + $0xa0] sm:$0xff]
        %v888 = vld [vmem:[%s866 + $0xa8] sm:$0xff]
        %v889 = vld [vmem:[%s866 + $0xb0] sm:$0xff]
        %v890 = vld [vmem:[%s866 + $0xb8] sm:$0xff]
        %v891 = vld [vmem:[%s866 + $0xc0] sm:$0xff]
        %v892 = vld [vmem:[%s866 + $0xc8] sm:$0xff]
        %v893 = vld [vmem:[%s866 + $0xd0] sm:$0xff]
        %v894 = vld [vmem:[%s866 + $0xd8] sm:$0xff]
        %v895 = vld [vmem:[%s866 + $0xe0] sm:$0xff]
        %v896 = vld [vmem:[%s866 + $0xe8] sm:$0xff]
        %v897 = vld [vmem:[%s866 + $0xf0] sm:$0xff]
        %v898 = vld [vmem:[%s866 + $0xf8] sm:$0xff]
        %v899 = vld [vmem:[%s866 + $0x100] sm:$0xff]
        %v900 = vld [vmem:[%s866 + $0x108] sm:$0xff]
        %v901 = vld [vmem:[%s866 + $0x110] sm:$0xff]
        %v902 = vld [vmem:[%s866 + $0x118] sm:$0xff]
        %v903 = vld [vmem:[%s866 + $0x120] sm:$0xff]
        %v904 = vld [vmem:[%s866 + $0x128] sm:$0xff]
        %v905 = vld [vmem:[%s866 + $0x130] sm:$0xff]
        %v906 = vld [vmem:[%s866 + $0x138] sm:$0xff]
        %v907 = vld [vmem:[%s866 + $0x140] sm:$0xff]
        %v908 = vld [vmem:[%s866 + $0x148] sm:$0xff]
        %v909 = vld [vmem:[%s866 + $0x150] sm:$0xff]
        %v910 = vld [vmem:[%s866 + $0x158] sm:$0xff]
        %v911 = vld [vmem:[%s866 + $0x160] sm:$0xff]
        %v912 = vld [vmem:[%s866 + $0x168] sm:$0xff]
        %v913 = vld [vmem:[%s866 + $0x170] sm:$0xff]
        %v914 = vld [vmem:[%s866 + $0x178] sm:$0xff]
        %v915 = vld [vmem:[%s866 + $0x180] sm:$0xff]
        %v916 = vld [vmem:[%s866 + $0x188] sm:$0xff]
        %v917 = vld [vmem:[%s866 + $0x190] sm:$0xff]
        %v918 = vld [vmem:[%s866 + $0x198] sm:$0xff]
        %v919 = vld [vmem:[%s866 + $0x1a0] sm:$0xff]
        %v920 = vld [vmem:[%s866 + $0x1a8] sm:$0xff]
        %v921 = vld [vmem:[%s866 + $0x1b0] sm:$0xff]
        %v922 = vld [vmem:[%s866 + $0x1b8] sm:$0xff]
        %v923 = vld [vmem:[%s866 + $0x1c0] sm:$0xff]
        %v924 = vld [vmem:[%s866 + $0x1c8] sm:$0xff]
        %v925 = vld [vmem:[%s866 + $0x1d0] sm:$0xff]
        %v926 = vld [vmem:[%s866 + $0x1d8] sm:$0xff]
        %v927 = vld [vmem:[%s866 + $0x1e0] sm:$0xff]
        %v928 = vld [vmem:[%s866 + $0x1e8] sm:$0xff]
        %v929 = vld [vmem:[%s866 + $0x1f0] sm:$0xff]
        %v930 = vld [vmem:[%s866 + $0x1f8] sm:$0xff]
        %v931 = vld [vmem:[%s866 + $0x200] sm:$0xff]
        %v932 = vld [vmem:[%s866 + $0x208] sm:$0xff]
        %v933 = vld [vmem:[%s866 + $0x210] sm:$0xff]
        %v934 = vld [vmem:[%s866 + $0x218] sm:$0xff]
        %v935 = vld [vmem:[%s866 + $0x220] sm:$0xff]
        %v936 = vld [vmem:[%s866 + $0x228] sm:$0xff]
        %v937 = vld [vmem:[%s866 + $0x230] sm:$0xff]
        %v938 = vld [vmem:[%s866 + $0x238] sm:$0xff]
        %v939 = vld [vmem:[%s866 + $0x240] sm:$0xff]
        %v940 = vld [vmem:[%s866 + $0x248] sm:$0xff]
        %v941 = vld [vmem:[%s866 + $0x250] sm:$0xff]
        %v942 = vld [vmem:[%s866 + $0x258] sm:$0xff]
        %v943 = vld [vmem:[%s866 + $0x260] sm:$0xff]
        %v944 = vld [vmem:[%s866 + $0x268] sm:$0xff]
        %v945 = vld [vmem:[%s866 + $0x270] sm:$0xff]
        %v946 = vld [vmem:[%s866 + $0x278] sm:$0xff]
        %v947 = vld [vmem:[%s866 + $0x280] sm:$0xff]
        %v948 = vld [vmem:[%s866 + $0x288] sm:$0xff]
        %v949 = vld [vmem:[%s866 + $0x290] sm:$0xff]
        %v950 = vld [vmem:[%s866 + $0x298] sm:$0xff]
        %v951 = vld [vmem:[%s866 + $0x2a0] sm:$0xff]
        %v952 = vld [vmem:[%s866 + $0x2a8] sm:$0xff]
        %v953 = vld [vmem:[%s866 + $0x2b0] sm:$0xff]
        %v954 = vld [vmem:[%s866 + $0x2b8] sm:$0xff]
        %v955 = vld [vmem:[%s866 + $0x2c0] sm:$0xff]
        %v956 = vld [vmem:[%s866 + $0x2c8] sm:$0xff]
        %v957 = vld [vmem:[%s866 + $0x2d0] sm:$0xff]
        %v958 = vld [vmem:[%s866 + $0x2d8] sm:$0xff]
        %v959 = vld [vmem:[%s866 + $0x2e0] sm:$0xff]
        %v960 = vld [vmem:[%s866 + $0x2e8] sm:$0xff]
        %v961 = vld [vmem:[%s866 + $0x2f0] sm:$0xff]
        %v962 = vld [vmem:[%s866 + $0x2f8] sm:$0xff]
        %v1059 = vunpack.c.l.b16 %v867
        %v1060 = vunpack.c.h.b16 %v867
        %v1061 = vunpack.c.l.b16 %v868
        %v1062 = vunpack.c.h.b16 %v868
        %v1063 = vunpack.c.l.b16 %v869
        %v1064 = vunpack.c.h.b16 %v869
        %v1065 = vunpack.c.l.b16 %v870
        %v1066 = vunpack.c.h.b16 %v870
        %v1067 = vunpack.c.l.b16 %v871
        %v1068 = vunpack.c.h.b16 %v871
        %v1069 = vunpack.c.l.b16 %v872
        %v1070 = vunpack.c.h.b16 %v872
        %v1071 = vunpack.c.l.b16 %v873
        %v1072 = vunpack.c.h.b16 %v873
        %v1073 = vunpack.c.l.b16 %v874
        %v1074 = vunpack.c.h.b16 %v874
        %v1075 = vunpack.c.l.b16 %v875
        %v1076 = vunpack.c.h.b16 %v875
        %v1077 = vunpack.c.l.b16 %v876
        %v1078 = vunpack.c.h.b16 %v876
        %v1079 = vunpack.c.l.b16 %v877
        %v1080 = vunpack.c.h.b16 %v877
        %v1081 = vunpack.c.l.b16 %v878
        %v1082 = vunpack.c.h.b16 %v878
        %v1083 = vunpack.c.l.b16 %v879
        %v1084 = vunpack.c.h.b16 %v879
        %v1085 = vunpack.c.l.b16 %v880
        %v1086 = vunpack.c.h.b16 %v880
        %v1087 = vunpack.c.l.b16 %v881
        %v1088 = vunpack.c.h.b16 %v881
        %v1089 = vunpack.c.l.b16 %v882
        %v1090 = vunpack.c.h.b16 %v882
        %v1091 = vunpack.c.l.b16 %v883
        %v1092 = vunpack.c.h.b16 %v883
        %v1093 = vunpack.c.l.b16 %v884
        %v1094 = vunpack.c.h.b16 %v884
        %v1095 = vunpack.c.l.b16 %v885
        %v1096 = vunpack.c.h.b16 %v885
        %v1097 = vunpack.c.l.b16 %v886
        %v1098 = vunpack.c.h.b16 %v886
        %v1099 = vunpack.c.l.b16 %v887
        %v1100 = vunpack.c.h.b16 %v887
        %v1101 = vunpack.c.l.b16 %v888
        %v1102 = vunpack.c.h.b16 %v888
        %v1103 = vunpack.c.l.b16 %v889
        %v1104 = vunpack.c.h.b16 %v889
        %v1105 = vunpack.c.l.b16 %v890
        %v1106 = vunpack.c.h.b16 %v890
        %v1107 = vunpack.c.l.b16 %v891
        %v1108 = vunpack.c.h.b16 %v891
        %v1109 = vunpack.c.l.b16 %v892
        %v1110 = vunpack.c.h.b16 %v892
        %v1111 = vunpack.c.l.b16 %v893
        %v1112 = vunpack.c.h.b16 %v893
        %v1113 = vunpack.c.l.b16 %v894
        %v1114 = vunpack.c.h.b16 %v894
        %v1115 = vunpack.c.l.b16 %v895
        %v1116 = vunpack.c.h.b16 %v895
        %v1117 = vunpack.c.l.b16 %v896
        %v1118 = vunpack.c.h.b16 %v896
        %v1119 = vunpack.c.l.b16 %v897
        %v1120 = vunpack.c.h.b16 %v897
        %v1121 = vunpack.c.l.b16 %v898
        %v1122 = vunpack.c.h.b16 %v898
        %v1123 = vunpack.c.l.b16 %v899
        %v1124 = vunpack.c.h.b16 %v899
        %v1125 = vunpack.c.l.b16 %v900
        %v1126 = vunpack.c.h.b16 %v900
        %v1127 = vunpack.c.l.b16 %v901
        %v1128 = vunpack.c.h.b16 %v901
        %v1129 = vunpack.c.l.b16 %v902
        %v1130 = vunpack.c.h.b16 %v902
        %v1131 = vunpack.c.l.b16 %v903
        %v1132 = vunpack.c.h.b16 %v903
        %v1133 = vunpack.c.l.b16 %v904
        %v1134 = vunpack.c.h.b16 %v904
        %v1135 = vunpack.c.l.b16 %v905
        %v1136 = vunpack.c.h.b16 %v905
        %v1137 = vunpack.c.l.b16 %v906
        %v1138 = vunpack.c.h.b16 %v906
        %v1139 = vunpack.c.l.b16 %v907
        %v1140 = vunpack.c.h.b16 %v907
        %v1141 = vunpack.c.l.b16 %v908
        %v1142 = vunpack.c.h.b16 %v908
        %v1143 = vunpack.c.l.b16 %v909
        %v1144 = vunpack.c.h.b16 %v909
        %v1145 = vunpack.c.l.b16 %v910
        %v1146 = vunpack.c.h.b16 %v910
        %v1147 = vunpack.c.l.b16 %v911
        %v1148 = vunpack.c.h.b16 %v911
        %v1149 = vunpack.c.l.b16 %v912
        %v1150 = vunpack.c.h.b16 %v912
        %v1151 = vunpack.c.l.b16 %v913
        %v1152 = vunpack.c.h.b16 %v913
        %v1153 = vunpack.c.l.b16 %v914
        %v1154 = vunpack.c.h.b16 %v914
        %v1155 = vunpack.c.l.b16 %v915
        %v1156 = vunpack.c.h.b16 %v915
        %v1157 = vunpack.c.l.b16 %v916
        %v1158 = vunpack.c.h.b16 %v916
        %v1159 = vunpack.c.l.b16 %v917
        %v1160 = vunpack.c.h.b16 %v917
        %v1161 = vunpack.c.l.b16 %v918
        %v1162 = vunpack.c.h.b16 %v918
        %v1163 = vunpack.c.l.b16 %v919
        %v1164 = vunpack.c.h.b16 %v919
        %v1165 = vunpack.c.l.b16 %v920
        %v1166 = vunpack.c.h.b16 %v920
        %v1167 = vunpack.c.l.b16 %v921
        %v1168 = vunpack.c.h.b16 %v921
        %v1169 = vunpack.c.l.b16 %v922
        %v1170 = vunpack.c.h.b16 %v922
        %v1171 = vunpack.c.l.b16 %v923
        %v1172 = vunpack.c.h.b16 %v923
        %v1173 = vunpack.c.l.b16 %v924
        %v1174 = vunpack.c.h.b16 %v924
        %v1175 = vunpack.c.l.b16 %v925
        %v1176 = vunpack.c.h.b16 %v925
        %v1177 = vunpack.c.l.b16 %v926
        %v1178 = vunpack.c.h.b16 %v926
        %v1179 = vunpack.c.l.b16 %v927
        %v1180 = vunpack.c.h.b16 %v927
        %v1181 = vunpack.c.l.b16 %v928
        %v1182 = vunpack.c.h.b16 %v928
        %v1183 = vunpack.c.l.b16 %v929
        %v1184 = vunpack.c.h.b16 %v929
        %v1185 = vunpack.c.l.b16 %v930
        %v1186 = vunpack.c.h.b16 %v930
        %v1187 = vunpack.c.l.b16 %v931
        %v1188 = vunpack.c.h.b16 %v931
        %v1189 = vunpack.c.l.b16 %v932
        %v1190 = vunpack.c.h.b16 %v932
        %v1191 = vunpack.c.l.b16 %v933
        %v1192 = vunpack.c.h.b16 %v933
        %v1193 = vunpack.c.l.b16 %v934
        %v1194 = vunpack.c.h.b16 %v934
        %v1195 = vunpack.c.l.b16 %v935
        %v1196 = vunpack.c.h.b16 %v935
        %v1197 = vunpack.c.l.b16 %v936
        %v1198 = vunpack.c.h.b16 %v936
        %v1199 = vunpack.c.l.b16 %v937
        %v1200 = vunpack.c.h.b16 %v937
        %v1201 = vunpack.c.l.b16 %v938
        %v1202 = vunpack.c.h.b16 %v938
        %v1203 = vunpack.c.l.b16 %v939
        %v1204 = vunpack.c.h.b16 %v939
        %v1205 = vunpack.c.l.b16 %v940
        %v1206 = vunpack.c.h.b16 %v940
        %v1207 = vunpack.c.l.b16 %v941
        %v1208 = vunpack.c.h.b16 %v941
        %v1209 = vunpack.c.l.b16 %v942
        %v1210 = vunpack.c.h.b16 %v942
        %v1211 = vunpack.c.l.b16 %v943
        %v1212 = vunpack.c.h.b16 %v943
        %v1213 = vunpack.c.l.b16 %v944
        %v1214 = vunpack.c.h.b16 %v944
        %v1215 = vunpack.c.l.b16 %v945
        %v1216 = vunpack.c.h.b16 %v945
        %v1217 = vunpack.c.l.b16 %v946
        %v1218 = vunpack.c.h.b16 %v946
        %v1219 = vunpack.c.l.b16 %v947
        %v1220 = vunpack.c.h.b16 %v947
        %v1221 = vunpack.c.l.b16 %v948
        %v1222 = vunpack.c.h.b16 %v948
        %v1223 = vunpack.c.l.b16 %v949
        %v1224 = vunpack.c.h.b16 %v949
        %v1225 = vunpack.c.l.b16 %v950
        %v1226 = vunpack.c.h.b16 %v950
        %v1227 = vunpack.c.l.b16 %v951
        %v1228 = vunpack.c.h.b16 %v951
        %v1229 = vunpack.c.l.b16 %v952
        %v1230 = vunpack.c.h.b16 %v952
        %v1231 = vunpack.c.l.b16 %v953
        %v1232 = vunpack.c.h.b16 %v953
        %v1233 = vunpack.c.l.b16 %v954
        %v1234 = vunpack.c.h.b16 %v954
        %v1235 = vunpack.c.l.b16 %v955
        %v1236 = vunpack.c.h.b16 %v955
        %v1237 = vunpack.c.l.b16 %v956
        %v1238 = vunpack.c.h.b16 %v956
        %v1239 = vunpack.c.l.b16 %v957
        %v1240 = vunpack.c.h.b16 %v957
        %v1241 = vunpack.c.l.b16 %v958
        %v1242 = vunpack.c.h.b16 %v958
        %v1243 = vunpack.c.l.b16 %v959
        %v1244 = vunpack.c.h.b16 %v959
        %v1245 = vunpack.c.l.b16 %v960
        %v1246 = vunpack.c.h.b16 %v960
        %v1247 = vunpack.c.l.b16 %v961
        %v1248 = vunpack.c.h.b16 %v961
        %v1249 = vunpack.c.l.b16 %v962
        %v1250 = vunpack.c.h.b16 %v962
        %v1251 = vpack.c.b16 %v1065, %v1059
        %v1252 = vpack.c.b16 %v1066, %v1060
        %v1253 = vpack.c.b16 %v1067, %v1061
        %v1254 = vpack.c.b16 %v1068, %v1062
        %v1255 = vpack.c.b16 %v1069, %v1063
        %v1256 = vpack.c.b16 %v1070, %v1064
        %v1257 = vpack.c.b16 %v1077, %v1071
        %v1258 = vpack.c.b16 %v1078, %v1072
        %v1259 = vpack.c.b16 %v1079, %v1073
        %v1260 = vpack.c.b16 %v1080, %v1074
        %v1261 = vpack.c.b16 %v1081, %v1075
        %v1262 = vpack.c.b16 %v1082, %v1076
        %v1263 = vpack.c.b16 %v1089, %v1083
        %v1264 = vpack.c.b16 %v1090, %v1084
        %v1265 = vpack.c.b16 %v1091, %v1085
        %v1266 = vpack.c.b16 %v1092, %v1086
        %v1267 = vpack.c.b16 %v1093, %v1087
        %v1268 = vpack.c.b16 %v1094, %v1088
        %v1269 = vpack.c.b16 %v1101, %v1095
        %v1270 = vpack.c.b16 %v1102, %v1096
        %v1271 = vpack.c.b16 %v1103, %v1097
        %v1272 = vpack.c.b16 %v1104, %v1098
        %v1273 = vpack.c.b16 %v1105, %v1099
        %v1274 = vpack.c.b16 %v1106, %v1100
        %v1275 = vpack.c.b16 %v1113, %v1107
        %v1276 = vpack.c.b16 %v1114, %v1108
        %v1277 = vpack.c.b16 %v1115, %v1109
        %v1278 = vpack.c.b16 %v1116, %v1110
        %v1279 = vpack.c.b16 %v1117, %v1111
        %v1280 = vpack.c.b16 %v1118, %v1112
        %v1281 = vpack.c.b16 %v1125, %v1119
        %v1282 = vpack.c.b16 %v1126, %v1120
        %v1283 = vpack.c.b16 %v1127, %v1121
        %v1284 = vpack.c.b16 %v1128, %v1122
        %v1285 = vpack.c.b16 %v1129, %v1123
        %v1286 = vpack.c.b16 %v1130, %v1124
        %v1287 = vpack.c.b16 %v1137, %v1131
        %v1288 = vpack.c.b16 %v1138, %v1132
        %v1289 = vpack.c.b16 %v1139, %v1133
        %v1290 = vpack.c.b16 %v1140, %v1134
        %v1291 = vpack.c.b16 %v1141, %v1135
        %v1292 = vpack.c.b16 %v1142, %v1136
        %v1293 = vpack.c.b16 %v1149, %v1143
        %v1294 = vpack.c.b16 %v1150, %v1144
        %v1295 = vpack.c.b16 %v1151, %v1145
        %v1296 = vpack.c.b16 %v1152, %v1146
        %v1297 = vpack.c.b16 %v1153, %v1147
        %v1298 = vpack.c.b16 %v1154, %v1148
        %v1299 = vpack.c.b16 %v1161, %v1155
        %v1300 = vpack.c.b16 %v1162, %v1156
        %v1301 = vpack.c.b16 %v1163, %v1157
        %v1302 = vpack.c.b16 %v1164, %v1158
        %v1303 = vpack.c.b16 %v1165, %v1159
        %v1304 = vpack.c.b16 %v1166, %v1160
        %v1305 = vpack.c.b16 %v1173, %v1167
        %v1306 = vpack.c.b16 %v1174, %v1168
        %v1307 = vpack.c.b16 %v1175, %v1169
        %v1308 = vpack.c.b16 %v1176, %v1170
        %v1309 = vpack.c.b16 %v1177, %v1171
        %v1310 = vpack.c.b16 %v1178, %v1172
        %v1311 = vpack.c.b16 %v1185, %v1179
        %v1312 = vpack.c.b16 %v1186, %v1180
        %v1313 = vpack.c.b16 %v1187, %v1181
        %v1314 = vpack.c.b16 %v1188, %v1182
        %v1315 = vpack.c.b16 %v1189, %v1183
        %v1316 = vpack.c.b16 %v1190, %v1184
        %v1317 = vpack.c.b16 %v1197, %v1191
        %v1318 = vpack.c.b16 %v1198, %v1192
        %v1319 = vpack.c.b16 %v1199, %v1193
        %v1320 = vpack.c.b16 %v1200, %v1194
        %v1321 = vpack.c.b16 %v1201, %v1195
        %v1322 = vpack.c.b16 %v1202, %v1196
        %v1323 = vpack.c.b16 %v1209, %v1203
        %v1324 = vpack.c.b16 %v1210, %v1204
        %v1325 = vpack.c.b16 %v1211, %v1205
        %v1326 = vpack.c.b16 %v1212, %v1206
        %v1327 = vpack.c.b16 %v1213, %v1207
        %v1328 = vpack.c.b16 %v1214, %v1208
        %v1329 = vpack.c.b16 %v1221, %v1215
        %v1330 = vpack.c.b16 %v1222, %v1216
        %v1331 = vpack.c.b16 %v1223, %v1217
        %v1332 = vpack.c.b16 %v1224, %v1218
        %v1333 = vpack.c.b16 %v1225, %v1219
        %v1334 = vpack.c.b16 %v1226, %v1220
        %v1335 = vpack.c.b16 %v1233, %v1227
        %v1336 = vpack.c.b16 %v1234, %v1228
        %v1337 = vpack.c.b16 %v1235, %v1229
        %v1338 = vpack.c.b16 %v1236, %v1230
        %v1339 = vpack.c.b16 %v1237, %v1231
        %v1340 = vpack.c.b16 %v1238, %v1232
        %v1341 = vpack.c.b16 %v1245, %v1239
        %v1342 = vpack.c.b16 %v1246, %v1240
        %v1343 = vpack.c.b16 %v1247, %v1241
        %v1344 = vpack.c.b16 %v1248, %v1242
        %v1345 = vpack.c.b16 %v1249, %v1243
        %v1346 = vpack.c.b16 %v1250, %v1244
        %1443 = vmatprep.subr.bf16.mxu0 %v1252
        %1444 = vmatpush1.bf16.msra.mxu0 %v1251
        %1445 = vmatprep.subr.bf16.mxu0 %v1258
        %1446 = vmatpush1.bf16.msra.mxu0 %v1257
        %1447 = vmatprep.subr.bf16.mxu0 %v1264
        %1448 = vmatpush1.bf16.msra.mxu0 %v1263
        %1449 = vmatprep.subr.bf16.mxu0 %v1270
        %1450 = vmatpush1.bf16.msra.mxu0 %v1269
        %1451 = vmatprep.subr.bf16.mxu0 %v1276
        %1452 = vmatpush1.bf16.msra.mxu0 %v1275
        %1453 = vmatprep.subr.bf16.mxu0 %v1282
        %1454 = vmatpush1.bf16.msra.mxu0 %v1281
        %1455 = vmatprep.subr.bf16.mxu0 %v1288
        %1456 = vmatpush1.bf16.msra.mxu0 %v1287
        %1457 = vmatprep.subr.bf16.mxu0 %v1294
        %1458 = vmatpush1.bf16.msra.mxu0 %v1293
        %1459 = vmatprep.subr.bf16.mxu0 %v1300
        %1460 = vmatpush1.bf16.msra.mxu0 %v1299
        %1461 = vmatprep.subr.bf16.mxu0 %v1306
        %1462 = vmatpush1.bf16.msra.mxu0 %v1305
        %1463 = vmatprep.subr.bf16.mxu0 %v1312
        %1464 = vmatpush1.bf16.msra.mxu0 %v1311
        %1465 = vmatprep.subr.bf16.mxu0 %v1318
        %1466 = vmatpush1.bf16.msra.mxu0 %v1317
        %1467 = vmatprep.subr.bf16.mxu0 %v1324
        %1468 = vmatpush1.bf16.msra.mxu0 %v1323
        %1469 = vmatprep.subr.bf16.mxu0 %v1330
        %1470 = vmatpush1.bf16.msra.mxu0 %v1329
        %1471 = vmatprep.subr.bf16.mxu0 %v1336
        %1472 = vmatpush1.bf16.msra.mxu0 %v1335
        %1473 = vmatprep.subr.bf16.mxu0 %v1342
        %1474 = vmatpush1.bf16.msra.mxu0 %v1341
        %1475 = vmatprep.mubr.bf16.mxu0 %v863
        %1476 = vmatmul.mubr.bf16.gmra.mrb[0].mxu0 %v862
        %v1477 = vpop.f32.mrb[0].mxu0
        %v1478 = vadd.f32 0.0, %v1477
        %v1479 = vpop.f32.mrb[0].mxu0
        %v1480 = vadd.f32 0.0, %v1479
        %v1481 = vpop.f32.mrb[0].mxu0
        %v1482 = vadd.f32 0.0, %v1481
        %v1483 = vpop.f32.mrb[0].mxu0
        %v1484 = vadd.f32 0.0, %v1483
        %1485 = vdwg.mxu0
        %1486 = vmatprep.subr.bf16.mxu0 %v1254
        %1487 = vmatpush1.bf16.msra.mxu0 %v1253
        %1488 = vmatprep.subr.bf16.mxu0 %v1260
        %1489 = vmatpush1.bf16.msra.mxu0 %v1259
        %1490 = vmatprep.subr.bf16.mxu0 %v1266
        %1491 = vmatpush1.bf16.msra.mxu0 %v1265
        %1492 = vmatprep.subr.bf16.mxu0 %v1272
        %1493 = vmatpush1.bf16.msra.mxu0 %v1271
        %1494 = vmatprep.subr.bf16.mxu0 %v1278
        %1495 = vmatpush1.bf16.msra.mxu0 %v1277
        %1496 = vmatprep.subr.bf16.mxu0 %v1284
        %1497 = vmatpush1.bf16.msra.mxu0 %v1283
        %1498 = vmatprep.subr.bf16.mxu0 %v1290
        %1499 = vmatpush1.bf16.msra.mxu0 %v1289
        %1500 = vmatprep.subr.bf16.mxu0 %v1296
        %1501 = vmatpush1.bf16.msra.mxu0 %v1295
        %1502 = vmatprep.subr.bf16.mxu0 %v1302
        %1503 = vmatpush1.bf16.msra.mxu0 %v1301
        %1504 = vmatprep.subr.bf16.mxu0 %v1308
        %1505 = vmatpush1.bf16.msra.mxu0 %v1307
        %1506 = vmatprep.subr.bf16.mxu0 %v1314
        %1507 = vmatpush1.bf16.msra.mxu0 %v1313
        %1508 = vmatprep.subr.bf16.mxu0 %v1320
        %1509 = vmatpush1.bf16.msra.mxu0 %v1319
        %1510 = vmatprep.subr.bf16.mxu0 %v1326
        %1511 = vmatpush1.bf16.msra.mxu0 %v1325
        %1512 = vmatprep.subr.bf16.mxu0 %v1332
        %1513 = vmatpush1.bf16.msra.mxu0 %v1331
        %1514 = vmatprep.subr.bf16.mxu0 %v1338
        %1515 = vmatpush1.bf16.msra.mxu0 %v1337
        %1516 = vmatprep.subr.bf16.mxu0 %v1344
        %1517 = vmatpush1.bf16.msra.mxu0 %v1343
        %1518 = vmatprep.mubr.bf16.mxu0 %v863
        %1519 = vmatmul.mubr.bf16.gmra.mrb[0].mxu0 %v862
        %v1520 = vpop.f32.mrb[0].mxu0
        %v1521 = vadd.f32 0.0, %v1520
        %v1522 = vpop.f32.mrb[0].mxu0
        %v1523 = vadd.f32 0.0, %v1522
        %v1524 = vpop.f32.mrb[0].mxu0
        %v1525 = vadd.f32 0.0, %v1524
        %v1526 = vpop.f32.mrb[0].mxu0
        %v1527 = vadd.f32 0.0, %v1526
        %1528 = vdwg.mxu0
        %1529 = vmatprep.subr.bf16.mxu0 %v1256
        %1530 = vmatpush1.bf16.msra.mxu0 %v1255
        %1531 = vmatprep.subr.bf16.mxu0 %v1262
        %1532 = vmatpush1.bf16.msra.mxu0 %v1261
        %1533 = vmatprep.subr.bf16.mxu0 %v1268
        %1534 = vmatpush1.bf16.msra.mxu0 %v1267
        %1535 = vmatprep.subr.bf16.mxu0 %v1274
        %1536 = vmatpush1.bf16.msra.mxu0 %v1273
        %1537 = vmatprep.subr.bf16.mxu0 %v1280
        %1538 = vmatpush1.bf16.msra.mxu0 %v1279
        %1539 = vmatprep.subr.bf16.mxu0 %v1286
        %1540 = vmatpush1.bf16.msra.mxu0 %v1285
        %1541 = vmatprep.subr.bf16.mxu0 %v1292
        %1542 = vmatpush1.bf16.msra.mxu0 %v1291
        %1543 = vmatprep.subr.bf16.mxu0 %v1298
        %1544 = vmatpush1.bf16.msra.mxu0 %v1297
        %1545 = vmatprep.subr.bf16.mxu0 %v1304
        %1546 = vmatpush1.bf16.msra.mxu0 %v1303
        %1547 = vmatprep.subr.bf16.mxu0 %v1310
        %1548 = vmatpush1.bf16.msra.mxu0 %v1309
        %1549 = vmatprep.subr.bf16.mxu0 %v1316
        %1550 = vmatpush1.bf16.msra.mxu0 %v1315
        %1551 = vmatprep.subr.bf16.mxu0 %v1322
        %1552 = vmatpush1.bf16.msra.mxu0 %v1321
        %1553 = vmatprep.subr.bf16.mxu0 %v1328
        %1554 = vmatpush1.bf16.msra.mxu0 %v1327
        %1555 = vmatprep.subr.bf16.mxu0 %v1334
        %1556 = vmatpush1.bf16.msra.mxu0 %v1333
        %1557 = vmatprep.subr.bf16.mxu0 %v1340
        %1558 = vmatpush1.bf16.msra.mxu0 %v1339
        %1559 = vmatprep.subr.bf16.mxu0 %v1346
        %1560 = vmatpush1.bf16.msra.mxu0 %v1345
        %1561 = vmatprep.mubr.bf16.mxu0 %v863
        %1562 = vmatmul.mubr.bf16.gmra.mrb[0].mxu0 %v862
        %v1563 = vpop.f32.mrb[0].mxu0
        %v1564 = vadd.f32 0.0, %v1563
        %v1565 = vpop.f32.mrb[0].mxu0
        %v1566 = vadd.f32 0.0, %v1565
        %v1567 = vpop.f32.mrb[0].mxu0
        %v1568 = vadd.f32 0.0, %v1567
        %v1569 = vpop.f32.mrb[0].mxu0
        %v1570 = vadd.f32 0.0, %v1569
        %1571 = vdwg.mxu0
        %v1572 = vmax.f32 %v1478, %v1480
        %1573 = vmax.xlane.f32.xlu0 %v1572
        %v1574 = vpop.xlane.xlu0 %1573
        %v1575 = vsel %vm797, %v1482, -inf
        %v1576 = vsel %vm797, %v1484, -inf
        %v1577 = vmax.f32 %v1575, %v1576
        %1578 = vmax.xlane.f32.xlu0 %v1577
        %v1579 = vpop.xlane.xlu0 %1578
        %v1580 = vsub.f32 %v1478, %v1574
        %v1581 = vsub.f32 %v1480, %v1574
        %v1582 = vsub.f32 %v1482, %v1579
        %v1583 = vsub.f32 %v1484, %v1579
        %v1584 = vmul.f32 %v1580, 1.442695
        %v1585 = vpow.pop %v1584
        %v1586 = vmul.f32 %v1581, 1.442695
        %v1587 = vpow.pop %v1586
        %v1588 = vmul.f32 %v1582, 1.442695
        %v1589 = vpow.pop %v1588
        %v1590 = vmul.f32 %v1583, 1.442695
        %v1591 = vpow.pop %v1590
        %1592 = vmatprep.subr.mxu0 %v726
        %1593 = vmatpush1.msra.mxu0 %v725
        %1594 = vmatprep.subr.mxu0 %v728
        %1595 = vmatpush1.msra.mxu0 %v727
        %1596 = vmatprep.subr.mxu0 %v730
        %1597 = vmatpush1.msra.mxu0 %v729
        %1598 = vmatprep.subr.mxu0 %v732
        %1599 = vmatpush1.msra.mxu0 %v731
        %1600 = vmatprep.subr.mxu0 %v734
        %1601 = vmatpush1.msra.mxu0 %v733
        %1602 = vmatprep.subr.mxu0 %v736
        %1603 = vmatpush1.msra.mxu0 %v735
        %1604 = vmatprep.subr.mxu0 %v738
        %1605 = vmatpush1.msra.mxu0 %v737
        %1606 = vmatprep.subr.mxu0 %v740
        %1607 = vmatpush1.msra.mxu0 %v739
        %1608 = vmatprep.subr.mxu0 %v742
        %1609 = vmatpush1.msra.mxu0 %v741
        %1610 = vmatprep.subr.mxu0 %v744
        %1611 = vmatpush1.msra.mxu0 %v743
        %1612 = vmatprep.subr.mxu0 %v746
        %1613 = vmatpush1.msra.mxu0 %v745
        %1614 = vmatprep.subr.mxu0 %v748
        %1615 = vmatpush1.msra.mxu0 %v747
        %1616 = vmatprep.subr.mxu0 %v750
        %1617 = vmatpush1.msra.mxu0 %v749
        %1618 = vmatprep.subr.mxu0 %v752
        %1619 = vmatpush1.msra.mxu0 %v751
        %1620 = vmatprep.subr.mxu0 %v754
        %1621 = vmatpush1.msra.mxu0 %v753
        %1622 = vmatprep.subr.mxu0 %v756
        %1623 = vmatpush1.msra.mxu0 %v755
        %1624 = vmatprep.subr.mxu0 %v758
        %1625 = vmatpush1.msra.mxu0 %v757
        %1626 = vmatprep.subr.mxu0 %v760
        %1627 = vmatpush1.msra.mxu0 %v759
        %1628 = vmatprep.subr.mxu0 %v762
        %1629 = vmatpush1.msra.mxu0 %v761
        %1630 = vmatprep.subr.mxu0 %v764
        %1631 = vmatpush1.msra.mxu0 %v763
        %1632 = vmatprep.subr.mxu0 %v766
        %1633 = vmatpush1.msra.mxu0 %v765
        %1634 = vmatprep.subr.mxu0 %v768
        %1635 = vmatpush1.msra.mxu0 %v767
        %1636 = vmatprep.subr.mxu0 %v770
        %1637 = vmatpush1.msra.mxu0 %v769
        %1638 = vmatprep.subr.mxu0 %v772
        %1639 = vmatpush1.msra.mxu0 %v771
        %1640 = vmatprep.subr.mxu0 %v774
        %1641 = vmatpush1.msra.mxu0 %v773
        %1642 = vmatprep.subr.mxu0 %v776
        %1643 = vmatpush1.msra.mxu0 %v775
        %1644 = vmatprep.subr.mxu0 %v778
        %1645 = vmatpush1.msra.mxu0 %v777
        %1646 = vmatprep.subr.mxu0 %v780
        %1647 = vmatpush1.msra.mxu0 %v779
        %1648 = vmatprep.subr.mxu0 %v782
        %1649 = vmatpush1.msra.mxu0 %v781
        %1650 = vmatprep.subr.mxu0 %v784
        %1651 = vmatpush1.msra.mxu0 %v783
        %1652 = vmatprep.subr.mxu0 %v786
        %1653 = vmatpush1.msra.mxu0 %v785
        %1654 = vmatprep.subr.mxu0 %v788
        %1655 = vmatpush1.msra.mxu0 %v787
        %1656 = vmatprep.mubr.f32.mxu0 %v1587
        %1657 = vmatmul.mubr.f32.gmra.mrb[0].mxu0 %v1585
        %v1658 = vpop.f32.mrb[0].mxu0
        %v1659 = vadd.f32 0.0, %v1658
        %v1660 = vpop.f32.mrb[0].mxu0
        %v1661 = vadd.f32 0.0, %v1660
        %1662 = vmatprep.mubr.f32.mxu0 %v1591
        %1663 = vmatmul.mubr.f32.gmra.mrb[0].mxu0 %v1589
        %v1664 = vpop.f32.mrb[0].mxu0
        %v1665 = vadd.f32 0.0, %v1664
        %v1666 = vpop.f32.mrb[0].mxu0
        %v1667 = vadd.f32 0.0, %v1666
        %1668 = vdwg.mxu0
        %v1669 = vrcp.pop %v1659
        %v1670 = vrcp.pop %v1661
        %v1671 = vrcp.pop %v1665
        %v1672 = vrcp.pop %v1667
        %v1673 = vmul.f32 %v1585, %v1669
        %v1674 = vmul.f32 %v1587, %v1670
        %v1675 = vmul.f32 %v1589, %v1671
        %v1676 = vmul.f32 %v1591, %v1672
        %v1677 = vmul.f32 %v1673, 0.17677669
        %v1678 = vmul.f32 %v1674, 0.17677669
        %v1679 = vmul.f32 %v1675, 0.17677669
        %v1680 = vmul.f32 %v1676, 0.17677669
        %v1681 = vsel %vm797, %v1525, -inf
        %v1682 = vmax.f32 %v1521, %v1681
        %v1683 = vrot.slane %v1682, 4
        %v1684 = vmax.f32 %v1682, %v1683
        %v1685 = vrot.slane %v1684, 2
        %v1686 = vmax.f32 %v1684, %v1685
        %v1687 = vrot.slane %v1686, 1
        %v1688 = vmax.f32 %v1686, %v1687
        %v1689 = vsel %vm797, %v1527, -inf
        %v1690 = vmax.f32 %v1523, %v1689
        %v1691 = vrot.slane %v1690, 4
        %v1692 = vmax.f32 %v1690, %v1691
        %v1693 = vrot.slane %v1692, 2
        %v1694 = vmax.f32 %v1692, %v1693
        %v1695 = vrot.slane %v1694, 1
        %v1696 = vmax.f32 %v1694, %v1695
        %v1697 = vsub.f32 %v1521, %v1688
        %v1698 = vsub.f32 %v1523, %v1696
        %v1699 = vsub.f32 %v1525, %v1688
        %v1700 = vsub.f32 %v1527, %v1696
        %v1701 = vmul.f32 %v1697, 1.442695
        %v1702 = vpow.pop %v1701
        %v1703 = vmul.f32 %v1698, 1.442695
        %v1704 = vpow.pop %v1703
        %v1705 = vmul.f32 %v1699, 1.442695
        %v1706 = vpow.pop %v1705
        %v1707 = vmul.f32 %v1700, 1.442695
        %v1708 = vpow.pop %v1707
        %v1709 = vsel %vm797, %v1706, 0.0
        %v1710 = vadd.f32 %v1702, %v1709
        %v1711 = vrot.slane %v1710, 4
        %v1712 = vadd.f32 %v1710, %v1711
        %v1713 = vrot.slane %v1712, 2
        %v1714 = vadd.f32 %v1712, %v1713
        %v1715 = vrot.slane %v1714, 1
        %v1716 = vadd.f32 %v1714, %v1715
        %v1717 = vsel %vm797, %v1708, 0.0
        %v1718 = vadd.f32 %v1704, %v1717
        %v1719 = vrot.slane %v1718, 4
        %v1720 = vadd.f32 %v1718, %v1719
        %v1721 = vrot.slane %v1720, 2
        %v1722 = vadd.f32 %v1720, %v1721
        %v1723 = vrot.slane %v1722, 1
        %v1724 = vadd.f32 %v1722, %v1723
        %v1725 = vrcp.pop %v1716
        %v1726 = vrcp.pop %v1724
        %v1727 = vmul.f32 %v1702, %v1725
        %v1728 = vmul.f32 %v1704, %v1726
        %v1729 = vmul.f32 %v1706, %v1725
        %v1730 = vmul.f32 %v1708, %v1726
        %1731 = vxpose.xlu0.b32.start [1/16] %v1727, 128
        %1732 = vxpose.xlu0.b32.cont [2/16] %v1729, 128
        %1733 = vxpose.xlu0.b32.cont [3/16] 0.0, 128
        %1734 = vxpose.xlu0.b32.cont [4/16] 0.0, 128
        %1735 = vxpose.xlu0.b32.cont [5/16] 0.0, 128
        %1736 = vxpose.xlu0.b32.cont [6/16] 0.0, 128
        %1737 = vxpose.xlu0.b32.cont [7/16] 0.0, 128
        %1738 = vxpose.xlu0.b32.cont [8/16] 0.0, 128
        %1739 = vxpose.xlu0.b32.cont [9/16] 0.0, 128
        %1740 = vxpose.xlu0.b32.cont [10/16] 0.0, 128
        %1741 = vxpose.xlu0.b32.cont [11/16] 0.0, 128
        %1742 = vxpose.xlu0.b32.cont [12/16] 0.0, 128
        %1743 = vxpose.xlu0.b32.cont [13/16] 0.0, 128
        %1744 = vxpose.xlu0.b32.cont [14/16] 0.0, 128
        %1745 = vxpose.xlu0.b32.cont [15/16] 0.0, 128
        %1746 = vxpose.xlu0.b32.end [16/16] 0.0, 128
        %v1747 = vpop.trf.xlu0
        %v1748 = vpop.trf.xlu0
        %v1749 = vpop.trf.xlu0
        %v1750 = vpop.trf.xlu0
        %v1751 = vpop.trf.xlu0
        %v1752 = vpop.trf.xlu0
        %v1753 = vpop.trf.xlu0
        %v1754 = vpop.trf.xlu0
        %v1755 = vpop.trf.xlu0
        %v1756 = vpop.trf.xlu0
        %v1757 = vpop.trf.xlu0
        %v1758 = vpop.trf.xlu0
        %v1759 = vpop.trf.xlu0
        %v1760 = vpop.trf.xlu0
        %v1761 = vpop.trf.xlu0
        %v1762 = vpop.trf.xlu0
        %1763 = vxpose.xlu0.b32.start [1/16] %v1728, 128
        %1764 = vxpose.xlu0.b32.cont [2/16] %v1730, 128
        %1765 = vxpose.xlu0.b32.cont [3/16] 0.0, 128
        %1766 = vxpose.xlu0.b32.cont [4/16] 0.0, 128
        %1767 = vxpose.xlu0.b32.cont [5/16] 0.0, 128
        %1768 = vxpose.xlu0.b32.cont [6/16] 0.0, 128
        %1769 = vxpose.xlu0.b32.cont [7/16] 0.0, 128
        %1770 = vxpose.xlu0.b32.cont [8/16] 0.0, 128
        %1771 = vxpose.xlu0.b32.cont [9/16] 0.0, 128
        %1772 = vxpose.xlu0.b32.cont [10/16] 0.0, 128
        %1773 = vxpose.xlu0.b32.cont [11/16] 0.0, 128
        %1774 = vxpose.xlu0.b32.cont [12/16] 0.0, 128
        %1775 = vxpose.xlu0.b32.cont [13/16] 0.0, 128
        %1776 = vxpose.xlu0.b32.cont [14/16] 0.0, 128
        %1777 = vxpose.xlu0.b32.cont [15/16] 0.0, 128
        %1778 = vxpose.xlu0.b32.end [16/16] 0.0, 128
        %v1779 = vpop.trf.xlu0
        %v1780 = vpop.trf.xlu0
        %v1781 = vpop.trf.xlu0
        %v1782 = vpop.trf.xlu0
        %v1783 = vpop.trf.xlu0
        %v1784 = vpop.trf.xlu0
        %v1785 = vpop.trf.xlu0
        %v1786 = vpop.trf.xlu0
        %v1787 = vpop.trf.xlu0
        %v1788 = vpop.trf.xlu0
        %v1789 = vpop.trf.xlu0
        %v1790 = vpop.trf.xlu0
        %v1791 = vpop.trf.xlu0
        %v1792 = vpop.trf.xlu0
        %v1793 = vpop.trf.xlu0
        %v1794 = vpop.trf.xlu0
        %vm1795 = vcmask 97280
        %v1797 = vsel %vm1795, %v1747, 0
        %v1800 = vsel %vm1795, %v1748, 0
        %v1803 = vsel %vm1795, %v1749, 0
        %v1806 = vsel %vm1795, %v1750, 0
        %v1809 = vsel %vm1795, %v1751, 0
        %v1812 = vsel %vm1795, %v1752, 0
        %v1815 = vsel %vm1795, %v1753, 0
        %v1818 = vsel %vm1795, %v1754, 0
        %v1821 = vsel %vm1795, %v1755, 0
        %v1824 = vsel %vm1795, %v1756, 0
        %v1827 = vsel %vm1795, %v1757, 0
        %v1830 = vsel %vm1795, %v1758, 0
        %v1833 = vsel %vm1795, %v1759, 0
        %v1836 = vsel %vm1795, %v1760, 0
        %v1839 = vsel %vm1795, %v1761, 0
        %v1842 = vsel %vm1795, %v1762, 0
        %v1845 = vsel %vm1795, %v1779, 0
        %v1848 = vsel %vm1795, %v1780, 0
        %v1851 = vsel %vm1795, %v1781, 0
        %v1854 = vsel %vm1795, %v1782, 0
        %v1857 = vsel %vm1795, %v1783, 0
        %v1860 = vsel %vm1795, %v1784, 0
        %v1863 = vsel %vm1795, %v1785, 0
        %v1866 = vsel %vm1795, %v1786, 0
        %v1869 = vsel %vm1795, %v1787, 0
        %v1872 = vsel %vm1795, %v1788, 0
        %v1875 = vsel %vm1795, %v1789, 0
        %v1878 = vsel %vm1795, %v1790, 0
        %v1881 = vsel %vm1795, %v1791, 0
        %v1884 = vsel %vm1795, %v1792, 0
        %v1887 = vsel %vm1795, %v1793, 0
        %v1890 = vsel %vm1795, %v1794, 0
        %v1893 = vsel %vm797, %v1568, 0
        %v1896 = vsel %vm797, %v1570, 0
        %1898 = vmatprep.subr.mxu0 %v1566
        %1899 = vmatpush1.msra.mxu0 %v1564
        %1900 = vmatprep.subr.mxu0 %v1896
        %1901 = vmatpush1.msra.mxu0 %v1893
        %1902 = vmatprep.subr.mxu0 0.0
        %1903 = vmatpush1.msra.mxu0 0.0
        %1904 = vmatprep.subr.mxu0 0.0
        %1905 = vmatpush1.msra.mxu0 0.0
        %1906 = vmatprep.subr.mxu0 0.0
        %1907 = vmatpush1.msra.mxu0 0.0
        %1908 = vmatprep.subr.mxu0 0.0
        %1909 = vmatpush1.msra.mxu0 0.0
        %1910 = vmatprep.subr.mxu0 0.0
        %1911 = vmatpush1.msra.mxu0 0.0
        %1912 = vmatprep.subr.mxu0 0.0
        %1913 = vmatpush1.msra.mxu0 0.0
        %1914 = vmatprep.subr.mxu0 0.0
        %1915 = vmatpush1.msra.mxu0 0.0
        %1916 = vmatprep.subr.mxu0 0.0
        %1917 = vmatpush1.msra.mxu0 0.0
        %1918 = vmatprep.subr.mxu0 0.0
        %1919 = vmatpush1.msra.mxu0 0.0
        %1920 = vmatprep.subr.mxu0 0.0
        %1921 = vmatpush1.msra.mxu0 0.0
        %1922 = vmatprep.subr.mxu0 0.0
        %1923 = vmatpush1.msra.mxu0 0.0
        %1924 = vmatprep.subr.mxu0 0.0
        %1925 = vmatpush1.msra.mxu0 0.0
        %1926 = vmatprep.subr.mxu0 0.0
        %1927 = vmatpush1.msra.mxu0 0.0
        %1928 = vmatprep.subr.mxu0 0.0
        %1929 = vmatpush1.msra.mxu0 0.0
        %1930 = vmatprep.subr.mxu0 0.0
        %1931 = vmatpush1.msra.mxu0 0.0
        %1932 = vmatprep.subr.mxu0 0.0
        %1933 = vmatpush1.msra.mxu0 0.0
        %1934 = vmatprep.subr.mxu0 0.0
        %1935 = vmatpush1.msra.mxu0 0.0
        %1936 = vmatprep.subr.mxu0 0.0
        %1937 = vmatpush1.msra.mxu0 0.0
        %1938 = vmatprep.subr.mxu0 0.0
        %1939 = vmatpush1.msra.mxu0 0.0
        %1940 = vmatprep.subr.mxu0 0.0
        %1941 = vmatpush1.msra.mxu0 0.0
        %1942 = vmatprep.subr.mxu0 0.0
        %1943 = vmatpush1.msra.mxu0 0.0
        %1944 = vmatprep.subr.mxu0 0.0
        %1945 = vmatpush1.msra.mxu0 0.0
        %1946 = vmatprep.subr.mxu0 0.0
        %1947 = vmatpush1.msra.mxu0 0.0
        %1948 = vmatprep.subr.mxu0 0.0
        %1949 = vmatpush1.msra.mxu0 0.0
        %1950 = vmatprep.subr.mxu0 0.0
        %1951 = vmatpush1.msra.mxu0 0.0
        %1952 = vmatprep.subr.mxu0 0.0
        %1953 = vmatpush1.msra.mxu0 0.0
        %1954 = vmatprep.subr.mxu0 0.0
        %1955 = vmatpush1.msra.mxu0 0.0
        %1956 = vmatprep.subr.mxu0 0.0
        %1957 = vmatpush1.msra.mxu0 0.0
        %1958 = vmatprep.subr.mxu0 0.0
        %1959 = vmatpush1.msra.mxu0 0.0
        %1960 = vmatprep.subr.mxu0 0.0
        %1961 = vmatpush1.msra.mxu0 0.0
        %1962 = vmatprep.mubr.f32.mxu0 0.0
        %1963 = vmatmul.mubr.f32.gmra.mrb[0].mxu0 %v1797
        %v1964 = vpop.f32.mrb[0].mxu0
        %v1965 = vadd.f32 0.0, %v1964
        %v1966 = vpop.f32.mrb[0].mxu0
        %v1967 = vadd.f32 0.0, %v1966
        %1968 = vmatprep.mubr.f32.mxu0 0.0
        %1969 = vmatmul.mubr.f32.gmra.mrb[0].mxu0 %v1800
        %v1970 = vpop.f32.mrb[0].mxu0
        %v1971 = vadd.f32 0.0, %v1970
        %v1972 = vpop.f32.mrb[0].mxu0
        %v1973 = vadd.f32 0.0, %v1972
        %1974 = vmatprep.mubr.f32.mxu0 0.0
        %1975 = vmatmul.mubr.f32.gmra.mrb[0].mxu0 %v1803
        %v1976 = vpop.f32.mrb[0].mxu0
        %v1977 = vadd.f32 0.0, %v1976
        %v1978 = vpop.f32.mrb[0].mxu0
        %v1979 = vadd.f32 0.0, %v1978
        %1980 = vmatprep.mubr.f32.mxu0 0.0
        %1981 = vmatmul.mubr.f32.gmra.mrb[0].mxu0 %v1806
        %v1982 = vpop.f32.mrb[0].mxu0
        %v1983 = vadd.f32 0.0, %v1982
        %v1984 = vpop.f32.mrb[0].mxu0
        %v1985 = vadd.f32 0.0, %v1984
        %1986 = vmatprep.mubr.f32.mxu0 0.0
        %1987 = vmatmul.mubr.f32.gmra.mrb[0].mxu0 %v1809
        %v1988 = vpop.f32.mrb[0].mxu0
        %v1989 = vadd.f32 0.0, %v1988
        %v1990 = vpop.f32.mrb[0].mxu0
        %v1991 = vadd.f32 0.0, %v1990
        %1992 = vmatprep.mubr.f32.mxu0 0.0
        %1993 = vmatmul.mubr.f32.gmra.mrb[0].mxu0 %v1812
        %v1994 = vpop.f32.mrb[0].mxu0
        %v1995 = vadd.f32 0.0, %v1994
        %v1996 = vpop.f32.mrb[0].mxu0
        %v1997 = vadd.f32 0.0, %v1996
        %1998 = vmatprep.mubr.f32.mxu0 0.0
        %1999 = vmatmul.mubr.f32.gmra.mrb[0].mxu0 %v1815
        %v2000 = vpop.f32.mrb[0].mxu0
        %v2001 = vadd.f32 0.0, %v2000
        %v2002 = vpop.f32.mrb[0].mxu0
        %v2003 = vadd.f32 0.0, %v2002
        %2004 = vmatprep.mubr.f32.mxu0 0.0
        %2005 = vmatmul.mubr.f32.gmra.mrb[0].mxu0 %v1818
        %v2006 = vpop.f32.mrb[0].mxu0
        %v2007 = vadd.f32 0.0, %v2006
        %v2008 = vpop.f32.mrb[0].mxu0
        %v2009 = vadd.f32 0.0, %v2008
        %2010 = vmatprep.mubr.f32.mxu0 0.0
        %2011 = vmatmul.mubr.f32.gmra.mrb[0].mxu0 %v1821
        %v2012 = vpop.f32.mrb[0].mxu0
        %v2013 = vadd.f32 0.0, %v2012
        %v2014 = vpop.f32.mrb[0].mxu0
        %v2015 = vadd.f32 0.0, %v2014
        %2016 = vmatprep.mubr.f32.mxu0 0.0
        %2017 = vmatmul.mubr.f32.gmra.mrb[0].mxu0 %v1824
        %v2018 = vpop.f32.mrb[0].mxu0
        %v2019 = vadd.f32 0.0, %v2018
        %v2020 = vpop.f32.mrb[0].mxu0
        %v2021 = vadd.f32 0.0, %v2020
        %2022 = vmatprep.mubr.f32.mxu0 0.0
        %2023 = vmatmul.mubr.f32.gmra.mrb[0].mxu0 %v1827
        %v2024 = vpop.f32.mrb[0].mxu0
        %v2025 = vadd.f32 0.0, %v2024
        %v2026 = vpop.f32.mrb[0].mxu0
        %v2027 = vadd.f32 0.0, %v2026
        %2028 = vmatprep.mubr.f32.mxu0 0.0
        %2029 = vmatmul.mubr.f32.gmra.mrb[0].mxu0 %v1830
        %v2030 = vpop.f32.mrb[0].mxu0
        %v2031 = vadd.f32 0.0, %v2030
        %v2032 = vpop.f32.mrb[0].mxu0
        %v2033 = vadd.f32 0.0, %v2032
        %2034 = vmatprep.mubr.f32.mxu0 0.0
        %2035 = vmatmul.mubr.f32.gmra.mrb[0].mxu0 %v1833
        %v2036 = vpop.f32.mrb[0].mxu0
        %v2037 = vadd.f32 0.0, %v2036
        %v2038 = vpop.f32.mrb[0].mxu0
        %v2039 = vadd.f32 0.0, %v2038
        %2040 = vmatprep.mubr.f32.mxu0 0.0
        %2041 = vmatmul.mubr.f32.gmra.mrb[0].mxu0 %v1836
        %v2042 = vpop.f32.mrb[0].mxu0
        %v2043 = vadd.f32 0.0, %v2042
        %v2044 = vpop.f32.mrb[0].mxu0
        %v2045 = vadd.f32 0.0, %v2044
        %2046 = vmatprep.mubr.f32.mxu0 0.0
        %2047 = vmatmul.mubr.f32.gmra.mrb[0].mxu0 %v1839
        %v2048 = vpop.f32.mrb[0].mxu0
        %v2049 = vadd.f32 0.0, %v2048
        %v2050 = vpop.f32.mrb[0].mxu0
        %v2051 = vadd.f32 0.0, %v2050
        %2052 = vmatprep.mubr.f32.mxu0 0.0
        %2053 = vmatmul.mubr.f32.gmra.mrb[0].mxu0 %v1842
        %v2054 = vpop.f32.mrb[0].mxu0
        %v2055 = vadd.f32 0.0, %v2054
        %v2056 = vpop.f32.mrb[0].mxu0
        %v2057 = vadd.f32 0.0, %v2056
        %2058 = vmatprep.mubr.f32.mxu0 0.0
        %2059 = vmatmul.mubr.f32.gmra.mrb[0].mxu0 %v1845
        %v2060 = vpop.f32.mrb[0].mxu0
        %v2061 = vadd.f32 0.0, %v2060
        %v2062 = vpop.f32.mrb[0].mxu0
        %v2063 = vadd.f32 0.0, %v2062
        %2064 = vmatprep.mubr.f32.mxu0 0.0
        %2065 = vmatmul.mubr.f32.gmra.mrb[0].mxu0 %v1848
        %v2066 = vpop.f32.mrb[0].mxu0
        %v2067 = vadd.f32 0.0, %v2066
        %v2068 = vpop.f32.mrb[0].mxu0
        %v2069 = vadd.f32 0.0, %v2068
        %2070 = vmatprep.mubr.f32.mxu0 0.0
        %2071 = vmatmul.mubr.f32.gmra.mrb[0].mxu0 %v1851
        %v2072 = vpop.f32.mrb[0].mxu0
        %v2073 = vadd.f32 0.0, %v2072
        %v2074 = vpop.f32.mrb[0].mxu0
        %v2075 = vadd.f32 0.0, %v2074
        %2076 = vmatprep.mubr.f32.mxu0 0.0
        %2077 = vmatmul.mubr.f32.gmra.mrb[0].mxu0 %v1854
        %v2078 = vpop.f32.mrb[0].mxu0
        %v2079 = vadd.f32 0.0, %v2078
        %v2080 = vpop.f32.mrb[0].mxu0
        %v2081 = vadd.f32 0.0, %v2080
        %2082 = vmatprep.mubr.f32.mxu0 0.0
        %2083 = vmatmul.mubr.f32.gmra.mrb[0].mxu0 %v1857
        %v2084 = vpop.f32.mrb[0].mxu0
        %v2085 = vadd.f32 0.0, %v2084
        %v2086 = vpop.f32.mrb[0].mxu0
        %v2087 = vadd.f32 0.0, %v2086
        %2088 = vmatprep.mubr.f32.mxu0 0.0
        %2089 = vmatmul.mubr.f32.gmra.mrb[0].mxu0 %v1860
        %v2090 = vpop.f32.mrb[0].mxu0
        %v2091 = vadd.f32 0.0, %v2090
        %v2092 = vpop.f32.mrb[0].mxu0
        %v2093 = vadd.f32 0.0, %v2092
        %2094 = vmatprep.mubr.f32.mxu0 0.0
        %2095 = vmatmul.mubr.f32.gmra.mrb[0].mxu0 %v1863
        %v2096 = vpop.f32.mrb[0].mxu0
        %v2097 = vadd.f32 0.0, %v2096
        %v2098 = vpop.f32.mrb[0].mxu0
        %v2099 = vadd.f32 0.0, %v2098
        %2100 = vmatprep.mubr.f32.mxu0 0.0
        %2101 = vmatmul.mubr.f32.gmra.mrb[0].mxu0 %v1866
        %v2102 = vpop.f32.mrb[0].mxu0
        %v2103 = vadd.f32 0.0, %v2102
        %v2104 = vpop.f32.mrb[0].mxu0
        %v2105 = vadd.f32 0.0, %v2104
        %2106 = vmatprep.mubr.f32.mxu0 0.0
        %2107 = vmatmul.mubr.f32.gmra.mrb[0].mxu0 %v1869
        %v2108 = vpop.f32.mrb[0].mxu0
        %v2109 = vadd.f32 0.0, %v2108
        %v2110 = vpop.f32.mrb[0].mxu0
        %v2111 = vadd.f32 0.0, %v2110
        %2112 = vmatprep.mubr.f32.mxu0 0.0
        %2113 = vmatmul.mubr.f32.gmra.mrb[0].mxu0 %v1872
        %v2114 = vpop.f32.mrb[0].mxu0
        %v2115 = vadd.f32 0.0, %v2114
        %v2116 = vpop.f32.mrb[0].mxu0
        %v2117 = vadd.f32 0.0, %v2116
        %2118 = vmatprep.mubr.f32.mxu0 0.0
        %2119 = vmatmul.mubr.f32.gmra.mrb[0].mxu0 %v1875
        %v2120 = vpop.f32.mrb[0].mxu0
        %v2121 = vadd.f32 0.0, %v2120
        %v2122 = vpop.f32.mrb[0].mxu0
        %v2123 = vadd.f32 0.0, %v2122
        %2124 = vmatprep.mubr.f32.mxu0 0.0
        %2125 = vmatmul.mubr.f32.gmra.mrb[0].mxu0 %v1878
        %v2126 = vpop.f32.mrb[0].mxu0
        %v2127 = vadd.f32 0.0, %v2126
        %v2128 = vpop.f32.mrb[0].mxu0
        %v2129 = vadd.f32 0.0, %v2128
        %2130 = vmatprep.mubr.f32.mxu0 0.0
        %2131 = vmatmul.mubr.f32.gmra.mrb[0].mxu0 %v1881
        %v2132 = vpop.f32.mrb[0].mxu0
        %v2133 = vadd.f32 0.0, %v2132
        %v2134 = vpop.f32.mrb[0].mxu0
        %v2135 = vadd.f32 0.0, %v2134
        %2136 = vmatprep.mubr.f32.mxu0 0.0
        %2137 = vmatmul.mubr.f32.gmra.mrb[0].mxu0 %v1884
        %v2138 = vpop.f32.mrb[0].mxu0
        %v2139 = vadd.f32 0.0, %v2138
        %v2140 = vpop.f32.mrb[0].mxu0
        %v2141 = vadd.f32 0.0, %v2140
        %2142 = vmatprep.mubr.f32.mxu0 0.0
        %2143 = vmatmul.mubr.f32.gmra.mrb[0].mxu0 %v1887
        %v2144 = vpop.f32.mrb[0].mxu0
        %v2145 = vadd.f32 0.0, %v2144
        %v2146 = vpop.f32.mrb[0].mxu0
        %v2147 = vadd.f32 0.0, %v2146
        %2148 = vmatprep.mubr.f32.mxu0 0.0
        %2149 = vmatmul.mubr.f32.gmra.mrb[0].mxu0 %v1890
        %v2150 = vpop.f32.mrb[0].mxu0
        %v2151 = vadd.f32 0.0, %v2150
        %v2152 = vpop.f32.mrb[0].mxu0
        %v2153 = vadd.f32 0.0, %v2152
        %2154 = vdwg.mxu0
        %v2155 = vmul.f32 %v1965, %v725
        %v2156 = vmul.f32 %v1967, %v726
        %v2157 = vmul.f32 %v1971, %v727
        %v2158 = vmul.f32 %v1973, %v728
        %v2159 = vmul.f32 %v1977, %v729
        %v2160 = vmul.f32 %v1979, %v730
        %v2161 = vmul.f32 %v1983, %v731
        %v2162 = vmul.f32 %v1985, %v732
        %v2163 = vmul.f32 %v1989, %v733
        %v2164 = vmul.f32 %v1991, %v734
        %v2165 = vmul.f32 %v1995, %v735
        %v2166 = vmul.f32 %v1997, %v736
        %v2167 = vmul.f32 %v2001, %v737
        %v2168 = vmul.f32 %v2003, %v738
        %v2169 = vmul.f32 %v2007, %v739
        %v2170 = vmul.f32 %v2009, %v740
        %v2171 = vmul.f32 %v2013, %v741
        %v2172 = vmul.f32 %v2015, %v742
        %v2173 = vmul.f32 %v2019, %v743
        %v2174 = vmul.f32 %v2021, %v744
        %v2175 = vmul.f32 %v2025, %v745
        %v2176 = vmul.f32 %v2027, %v746
        %v2177 = vmul.f32 %v2031, %v747
        %v2178 = vmul.f32 %v2033, %v748
        %v2179 = vmul.f32 %v2037, %v749
        %v2180 = vmul.f32 %v2039, %v750
        %v2181 = vmul.f32 %v2043, %v751
        %v2182 = vmul.f32 %v2045, %v752
        %v2183 = vmul.f32 %v2049, %v753
        %v2184 = vmul.f32 %v2051, %v754
        %v2185 = vmul.f32 %v2055, %v755
        %v2186 = vmul.f32 %v2057, %v756
        %v2187 = vmul.f32 %v2061, %v757
        %v2188 = vmul.f32 %v2063, %v758
        %v2189 = vmul.f32 %v2067, %v759
        %v2190 = vmul.f32 %v2069, %v760
        %v2191 = vmul.f32 %v2073, %v761
        %v2192 = vmul.f32 %v2075, %v762
        %v2193 = vmul.f32 %v2079, %v763
        %v2194 = vmul.f32 %v2081, %v764
        %v2195 = vmul.f32 %v2085, %v765
        %v2196 = vmul.f32 %v2087, %v766
        %v2197 = vmul.f32 %v2091, %v767
        %v2198 = vmul.f32 %v2093, %v768
        %v2199 = vmul.f32 %v2097, %v769
        %v2200 = vmul.f32 %v2099, %v770
        %v2201 = vmul.f32 %v2103, %v771
        %v2202 = vmul.f32 %v2105, %v772
        %v2203 = vmul.f32 %v2109, %v773
        %v2204 = vmul.f32 %v2111, %v774
        %v2205 = vmul.f32 %v2115, %v775
        %v2206 = vmul.f32 %v2117, %v776
        %v2207 = vmul.f32 %v2121, %v777
        %v2208 = vmul.f32 %v2123, %v778
        %v2209 = vmul.f32 %v2127, %v779
        %v2210 = vmul.f32 %v2129, %v780
        %v2211 = vmul.f32 %v2133, %v781
        %v2212 = vmul.f32 %v2135, %v782
        %v2213 = vmul.f32 %v2139, %v783
        %v2214 = vmul.f32 %v2141, %v784
        %v2215 = vmul.f32 %v2145, %v785
        %v2216 = vmul.f32 %v2147, %v786
        %v2217 = vmul.f32 %v2151, %v787
        %v2218 = vmul.f32 %v2153, %v788
        %2219 = vmatprep.subr.mxu0 %v2156
        %2220 = vmatpush1.msra.mxu0 %v2155
        %2221 = vmatprep.subr.mxu0 %v2158
        %2222 = vmatpush1.msra.mxu0 %v2157
        %2223 = vmatprep.subr.mxu0 %v2160
        %2224 = vmatpush1.msra.mxu0 %v2159
        %2225 = vmatprep.subr.mxu0 %v2162
        %2226 = vmatpush1.msra.mxu0 %v2161
        %2227 = vmatprep.subr.mxu0 %v2164
        %2228 = vmatpush1.msra.mxu0 %v2163
        %2229 = vmatprep.subr.mxu0 %v2166
        %2230 = vmatpush1.msra.mxu0 %v2165
        %2231 = vmatprep.subr.mxu0 %v2168
        %2232 = vmatpush1.msra.mxu0 %v2167
        %2233 = vmatprep.subr.mxu0 %v2170
        %2234 = vmatpush1.msra.mxu0 %v2169
        %2235 = vmatprep.subr.mxu0 %v2172
        %2236 = vmatpush1.msra.mxu0 %v2171
        %2237 = vmatprep.subr.mxu0 %v2174
        %2238 = vmatpush1.msra.mxu0 %v2173
        %2239 = vmatprep.subr.mxu0 %v2176
        %2240 = vmatpush1.msra.mxu0 %v2175
        %2241 = vmatprep.subr.mxu0 %v2178
        %2242 = vmatpush1.msra.mxu0 %v2177
        %2243 = vmatprep.subr.mxu0 %v2180
        %2244 = vmatpush1.msra.mxu0 %v2179
        %2245 = vmatprep.subr.mxu0 %v2182
        %2246 = vmatpush1.msra.mxu0 %v2181
        %2247 = vmatprep.subr.mxu0 %v2184
        %2248 = vmatpush1.msra.mxu0 %v2183
        %2249 = vmatprep.subr.mxu0 %v2186
        %2250 = vmatpush1.msra.mxu0 %v2185
        %2251 = vmatprep.subr.mxu0 %v2188
        %2252 = vmatpush1.msra.mxu0 %v2187
        %2253 = vmatprep.subr.mxu0 %v2190
        %2254 = vmatpush1.msra.mxu0 %v2189
        %2255 = vmatprep.subr.mxu0 %v2192
        %2256 = vmatpush1.msra.mxu0 %v2191
        %2257 = vmatprep.subr.mxu0 %v2194
        %2258 = vmatpush1.msra.mxu0 %v2193
        %2259 = vmatprep.subr.mxu0 %v2196
        %2260 = vmatpush1.msra.mxu0 %v2195
        %2261 = vmatprep.subr.mxu0 %v2198
        %2262 = vmatpush1.msra.mxu0 %v2197
        %2263 = vmatprep.subr.mxu0 %v2200
        %2264 = vmatpush1.msra.mxu0 %v2199
        %2265 = vmatprep.subr.mxu0 %v2202
        %2266 = vmatpush1.msra.mxu0 %v2201
        %2267 = vmatprep.subr.mxu0 %v2204
        %2268 = vmatpush1.msra.mxu0 %v2203
        %2269 = vmatprep.subr.mxu0 %v2206
        %2270 = vmatpush1.msra.mxu0 %v2205
        %2271 = vmatprep.subr.mxu0 %v2208
        %2272 = vmatpush1.msra.mxu0 %v2207
        %2273 = vmatprep.subr.mxu0 %v2210
        %2274 = vmatpush1.msra.mxu0 %v2209
        %2275 = vmatprep.subr.mxu0 %v2212
        %2276 = vmatpush1.msra.mxu0 %v2211
        %2277 = vmatprep.subr.mxu0 %v2214
        %2278 = vmatpush1.msra.mxu0 %v2213
        %2279 = vmatprep.subr.mxu0 %v2216
        %2280 = vmatpush1.msra.mxu0 %v2215
        %2281 = vmatprep.subr.mxu0 %v2218
        %2282 = vmatpush1.msra.mxu0 %v2217
        %2283 = vmatprep.mubr.f32.mxu0 %v1678
        %2284 = vmatmul.mubr.f32.gmra.mrb[0].mxu0 %v1677
        %v2285 = vpop.f32.mrb[0].mxu0
        %v2286 = vadd.f32 0.0, %v2285
        %v2287 = vpop.f32.mrb[0].mxu0
        %v2288 = vadd.f32 0.0, %v2287
        %2289 = vmatprep.mubr.f32.mxu0 %v1680
        %2290 = vmatmul.mubr.f32.gmra.mrb[0].mxu0 %v1679
        %v2291 = vpop.f32.mrb[0].mxu0
        %v2292 = vadd.f32 0.0, %v2291
        %v2293 = vpop.f32.mrb[0].mxu0
        %v2294 = vadd.f32 0.0, %v2293
        %2295 = vdwg.mxu0
        %v2296 = vpack.c.bf16 %v2292, %v2286
        %v2297 = vpack.c.bf16 %v2294, %v2288
        %s2298 = smul.u32 %s39, 64
        %s2299 = smul.addr %s2298, 4
        %s2300 = scalar_lea.vmem [#allocation8], %s2299
        %v2301 = vld [vmem:[%s2300] sm:$0xff]
        %v2302 = vld [vmem:[%s2300 + $0x8] sm:$0xff]
        %v2303 = vld [vmem:[%s2300 + $0x10] sm:$0xff]
        %v2304 = vld [vmem:[%s2300 + $0x18] sm:$0xff]
        %v2305 = vld [vmem:[%s2300 + $0x20] sm:$0xff]
        %v2306 = vld [vmem:[%s2300 + $0x28] sm:$0xff]
        %v2307 = vld [vmem:[%s2300 + $0x30] sm:$0xff]
        %v2308 = vld [vmem:[%s2300 + $0x38] sm:$0xff]
        %v2309 = vld [vmem:[%s2300 + $0x40] sm:$0xff]
        %v2310 = vld [vmem:[%s2300 + $0x48] sm:$0xff]
        %v2311 = vld [vmem:[%s2300 + $0x50] sm:$0xff]
        %v2312 = vld [vmem:[%s2300 + $0x58] sm:$0xff]
        %v2313 = vld [vmem:[%s2300 + $0x60] sm:$0xff]
        %v2314 = vld [vmem:[%s2300 + $0x68] sm:$0xff]
        %v2315 = vld [vmem:[%s2300 + $0x70] sm:$0xff]
        %v2316 = vld [vmem:[%s2300 + $0x78] sm:$0xff]
        %v2317 = vld [vmem:[%s2300 + $0x80] sm:$0xff]
        %v2318 = vld [vmem:[%s2300 + $0x88] sm:$0xff]
        %v2319 = vld [vmem:[%s2300 + $0x90] sm:$0xff]
        %v2320 = vld [vmem:[%s2300 + $0x98] sm:$0xff]
        %v2321 = vld [vmem:[%s2300 + $0xa0] sm:$0xff]
        %v2322 = vld [vmem:[%s2300 + $0xa8] sm:$0xff]
        %v2323 = vld [vmem:[%s2300 + $0xb0] sm:$0xff]
        %v2324 = vld [vmem:[%s2300 + $0xb8] sm:$0xff]
        %v2325 = vld [vmem:[%s2300 + $0xc0] sm:$0xff]
        %v2326 = vld [vmem:[%s2300 + $0xc8] sm:$0xff]
        %v2327 = vld [vmem:[%s2300 + $0xd0] sm:$0xff]
        %v2328 = vld [vmem:[%s2300 + $0xd8] sm:$0xff]
        %v2329 = vld [vmem:[%s2300 + $0xe0] sm:$0xff]
        %v2330 = vld [vmem:[%s2300 + $0xe8] sm:$0xff]
        %v2331 = vld [vmem:[%s2300 + $0xf0] sm:$0xff]
        %v2332 = vld [vmem:[%s2300 + $0xf8] sm:$0xff]
        %s2333 = scalar_lea.vmem [#allocation10], %s789
        %v2334 = vld [vmem:[%s2333] sm:$0x3]
        %v2336 = vlaneseq
        %v2337 = vshrl.u32 %v2336, 7
        %v2338 = vsub.s32 0, %v2337
        %v2339 = vrot.slane %v2334, %v2338
        %v2340 = vlaneseq
        %v2341 = vshrl.u32 %v2340, 7
        %v2342 = vsub.s32 1, %v2341
        %v2343 = vrot.slane %v2334, %v2342
        %v2378 = vunpack.c.l.b16 %v2301
        %v2379 = vunpack.c.h.b16 %v2301
        %v2380 = vunpack.c.l.b16 %v2302
        %v2381 = vunpack.c.h.b16 %v2302
        %v2382 = vunpack.c.l.b16 %v2303
        %v2383 = vunpack.c.h.b16 %v2303
        %v2384 = vunpack.c.l.b16 %v2304
        %v2385 = vunpack.c.h.b16 %v2304
        %v2386 = vunpack.c.l.b16 %v2305
        %v2387 = vunpack.c.h.b16 %v2305
        %v2388 = vunpack.c.l.b16 %v2306
        %v2389 = vunpack.c.h.b16 %v2306
        %v2390 = vunpack.c.l.b16 %v2307
        %v2391 = vunpack.c.h.b16 %v2307
        %v2392 = vunpack.c.l.b16 %v2308
        %v2393 = vunpack.c.h.b16 %v2308
        %v2394 = vunpack.c.l.b16 %v2309
        %v2395 = vunpack.c.h.b16 %v2309
        %v2396 = vunpack.c.l.b16 %v2310
        %v2397 = vunpack.c.h.b16 %v2310
        %v2398 = vunpack.c.l.b16 %v2311
        %v2399 = vunpack.c.h.b16 %v2311
        %v2400 = vunpack.c.l.b16 %v2312
        %v2401 = vunpack.c.h.b16 %v2312
        %v2402 = vunpack.c.l.b16 %v2313
        %v2403 = vunpack.c.h.b16 %v2313
        %v2404 = vunpack.c.l.b16 %v2314
        %v2405 = vunpack.c.h.b16 %v2314
        %v2406 = vunpack.c.l.b16 %v2315
        %v2407 = vunpack.c.h.b16 %v2315
        %v2408 = vunpack.c.l.b16 %v2316
        %v2409 = vunpack.c.h.b16 %v2316
        %v2410 = vunpack.c.l.b16 %v2317
        %v2411 = vunpack.c.h.b16 %v2317
        %v2412 = vunpack.c.l.b16 %v2318
        %v2413 = vunpack.c.h.b16 %v2318
        %v2414 = vunpack.c.l.b16 %v2319
        %v2415 = vunpack.c.h.b16 %v2319
        %v2416 = vunpack.c.l.b16 %v2320
        %v2417 = vunpack.c.h.b16 %v2320
        %v2418 = vunpack.c.l.b16 %v2321
        %v2419 = vunpack.c.h.b16 %v2321
        %v2420 = vunpack.c.l.b16 %v2322
        %v2421 = vunpack.c.h.b16 %v2322
        %v2422 = vunpack.c.l.b16 %v2323
        %v2423 = vunpack.c.h.b16 %v2323
        %v2424 = vunpack.c.l.b16 %v2324
        %v2425 = vunpack.c.h.b16 %v2324
        %v2426 = vunpack.c.l.b16 %v2325
        %v2427 = vunpack.c.h.b16 %v2325
        %v2428 = vunpack.c.l.b16 %v2326
        %v2429 = vunpack.c.h.b16 %v2326
        %v2430 = vunpack.c.l.b16 %v2327
        %v2431 = vunpack.c.h.b16 %v2327
        %v2432 = vunpack.c.l.b16 %v2328
        %v2433 = vunpack.c.h.b16 %v2328
        %v2434 = vunpack.c.l.b16 %v2329
        %v2435 = vunpack.c.h.b16 %v2329
        %v2436 = vunpack.c.l.b16 %v2330
        %v2437 = vunpack.c.h.b16 %v2330
        %v2438 = vunpack.c.l.b16 %v2331
        %v2439 = vunpack.c.h.b16 %v2331
        %v2440 = vunpack.c.l.b16 %v2332
        %v2441 = vunpack.c.h.b16 %v2332
        %v2442 = vpack.c.b16 %v2380, %v2378
        %v2443 = vpack.c.b16 %v2381, %v2379
        %v2444 = vpack.c.b16 %v2384, %v2382
        %v2445 = vpack.c.b16 %v2385, %v2383
        %v2446 = vpack.c.b16 %v2388, %v2386
        %v2447 = vpack.c.b16 %v2389, %v2387
        %v2448 = vpack.c.b16 %v2392, %v2390
        %v2449 = vpack.c.b16 %v2393, %v2391
        %v2450 = vpack.c.b16 %v2396, %v2394
        %v2451 = vpack.c.b16 %v2397, %v2395
        %v2452 = vpack.c.b16 %v2400, %v2398
        %v2453 = vpack.c.b16 %v2401, %v2399
        %v2454 = vpack.c.b16 %v2404, %v2402
        %v2455 = vpack.c.b16 %v2405, %v2403
        %v2456 = vpack.c.b16 %v2408, %v2406
        %v2457 = vpack.c.b16 %v2409, %v2407
        %v2458 = vpack.c.b16 %v2412, %v2410
        %v2459 = vpack.c.b16 %v2413, %v2411
        %v2460 = vpack.c.b16 %v2416, %v2414
        %v2461 = vpack.c.b16 %v2417, %v2415
        %v2462 = vpack.c.b16 %v2420, %v2418
        %v2463 = vpack.c.b16 %v2421, %v2419
        %v2464 = vpack.c.b16 %v2424, %v2422
        %v2465 = vpack.c.b16 %v2425, %v2423
        %v2466 = vpack.c.b16 %v2428, %v2426
        %v2467 = vpack.c.b16 %v2429, %v2427
        %v2468 = vpack.c.b16 %v2432, %v2430
        %v2469 = vpack.c.b16 %v2433, %v2431
        %v2470 = vpack.c.b16 %v2436, %v2434
        %v2471 = vpack.c.b16 %v2437, %v2435
        %v2472 = vpack.c.b16 %v2440, %v2438
        %v2473 = vpack.c.b16 %v2441, %v2439
        %2506 = vmatprep.subr.bf16.mxu0 %v2443
        %2507 = vmatpush1.bf16.msra.mxu0 %v2442
        %2508 = vmatprep.subr.bf16.mxu0 %v2445
        %2509 = vmatpush1.bf16.msra.mxu0 %v2444
        %2510 = vmatprep.subr.bf16.mxu0 %v2447
        %2511 = vmatpush1.bf16.msra.mxu0 %v2446
        %2512 = vmatprep.subr.bf16.mxu0 %v2449
        %2513 = vmatpush1.bf16.msra.mxu0 %v2448
        %2514 = vmatprep.subr.bf16.mxu0 %v2451
        %2515 = vmatpush1.bf16.msra.mxu0 %v2450
        %2516 = vmatprep.subr.bf16.mxu0 %v2453
        %2517 = vmatpush1.bf16.msra.mxu0 %v2452
        %2518 = vmatprep.subr.bf16.mxu0 %v2455
        %2519 = vmatpush1.bf16.msra.mxu0 %v2454
        %2520 = vmatprep.subr.bf16.mxu0 %v2457
        %2521 = vmatpush1.bf16.msra.mxu0 %v2456
        %2522 = vmatprep.subr.bf16.mxu0 %v2459
        %2523 = vmatpush1.bf16.msra.mxu0 %v2458
        %2524 = vmatprep.subr.bf16.mxu0 %v2461
        %2525 = vmatpush1.bf16.msra.mxu0 %v2460
        %2526 = vmatprep.subr.bf16.mxu0 %v2463
        %2527 = vmatpush1.bf16.msra.mxu0 %v2462
        %2528 = vmatprep.subr.bf16.mxu0 %v2465
        %2529 = vmatpush1.bf16.msra.mxu0 %v2464
        %2530 = vmatprep.subr.bf16.mxu0 %v2467
        %2531 = vmatpush1.bf16.msra.mxu0 %v2466
        %2532 = vmatprep.subr.bf16.mxu0 %v2469
        %2533 = vmatpush1.bf16.msra.mxu0 %v2468
        %2534 = vmatprep.subr.bf16.mxu0 %v2471
        %2535 = vmatpush1.bf16.msra.mxu0 %v2470
        %2536 = vmatprep.subr.bf16.mxu0 %v2473
        %2537 = vmatpush1.bf16.msra.mxu0 %v2472
        %2538 = vmatprep.mubr.bf16.mxu0 %v2297
        %2539 = vmatmul.mubr.bf16.gmra.mrb[0].mxu0 %v2296
        %v2540 = vpop.f32.mrb[0].mxu0
        %v2541 = vadd.f32 %v2339, %v2540
        %v2542 = vpop.f32.mrb[0].mxu0
        %v2543 = vadd.f32 %v2343, %v2542
        %v2544 = vpop.f32.mrb[0].mxu0
        %v2545 = vadd.f32 %v2339, %v2544
        %v2546 = vpop.f32.mrb[0].mxu0
        %v2547 = vadd.f32 %v2343, %v2546
        %2548 = vdwg.mxu0
        %v2549 = vadd.f32 %v721, %v2541
        %v2550 = vadd.f32 %v722, %v2543
        %v2551 = vadd.f32 %v723, %v2545
        %v2552 = vadd.f32 %v724, %v2547
        %s2553 = scalar_lea.vmem [#allocation11], %s789
        %v2554 = vld [vmem:[%s2553] sm:$0x3]
        %s2555 = scalar_lea.vmem [#allocation13], %s789
        %v2556 = vld [vmem:[%s2555] sm:$0x3]
        %v2557 = vadd.f32 %v2549, %v2550
        %2558 = vadd.xlane.f32.xlu0 %v2557
        %v2559 = vpop.xlane.xlu0 %2558
        %v2560 = vsel %vm797, %v2551, 0.0
        %v2561 = vsel %vm797, %v2552, 0.0
        %v2562 = vadd.f32 %v2560, %v2561
        %2563 = vadd.xlane.f32.xlu0 %v2562
        %v2564 = vpop.xlane.xlu0 %2563
        %v2565 = vmul.f32 %v2559, %v803
        %v2566 = vmul.f32 %v2564, %v803
        %v2567 = vsub.f32 %v2549, %v2565
        %v2568 = vsub.f32 %v2550, %v2565
        %v2569 = vsub.f32 %v2551, %v2566
        %v2570 = vsub.f32 %v2552, %v2566
        %v2571 = vmul.f32 %v2567, %v2567
        %v2572 = vmul.f32 %v2568, %v2568
        %v2573 = vmul.f32 %v2569, %v2569
        %v2574 = vmul.f32 %v2570, %v2570
        %v2575 = vadd.f32 %v2571, %v2572
        %2576 = vadd.xlane.f32.xlu0 %v2575
        %v2577 = vpop.xlane.xlu0 %2576
        %v2578 = vsel %vm797, %v2573, 0.0
        %v2579 = vsel %vm797, %v2574, 0.0
        %v2580 = vadd.f32 %v2578, %v2579
        %2581 = vadd.xlane.f32.xlu0 %v2580
        %v2582 = vpop.xlane.xlu0 %2581
        %v2583 = vmul.f32 %v2577, %v803
        %v2584 = vmul.f32 %v2582, %v803
        %v2585 = vadd.f32 %v2583, 1e-05
        %v2586 = vadd.f32 %v2584, 1e-05
        %v2587 = vrsqrt.pop %v2585
        %v2588 = vrsqrt.pop %v2586
        %v2589 = vmul.f32 %v2567, %v2587
        %v2590 = vmul.f32 %v2568, %v2587
        %v2591 = vmul.f32 %v2569, %v2588
        %v2592 = vmul.f32 %v2570, %v2588
        %v2594 = vlaneseq
        %v2595 = vshrl.u32 %v2594, 7
        %v2596 = vsub.s32 0, %v2595
        %v2597 = vrot.slane %v2554, %v2596
        %v2598 = vlaneseq
        %v2599 = vshrl.u32 %v2598, 7
        %v2600 = vsub.s32 1, %v2599
        %v2601 = vrot.slane %v2554, %v2600
        %v2604 = vmul.f32 %v2589, %v2597
        %v2605 = vmul.f32 %v2590, %v2601
        %v2606 = vmul.f32 %v2591, %v2597
        %v2607 = vmul.f32 %v2592, %v2601
        %v2609 = vlaneseq
        %v2610 = vshrl.u32 %v2609, 7
        %v2611 = vsub.s32 0, %v2610
        %v2612 = vrot.slane %v2556, %v2611
        %v2613 = vlaneseq
        %v2614 = vshrl.u32 %v2613, 7
        %v2615 = vsub.s32 1, %v2614
        %v2616 = vrot.slane %v2556, %v2615
        %v2619 = vadd.f32 %v2604, %v2612
        %v2620 = vadd.f32 %v2605, %v2616
        %v2621 = vadd.f32 %v2606, %v2612
        %v2622 = vadd.f32 %v2607, %v2616
        %v2623 = vpack.c.bf16 %v2621, %v2619
        %v2624 = vpack.c.bf16 %v2622, %v2620
        %s2625 = smul.u32 %s39, 256
        %s2626 = smul.addr %s2625, 4
        %s2627 = scalar_lea.vmem [#allocation14], %s2626
        %v2628 = vld [vmem:[%s2627] sm:$0xff]
        %v2629 = vld [vmem:[%s2627 + $0x8] sm:$0xff]
        %v2630 = vld [vmem:[%s2627 + $0x10] sm:$0xff]
        %v2631 = vld [vmem:[%s2627 + $0x18] sm:$0xff]
        %v2632 = vld [vmem:[%s2627 + $0x20] sm:$0xff]
        %v2633 = vld [vmem:[%s2627 + $0x28] sm:$0xff]
        %v2634 = vld [vmem:[%s2627 + $0x30] sm:$0xff]
        %v2635 = vld [vmem:[%s2627 + $0x38] sm:$0xff]
        %v2636 = vld [vmem:[%s2627 + $0x40] sm:$0xff]
        %v2637 = vld [vmem:[%s2627 + $0x48] sm:$0xff]
        %v2638 = vld [vmem:[%s2627 + $0x50] sm:$0xff]
        %v2639 = vld [vmem:[%s2627 + $0x58] sm:$0xff]
        %v2640 = vld [vmem:[%s2627 + $0x60] sm:$0xff]
        %v2641 = vld [vmem:[%s2627 + $0x68] sm:$0xff]
        %v2642 = vld [vmem:[%s2627 + $0x70] sm:$0xff]
        %v2643 = vld [vmem:[%s2627 + $0x78] sm:$0xff]
        %v2644 = vld [vmem:[%s2627 + $0x80] sm:$0xff]
        %v2645 = vld [vmem:[%s2627 + $0x88] sm:$0xff]
        %v2646 = vld [vmem:[%s2627 + $0x90] sm:$0xff]
        %v2647 = vld [vmem:[%s2627 + $0x98] sm:$0xff]
        %v2648 = vld [vmem:[%s2627 + $0xa0] sm:$0xff]
        %v2649 = vld [vmem:[%s2627 + $0xa8] sm:$0xff]
        %v2650 = vld [vmem:[%s2627 + $0xb0] sm:$0xff]
        %v2651 = vld [vmem:[%s2627 + $0xb8] sm:$0xff]
        %v2652 = vld [vmem:[%s2627 + $0xc0] sm:$0xff]
        %v2653 = vld [vmem:[%s2627 + $0xc8] sm:$0xff]
        %v2654 = vld [vmem:[%s2627 + $0xd0] sm:$0xff]
        %v2655 = vld [vmem:[%s2627 + $0xd8] sm:$0xff]
        %v2656 = vld [vmem:[%s2627 + $0xe0] sm:$0xff]
        %v2657 = vld [vmem:[%s2627 + $0xe8] sm:$0xff]
        %v2658 = vld [vmem:[%s2627 + $0xf0] sm:$0xff]
        %v2659 = vld [vmem:[%s2627 + $0xf8] sm:$0xff]
        %v2660 = vld [vmem:[%s2627 + $0x100] sm:$0xff]
        %v2661 = vld [vmem:[%s2627 + $0x108] sm:$0xff]
        %v2662 = vld [vmem:[%s2627 + $0x110] sm:$0xff]
        %v2663 = vld [vmem:[%s2627 + $0x118] sm:$0xff]
        %v2664 = vld [vmem:[%s2627 + $0x120] sm:$0xff]
        %v2665 = vld [vmem:[%s2627 + $0x128] sm:$0xff]
        %v2666 = vld [vmem:[%s2627 + $0x130] sm:$0xff]
        %v2667 = vld [vmem:[%s2627 + $0x138] sm:$0xff]
        %v2668 = vld [vmem:[%s2627 + $0x140] sm:$0xff]
        %v2669 = vld [vmem:[%s2627 + $0x148] sm:$0xff]
        %v2670 = vld [vmem:[%s2627 + $0x150] sm:$0xff]
        %v2671 = vld [vmem:[%s2627 + $0x158] sm:$0xff]
        %v2672 = vld [vmem:[%s2627 + $0x160] sm:$0xff]
        %v2673 = vld [vmem:[%s2627 + $0x168] sm:$0xff]
        %v2674 = vld [vmem:[%s2627 + $0x170] sm:$0xff]
        %v2675 = vld [vmem:[%s2627 + $0x178] sm:$0xff]
        %v2676 = vld [vmem:[%s2627 + $0x180] sm:$0xff]
        %v2677 = vld [vmem:[%s2627 + $0x188] sm:$0xff]
        %v2678 = vld [vmem:[%s2627 + $0x190] sm:$0xff]
        %v2679 = vld [vmem:[%s2627 + $0x198] sm:$0xff]
        %v2680 = vld [vmem:[%s2627 + $0x1a0] sm:$0xff]
        %v2681 = vld [vmem:[%s2627 + $0x1a8] sm:$0xff]
        %v2682 = vld [vmem:[%s2627 + $0x1b0] sm:$0xff]
        %v2683 = vld [vmem:[%s2627 + $0x1b8] sm:$0xff]
        %v2684 = vld [vmem:[%s2627 + $0x1c0] sm:$0xff]
        %v2685 = vld [vmem:[%s2627 + $0x1c8] sm:$0xff]
        %v2686 = vld [vmem:[%s2627 + $0x1d0] sm:$0xff]
        %v2687 = vld [vmem:[%s2627 + $0x1d8] sm:$0xff]
        %v2688 = vld [vmem:[%s2627 + $0x1e0] sm:$0xff]
        %v2689 = vld [vmem:[%s2627 + $0x1e8] sm:$0xff]
        %v2690 = vld [vmem:[%s2627 + $0x1f0] sm:$0xff]
        %v2691 = vld [vmem:[%s2627 + $0x1f8] sm:$0xff]
        %v2692 = vld [vmem:[%s2627 + $0x200] sm:$0xff]
        %v2693 = vld [vmem:[%s2627 + $0x208] sm:$0xff]
        %v2694 = vld [vmem:[%s2627 + $0x210] sm:$0xff]
        %v2695 = vld [vmem:[%s2627 + $0x218] sm:$0xff]
        %v2696 = vld [vmem:[%s2627 + $0x220] sm:$0xff]
        %v2697 = vld [vmem:[%s2627 + $0x228] sm:$0xff]
        %v2698 = vld [vmem:[%s2627 + $0x230] sm:$0xff]
        %v2699 = vld [vmem:[%s2627 + $0x238] sm:$0xff]
        %v2700 = vld [vmem:[%s2627 + $0x240] sm:$0xff]
        %v2701 = vld [vmem:[%s2627 + $0x248] sm:$0xff]
        %v2702 = vld [vmem:[%s2627 + $0x250] sm:$0xff]
        %v2703 = vld [vmem:[%s2627 + $0x258] sm:$0xff]
        %v2704 = vld [vmem:[%s2627 + $0x260] sm:$0xff]
        %v2705 = vld [vmem:[%s2627 + $0x268] sm:$0xff]
        %v2706 = vld [vmem:[%s2627 + $0x270] sm:$0xff]
        %v2707 = vld [vmem:[%s2627 + $0x278] sm:$0xff]
        %v2708 = vld [vmem:[%s2627 + $0x280] sm:$0xff]
        %v2709 = vld [vmem:[%s2627 + $0x288] sm:$0xff]
        %v2710 = vld [vmem:[%s2627 + $0x290] sm:$0xff]
        %v2711 = vld [vmem:[%s2627 + $0x298] sm:$0xff]
        %v2712 = vld [vmem:[%s2627 + $0x2a0] sm:$0xff]
        %v2713 = vld [vmem:[%s2627 + $0x2a8] sm:$0xff]
        %v2714 = vld [vmem:[%s2627 + $0x2b0] sm:$0xff]
        %v2715 = vld [vmem:[%s2627 + $0x2b8] sm:$0xff]
        %v2716 = vld [vmem:[%s2627 + $0x2c0] sm:$0xff]
        %v2717 = vld [vmem:[%s2627 + $0x2c8] sm:$0xff]
        %v2718 = vld [vmem:[%s2627 + $0x2d0] sm:$0xff]
        %v2719 = vld [vmem:[%s2627 + $0x2d8] sm:$0xff]
        %v2720 = vld [vmem:[%s2627 + $0x2e0] sm:$0xff]
        %v2721 = vld [vmem:[%s2627 + $0x2e8] sm:$0xff]
        %v2722 = vld [vmem:[%s2627 + $0x2f0] sm:$0xff]
        %v2723 = vld [vmem:[%s2627 + $0x2f8] sm:$0xff]
        %v2724 = vld [vmem:[%s2627 + $0x300] sm:$0xff]
        %v2725 = vld [vmem:[%s2627 + $0x308] sm:$0xff]
        %v2726 = vld [vmem:[%s2627 + $0x310] sm:$0xff]
        %v2727 = vld [vmem:[%s2627 + $0x318] sm:$0xff]
        %v2728 = vld [vmem:[%s2627 + $0x320] sm:$0xff]
        %v2729 = vld [vmem:[%s2627 + $0x328] sm:$0xff]
        %v2730 = vld [vmem:[%s2627 + $0x330] sm:$0xff]
        %v2731 = vld [vmem:[%s2627 + $0x338] sm:$0xff]
        %v2732 = vld [vmem:[%s2627 + $0x340] sm:$0xff]
        %v2733 = vld [vmem:[%s2627 + $0x348] sm:$0xff]
        %v2734 = vld [vmem:[%s2627 + $0x350] sm:$0xff]
        %v2735 = vld [vmem:[%s2627 + $0x358] sm:$0xff]
        %v2736 = vld [vmem:[%s2627 + $0x360] sm:$0xff]
        %v2737 = vld [vmem:[%s2627 + $0x368] sm:$0xff]
        %v2738 = vld [vmem:[%s2627 + $0x370] sm:$0xff]
        %v2739 = vld [vmem:[%s2627 + $0x378] sm:$0xff]
        %v2740 = vld [vmem:[%s2627 + $0x380] sm:$0xff]
        %v2741 = vld [vmem:[%s2627 + $0x388] sm:$0xff]
        %v2742 = vld [vmem:[%s2627 + $0x390] sm:$0xff]
        %v2743 = vld [vmem:[%s2627 + $0x398] sm:$0xff]
        %v2744 = vld [vmem:[%s2627 + $0x3a0] sm:$0xff]
        %v2745 = vld [vmem:[%s2627 + $0x3a8] sm:$0xff]
        %v2746 = vld [vmem:[%s2627 + $0x3b0] sm:$0xff]
        %v2747 = vld [vmem:[%s2627 + $0x3b8] sm:$0xff]
        %v2748 = vld [vmem:[%s2627 + $0x3c0] sm:$0xff]
        %v2749 = vld [vmem:[%s2627 + $0x3c8] sm:$0xff]
        %v2750 = vld [vmem:[%s2627 + $0x3d0] sm:$0xff]
        %v2751 = vld [vmem:[%s2627 + $0x3d8] sm:$0xff]
        %v2752 = vld [vmem:[%s2627 + $0x3e0] sm:$0xff]
        %v2753 = vld [vmem:[%s2627 + $0x3e8] sm:$0xff]
        %v2754 = vld [vmem:[%s2627 + $0x3f0] sm:$0xff]
        %v2755 = vld [vmem:[%s2627 + $0x3f8] sm:$0xff]
        %s2756 = smul.u32 %s39, 8
        %s2757 = scalar_lea.vmem [#allocation16], %s2756
        %v2758 = vld [vmem:[%s2757] sm:$0xff]
        %v2760 = vlaneseq
        %v2761 = vshrl.u32 %v2760, 7
        %v2762 = vsub.s32 0, %v2761
        %v2763 = vrot.slane %v2758, %v2762
        %v2764 = vlaneseq
        %v2765 = vshrl.u32 %v2764, 7
        %v2766 = vsub.s32 1, %v2765
        %v2767 = vrot.slane %v2758, %v2766
        %v2768 = vlaneseq
        %v2769 = vshrl.u32 %v2768, 7
        %v2770 = vsub.s32 2, %v2769
        %v2771 = vrot.slane %v2758, %v2770
        %v2772 = vlaneseq
        %v2773 = vshrl.u32 %v2772, 7
        %v2774 = vsub.s32 3, %v2773
        %v2775 = vrot.slane %v2758, %v2774
        %v2776 = vlaneseq
        %v2777 = vshrl.u32 %v2776, 7
        %v2778 = vsub.s32 4, %v2777
        %v2779 = vrot.slane %v2758, %v2778
        %v2780 = vlaneseq
        %v2781 = vshrl.u32 %v2780, 7
        %v2782 = vsub.s32 5, %v2781
        %v2783 = vrot.slane %v2758, %v2782
        %v2784 = vlaneseq
        %v2785 = vshrl.u32 %v2784, 7
        %v2786 = vsub.s32 6, %v2785
        %v2787 = vrot.slane %v2758, %v2786
        %v2788 = vlaneseq
        %v2789 = vshrl.u32 %v2788, 7
        %v2790 = vsub.s32 7, %v2789
        %v2791 = vrot.slane %v2758, %v2790
        %v2928 = vunpack.c.l.b16 %v2628
        %v2929 = vunpack.c.h.b16 %v2628
        %v2930 = vunpack.c.l.b16 %v2629
        %v2931 = vunpack.c.h.b16 %v2629
        %v2932 = vunpack.c.l.b16 %v2630
        %v2933 = vunpack.c.h.b16 %v2630
        %v2934 = vunpack.c.l.b16 %v2631
        %v2935 = vunpack.c.h.b16 %v2631
        %v2936 = vunpack.c.l.b16 %v2632
        %v2937 = vunpack.c.h.b16 %v2632
        %v2938 = vunpack.c.l.b16 %v2633
        %v2939 = vunpack.c.h.b16 %v2633
        %v2940 = vunpack.c.l.b16 %v2634
        %v2941 = vunpack.c.h.b16 %v2634
        %v2942 = vunpack.c.l.b16 %v2635
        %v2943 = vunpack.c.h.b16 %v2635
        %v2944 = vunpack.c.l.b16 %v2636
        %v2945 = vunpack.c.h.b16 %v2636
        %v2946 = vunpack.c.l.b16 %v2637
        %v2947 = vunpack.c.h.b16 %v2637
        %v2948 = vunpack.c.l.b16 %v2638
        %v2949 = vunpack.c.h.b16 %v2638
        %v2950 = vunpack.c.l.b16 %v2639
        %v2951 = vunpack.c.h.b16 %v2639
        %v2952 = vunpack.c.l.b16 %v2640
        %v2953 = vunpack.c.h.b16 %v2640
        %v2954 = vunpack.c.l.b16 %v2641
        %v2955 = vunpack.c.h.b16 %v2641
        %v2956 = vunpack.c.l.b16 %v2642
        %v2957 = vunpack.c.h.b16 %v2642
        %v2958 = vunpack.c.l.b16 %v2643
        %v2959 = vunpack.c.h.b16 %v2643
        %v2960 = vunpack.c.l.b16 %v2644
        %v2961 = vunpack.c.h.b16 %v2644
        %v2962 = vunpack.c.l.b16 %v2645
        %v2963 = vunpack.c.h.b16 %v2645
        %v2964 = vunpack.c.l.b16 %v2646
        %v2965 = vunpack.c.h.b16 %v2646
        %v2966 = vunpack.c.l.b16 %v2647
        %v2967 = vunpack.c.h.b16 %v2647
        %v2968 = vunpack.c.l.b16 %v2648
        %v2969 = vunpack.c.h.b16 %v2648
        %v2970 = vunpack.c.l.b16 %v2649
        %v2971 = vunpack.c.h.b16 %v2649
        %v2972 = vunpack.c.l.b16 %v2650
        %v2973 = vunpack.c.h.b16 %v2650
        %v2974 = vunpack.c.l.b16 %v2651
        %v2975 = vunpack.c.h.b16 %v2651
        %v2976 = vunpack.c.l.b16 %v2652
        %v2977 = vunpack.c.h.b16 %v2652
        %v2978 = vunpack.c.l.b16 %v2653
        %v2979 = vunpack.c.h.b16 %v2653
        %v2980 = vunpack.c.l.b16 %v2654
        %v2981 = vunpack.c.h.b16 %v2654
        %v2982 = vunpack.c.l.b16 %v2655
        %v2983 = vunpack.c.h.b16 %v2655
        %v2984 = vunpack.c.l.b16 %v2656
        %v2985 = vunpack.c.h.b16 %v2656
        %v2986 = vunpack.c.l.b16 %v2657
        %v2987 = vunpack.c.h.b16 %v2657
        %v2988 = vunpack.c.l.b16 %v2658
        %v2989 = vunpack.c.h.b16 %v2658
        %v2990 = vunpack.c.l.b16 %v2659
        %v2991 = vunpack.c.h.b16 %v2659
        %v2992 = vunpack.c.l.b16 %v2660
        %v2993 = vunpack.c.h.b16 %v2660
        %v2994 = vunpack.c.l.b16 %v2661
        %v2995 = vunpack.c.h.b16 %v2661
        %v2996 = vunpack.c.l.b16 %v2662
        %v2997 = vunpack.c.h.b16 %v2662
        %v2998 = vunpack.c.l.b16 %v2663
        %v2999 = vunpack.c.h.b16 %v2663
        %v3000 = vunpack.c.l.b16 %v2664
        %v3001 = vunpack.c.h.b16 %v2664
        %v3002 = vunpack.c.l.b16 %v2665
        %v3003 = vunpack.c.h.b16 %v2665
        %v3004 = vunpack.c.l.b16 %v2666
        %v3005 = vunpack.c.h.b16 %v2666
        %v3006 = vunpack.c.l.b16 %v2667
        %v3007 = vunpack.c.h.b16 %v2667
        %v3008 = vunpack.c.l.b16 %v2668
        %v3009 = vunpack.c.h.b16 %v2668
        %v3010 = vunpack.c.l.b16 %v2669
        %v3011 = vunpack.c.h.b16 %v2669
        %v3012 = vunpack.c.l.b16 %v2670
        %v3013 = vunpack.c.h.b16 %v2670
        %v3014 = vunpack.c.l.b16 %v2671
        %v3015 = vunpack.c.h.b16 %v2671
        %v3016 = vunpack.c.l.b16 %v2672
        %v3017 = vunpack.c.h.b16 %v2672
        %v3018 = vunpack.c.l.b16 %v2673
        %v3019 = vunpack.c.h.b16 %v2673
        %v3020 = vunpack.c.l.b16 %v2674
        %v3021 = vunpack.c.h.b16 %v2674
        %v3022 = vunpack.c.l.b16 %v2675
        %v3023 = vunpack.c.h.b16 %v2675
        %v3024 = vunpack.c.l.b16 %v2676
        %v3025 = vunpack.c.h.b16 %v2676
        %v3026 = vunpack.c.l.b16 %v2677
        %v3027 = vunpack.c.h.b16 %v2677
        %v3028 = vunpack.c.l.b16 %v2678
        %v3029 = vunpack.c.h.b16 %v2678
        %v3030 = vunpack.c.l.b16 %v2679
        %v3031 = vunpack.c.h.b16 %v2679
        %v3032 = vunpack.c.l.b16 %v2680
        %v3033 = vunpack.c.h.b16 %v2680
        %v3034 = vunpack.c.l.b16 %v2681
        %v3035 = vunpack.c.h.b16 %v2681
        %v3036 = vunpack.c.l.b16 %v2682
        %v3037 = vunpack.c.h.b16 %v2682
        %v3038 = vunpack.c.l.b16 %v2683
        %v3039 = vunpack.c.h.b16 %v2683
        %v3040 = vunpack.c.l.b16 %v2684
        %v3041 = vunpack.c.h.b16 %v2684
        %v3042 = vunpack.c.l.b16 %v2685
        %v3043 = vunpack.c.h.b16 %v2685
        %v3044 = vunpack.c.l.b16 %v2686
        %v3045 = vunpack.c.h.b16 %v2686
        %v3046 = vunpack.c.l.b16 %v2687
        %v3047 = vunpack.c.h.b16 %v2687
        %v3048 = vunpack.c.l.b16 %v2688
        %v3049 = vunpack.c.h.b16 %v2688
        %v3050 = vunpack.c.l.b16 %v2689
        %v3051 = vunpack.c.h.b16 %v2689
        %v3052 = vunpack.c.l.b16 %v2690
        %v3053 = vunpack.c.h.b16 %v2690
        %v3054 = vunpack.c.l.b16 %v2691
        %v3055 = vunpack.c.h.b16 %v2691
        %v3056 = vunpack.c.l.b16 %v2692
        %v3057 = vunpack.c.h.b16 %v2692
        %v3058 = vunpack.c.l.b16 %v2693
        %v3059 = vunpack.c.h.b16 %v2693
        %v3060 = vunpack.c.l.b16 %v2694
        %v3061 = vunpack.c.h.b16 %v2694
        %v3062 = vunpack.c.l.b16 %v2695
        %v3063 = vunpack.c.h.b16 %v2695
        %v3064 = vunpack.c.l.b16 %v2696
        %v3065 = vunpack.c.h.b16 %v2696
        %v3066 = vunpack.c.l.b16 %v2697
        %v3067 = vunpack.c.h.b16 %v2697
        %v3068 = vunpack.c.l.b16 %v2698
        %v3069 = vunpack.c.h.b16 %v2698
        %v3070 = vunpack.c.l.b16 %v2699
        %v3071 = vunpack.c.h.b16 %v2699
        %v3072 = vunpack.c.l.b16 %v2700
        %v3073 = vunpack.c.h.b16 %v2700
        %v3074 = vunpack.c.l.b16 %v2701
        %v3075 = vunpack.c.h.b16 %v2701
        %v3076 = vunpack.c.l.b16 %v2702
        %v3077 = vunpack.c.h.b16 %v2702
        %v3078 = vunpack.c.l.b16 %v2703
        %v3079 = vunpack.c.h.b16 %v2703
        %v3080 = vunpack.c.l.b16 %v2704
        %v3081 = vunpack.c.h.b16 %v2704
        %v3082 = vunpack.c.l.b16 %v2705
        %v3083 = vunpack.c.h.b16 %v2705
        %v3084 = vunpack.c.l.b16 %v2706
        %v3085 = vunpack.c.h.b16 %v2706
        %v3086 = vunpack.c.l.b16 %v2707
        %v3087 = vunpack.c.h.b16 %v2707
        %v3088 = vunpack.c.l.b16 %v2708
        %v3089 = vunpack.c.h.b16 %v2708
        %v3090 = vunpack.c.l.b16 %v2709
        %v3091 = vunpack.c.h.b16 %v2709
        %v3092 = vunpack.c.l.b16 %v2710
        %v3093 = vunpack.c.h.b16 %v2710
        %v3094 = vunpack.c.l.b16 %v2711
        %v3095 = vunpack.c.h.b16 %v2711
        %v3096 = vunpack.c.l.b16 %v2712
        %v3097 = vunpack.c.h.b16 %v2712
        %v3098 = vunpack.c.l.b16 %v2713
        %v3099 = vunpack.c.h.b16 %v2713
        %v3100 = vunpack.c.l.b16 %v2714
        %v3101 = vunpack.c.h.b16 %v2714
        %v3102 = vunpack.c.l.b16 %v2715
        %v3103 = vunpack.c.h.b16 %v2715
        %v3104 = vunpack.c.l.b16 %v2716
        %v3105 = vunpack.c.h.b16 %v2716
        %v3106 = vunpack.c.l.b16 %v2717
        %v3107 = vunpack.c.h.b16 %v2717
        %v3108 = vunpack.c.l.b16 %v2718
        %v3109 = vunpack.c.h.b16 %v2718
        %v3110 = vunpack.c.l.b16 %v2719
        %v3111 = vunpack.c.h.b16 %v2719
        %v3112 = vunpack.c.l.b16 %v2720
        %v3113 = vunpack.c.h.b16 %v2720
        %v3114 = vunpack.c.l.b16 %v2721
        %v3115 = vunpack.c.h.b16 %v2721
        %v3116 = vunpack.c.l.b16 %v2722
        %v3117 = vunpack.c.h.b16 %v2722
        %v3118 = vunpack.c.l.b16 %v2723
        %v3119 = vunpack.c.h.b16 %v2723
        %v3120 = vunpack.c.l.b16 %v2724
        %v3121 = vunpack.c.h.b16 %v2724
        %v3122 = vunpack.c.l.b16 %v2725
        %v3123 = vunpack.c.h.b16 %v2725
        %v3124 = vunpack.c.l.b16 %v2726
        %v3125 = vunpack.c.h.b16 %v2726
        %v3126 = vunpack.c.l.b16 %v2727
        %v3127 = vunpack.c.h.b16 %v2727
        %v3128 = vunpack.c.l.b16 %v2728
        %v3129 = vunpack.c.h.b16 %v2728
        %v3130 = vunpack.c.l.b16 %v2729
        %v3131 = vunpack.c.h.b16 %v2729
        %v3132 = vunpack.c.l.b16 %v2730
        %v3133 = vunpack.c.h.b16 %v2730
        %v3134 = vunpack.c.l.b16 %v2731
        %v3135 = vunpack.c.h.b16 %v2731
        %v3136 = vunpack.c.l.b16 %v2732
        %v3137 = vunpack.c.h.b16 %v2732
        %v3138 = vunpack.c.l.b16 %v2733
        %v3139 = vunpack.c.h.b16 %v2733
        %v3140 = vunpack.c.l.b16 %v2734
        %v3141 = vunpack.c.h.b16 %v2734
        %v3142 = vunpack.c.l.b16 %v2735
        %v3143 = vunpack.c.h.b16 %v2735
        %v3144 = vunpack.c.l.b16 %v2736
        %v3145 = vunpack.c.h.b16 %v2736
        %v3146 = vunpack.c.l.b16 %v2737
        %v3147 = vunpack.c.h.b16 %v2737
        %v3148 = vunpack.c.l.b16 %v2738
        %v3149 = vunpack.c.h.b16 %v2738
        %v3150 = vunpack.c.l.b16 %v2739
        %v3151 = vunpack.c.h.b16 %v2739
        %v3152 = vunpack.c.l.b16 %v2740
        %v3153 = vunpack.c.h.b16 %v2740
        %v3154 = vunpack.c.l.b16 %v2741
        %v3155 = vunpack.c.h.b16 %v2741
        %v3156 = vunpack.c.l.b16 %v2742
        %v3157 = vunpack.c.h.b16 %v2742
        %v3158 = vunpack.c.l.b16 %v2743
        %v3159 = vunpack.c.h.b16 %v2743
        %v3160 = vunpack.c.l.b16 %v2744
        %v3161 = vunpack.c.h.b16 %v2744
        %v3162 = vunpack.c.l.b16 %v2745
        %v3163 = vunpack.c.h.b16 %v2745
        %v3164 = vunpack.c.l.b16 %v2746
        %v3165 = vunpack.c.h.b16 %v2746
        %v3166 = vunpack.c.l.b16 %v2747
        %v3167 = vunpack.c.h.b16 %v2747
        %v3168 = vunpack.c.l.b16 %v2748
        %v3169 = vunpack.c.h.b16 %v2748
        %v3170 = vunpack.c.l.b16 %v2749
        %v3171 = vunpack.c.h.b16 %v2749
        %v3172 = vunpack.c.l.b16 %v2750
        %v3173 = vunpack.c.h.b16 %v2750
        %v3174 = vunpack.c.l.b16 %v2751
        %v3175 = vunpack.c.h.b16 %v2751
        %v3176 = vunpack.c.l.b16 %v2752
        %v3177 = vunpack.c.h.b16 %v2752
        %v3178 = vunpack.c.l.b16 %v2753
        %v3179 = vunpack.c.h.b16 %v2753
        %v3180 = vunpack.c.l.b16 %v2754
        %v3181 = vunpack.c.h.b16 %v2754
        %v3182 = vunpack.c.l.b16 %v2755
        %v3183 = vunpack.c.h.b16 %v2755
        %v3184 = vpack.c.b16 %v2936, %v2928
        %v3185 = vpack.c.b16 %v2937, %v2929
        %v3186 = vpack.c.b16 %v2938, %v2930
        %v3187 = vpack.c.b16 %v2939, %v2931
        %v3188 = vpack.c.b16 %v2940, %v2932
        %v3189 = vpack.c.b16 %v2941, %v2933
        %v3190 = vpack.c.b16 %v2942, %v2934
        %v3191 = vpack.c.b16 %v2943, %v2935
        %v3192 = vpack.c.b16 %v2952, %v2944
        %v3193 = vpack.c.b16 %v2953, %v2945
        %v3194 = vpack.c.b16 %v2954, %v2946
        %v3195 = vpack.c.b16 %v2955, %v2947
        %v3196 = vpack.c.b16 %v2956, %v2948
        %v3197 = vpack.c.b16 %v2957, %v2949
        %v3198 = vpack.c.b16 %v2958, %v2950
        %v3199 = vpack.c.b16 %v2959, %v2951
        %v3200 = vpack.c.b16 %v2968, %v2960
        %v3201 = vpack.c.b16 %v2969, %v2961
        %v3202 = vpack.c.b16 %v2970, %v2962
        %v3203 = vpack.c.b16 %v2971, %v2963
        %v3204 = vpack.c.b16 %v2972, %v2964
        %v3205 = vpack.c.b16 %v2973, %v2965
        %v3206 = vpack.c.b16 %v2974, %v2966
        %v3207 = vpack.c.b16 %v2975, %v2967
        %v3208 = vpack.c.b16 %v2984, %v2976
        %v3209 = vpack.c.b16 %v2985, %v2977
        %v3210 = vpack.c.b16 %v2986, %v2978
        %v3211 = vpack.c.b16 %v2987, %v2979
        %v3212 = vpack.c.b16 %v2988, %v2980
        %v3213 = vpack.c.b16 %v2989, %v2981
        %v3214 = vpack.c.b16 %v2990, %v2982
        %v3215 = vpack.c.b16 %v2991, %v2983
        %v3216 = vpack.c.b16 %v3000, %v2992
        %v3217 = vpack.c.b16 %v3001, %v2993
        %v3218 = vpack.c.b16 %v3002, %v2994
        %v3219 = vpack.c.b16 %v3003, %v2995
        %v3220 = vpack.c.b16 %v3004, %v2996
        %v3221 = vpack.c.b16 %v3005, %v2997
        %v3222 = vpack.c.b16 %v3006, %v2998
        %v3223 = vpack.c.b16 %v3007, %v2999
        %v3224 = vpack.c.b16 %v3016, %v3008
        %v3225 = vpack.c.b16 %v3017, %v3009
        %v3226 = vpack.c.b16 %v3018, %v3010
        %v3227 = vpack.c.b16 %v3019, %v3011
        %v3228 = vpack.c.b16 %v3020, %v3012
        %v3229 = vpack.c.b16 %v3021, %v3013
        %v3230 = vpack.c.b16 %v3022, %v3014
        %v3231 = vpack.c.b16 %v3023, %v3015
        %v3232 = vpack.c.b16 %v3032, %v3024
        %v3233 = vpack.c.b16 %v3033, %v3025
        %v3234 = vpack.c.b16 %v3034, %v3026
        %v3235 = vpack.c.b16 %v3035, %v3027
        %v3236 = vpack.c.b16 %v3036, %v3028
        %v3237 = vpack.c.b16 %v3037, %v3029
        %v3238 = vpack.c.b16 %v3038, %v3030
        %v3239 = vpack.c.b16 %v3039, %v3031
        %v3240 = vpack.c.b16 %v3048, %v3040
        %v3241 = vpack.c.b16 %v3049, %v3041
        %v3242 = vpack.c.b16 %v3050, %v3042
        %v3243 = vpack.c.b16 %v3051, %v3043
        %v3244 = vpack.c.b16 %v3052, %v3044
        %v3245 = vpack.c.b16 %v3053, %v3045
        %v3246 = vpack.c.b16 %v3054, %v3046
        %v3247 = vpack.c.b16 %v3055, %v3047
        %v3248 = vpack.c.b16 %v3064, %v3056
        %v3249 = vpack.c.b16 %v3065, %v3057
        %v3250 = vpack.c.b16 %v3066, %v3058
        %v3251 = vpack.c.b16 %v3067, %v3059
        %v3252 = vpack.c.b16 %v3068, %v3060
        %v3253 = vpack.c.b16 %v3069, %v3061
        %v3254 = vpack.c.b16 %v3070, %v3062
        %v3255 = vpack.c.b16 %v3071, %v3063
        %v3256 = vpack.c.b16 %v3080, %v3072
        %v3257 = vpack.c.b16 %v3081, %v3073
        %v3258 = vpack.c.b16 %v3082, %v3074
        %v3259 = vpack.c.b16 %v3083, %v3075
        %v3260 = vpack.c.b16 %v3084, %v3076
        %v3261 = vpack.c.b16 %v3085, %v3077
        %v3262 = vpack.c.b16 %v3086, %v3078
        %v3263 = vpack.c.b16 %v3087, %v3079
        %v3264 = vpack.c.b16 %v3096, %v3088
        %v3265 = vpack.c.b16 %v3097, %v3089
        %v3266 = vpack.c.b16 %v3098, %v3090
        %v3267 = vpack.c.b16 %v3099, %v3091
        %v3268 = vpack.c.b16 %v3100, %v3092
        %v3269 = vpack.c.b16 %v3101, %v3093
        %v3270 = vpack.c.b16 %v3102, %v3094
        %v3271 = vpack.c.b16 %v3103, %v3095
        %v3272 = vpack.c.b16 %v3112, %v3104
        %v3273 = vpack.c.b16 %v3113, %v3105
        %v3274 = vpack.c.b16 %v3114, %v3106
        %v3275 = vpack.c.b16 %v3115, %v3107
        %v3276 = vpack.c.b16 %v3116, %v3108
        %v3277 = vpack.c.b16 %v3117, %v3109
        %v3278 = vpack.c.b16 %v3118, %v3110
        %v3279 = vpack.c.b16 %v3119, %v3111
        %v3280 = vpack.c.b16 %v3128, %v3120
        %v3281 = vpack.c.b16 %v3129, %v3121
        %v3282 = vpack.c.b16 %v3130, %v3122
        %v3283 = vpack.c.b16 %v3131, %v3123
        %v3284 = vpack.c.b16 %v3132, %v3124
        %v3285 = vpack.c.b16 %v3133, %v3125
        %v3286 = vpack.c.b16 %v3134, %v3126
        %v3287 = vpack.c.b16 %v3135, %v3127
        %v3288 = vpack.c.b16 %v3144, %v3136
        %v3289 = vpack.c.b16 %v3145, %v3137
        %v3290 = vpack.c.b16 %v3146, %v3138
        %v3291 = vpack.c.b16 %v3147, %v3139
        %v3292 = vpack.c.b16 %v3148, %v3140
        %v3293 = vpack.c.b16 %v3149, %v3141
        %v3294 = vpack.c.b16 %v3150, %v3142
        %v3295 = vpack.c.b16 %v3151, %v3143
        %v3296 = vpack.c.b16 %v3160, %v3152
        %v3297 = vpack.c.b16 %v3161, %v3153
        %v3298 = vpack.c.b16 %v3162, %v3154
        %v3299 = vpack.c.b16 %v3163, %v3155
        %v3300 = vpack.c.b16 %v3164, %v3156
        %v3301 = vpack.c.b16 %v3165, %v3157
        %v3302 = vpack.c.b16 %v3166, %v3158
        %v3303 = vpack.c.b16 %v3167, %v3159
        %v3304 = vpack.c.b16 %v3176, %v3168
        %v3305 = vpack.c.b16 %v3177, %v3169
        %v3306 = vpack.c.b16 %v3178, %v3170
        %v3307 = vpack.c.b16 %v3179, %v3171
        %v3308 = vpack.c.b16 %v3180, %v3172
        %v3309 = vpack.c.b16 %v3181, %v3173
        %v3310 = vpack.c.b16 %v3182, %v3174
        %v3311 = vpack.c.b16 %v3183, %v3175
        %3440 = vmatprep.subr.bf16.mxu0 %v3185
        %3441 = vmatpush1.bf16.msra.mxu0 %v3184
        %3442 = vmatprep.subr.bf16.mxu0 %v3193
        %3443 = vmatpush1.bf16.msra.mxu0 %v3192
        %3444 = vmatprep.subr.bf16.mxu0 %v3201
        %3445 = vmatpush1.bf16.msra.mxu0 %v3200
        %3446 = vmatprep.subr.bf16.mxu0 %v3209
        %3447 = vmatpush1.bf16.msra.mxu0 %v3208
        %3448 = vmatprep.subr.bf16.mxu0 %v3217
        %3449 = vmatpush1.bf16.msra.mxu0 %v3216
        %3450 = vmatprep.subr.bf16.mxu0 %v3225
        %3451 = vmatpush1.bf16.msra.mxu0 %v3224
        %3452 = vmatprep.subr.bf16.mxu0 %v3233
        %3453 = vmatpush1.bf16.msra.mxu0 %v3232
        %3454 = vmatprep.subr.bf16.mxu0 %v3241
        %3455 = vmatpush1.bf16.msra.mxu0 %v3240
        %3456 = vmatprep.subr.bf16.mxu0 %v3249
        %3457 = vmatpush1.bf16.msra.mxu0 %v3248
        %3458 = vmatprep.subr.bf16.mxu0 %v3257
        %3459 = vmatpush1.bf16.msra.mxu0 %v3256
        %3460 = vmatprep.subr.bf16.mxu0 %v3265
        %3461 = vmatpush1.bf16.msra.mxu0 %v3264
        %3462 = vmatprep.subr.bf16.mxu0 %v3273
        %3463 = vmatpush1.bf16.msra.mxu0 %v3272
        %3464 = vmatprep.subr.bf16.mxu0 %v3281
        %3465 = vmatpush1.bf16.msra.mxu0 %v3280
        %3466 = vmatprep.subr.bf16.mxu0 %v3289
        %3467 = vmatpush1.bf16.msra.mxu0 %v3288
        %3468 = vmatprep.subr.bf16.mxu0 %v3297
        %3469 = vmatpush1.bf16.msra.mxu0 %v3296
        %3470 = vmatprep.subr.bf16.mxu0 %v3305
        %3471 = vmatpush1.bf16.msra.mxu0 %v3304
        %3472 = vmatprep.mubr.bf16.mxu0 %v2624
        %3473 = vmatmul.mubr.bf16.gmra.mrb[0].mxu0 %v2623
        %v3474 = vpop.f32.mrb[0].mxu0
        %v3475 = vadd.f32 %v2763, %v3474
        %v3476 = vpop.f32.mrb[0].mxu0
        %v3477 = vadd.f32 %v2767, %v3476
        %v3478 = vpop.f32.mrb[0].mxu0
        %v3479 = vadd.f32 %v2763, %v3478
        %v3480 = vpop.f32.mrb[0].mxu0
        %v3481 = vadd.f32 %v2767, %v3480
        %3482 = vdwg.mxu0
        %3483 = vmatprep.subr.bf16.mxu0 %v3187
        %3484 = vmatpush1.bf16.msra.mxu0 %v3186
        %3485 = vmatprep.subr.bf16.mxu0 %v3195
        %3486 = vmatpush1.bf16.msra.mxu0 %v3194
        %3487 = vmatprep.subr.bf16.mxu0 %v3203
        %3488 = vmatpush1.bf16.msra.mxu0 %v3202
        %3489 = vmatprep.subr.bf16.mxu0 %v3211
        %3490 = vmatpush1.bf16.msra.mxu0 %v3210
        %3491 = vmatprep.subr.bf16.mxu0 %v3219
        %3492 = vmatpush1.bf16.msra.mxu0 %v3218
        %3493 = vmatprep.subr.bf16.mxu0 %v3227
        %3494 = vmatpush1.bf16.msra.mxu0 %v3226
        %3495 = vmatprep.subr.bf16.mxu0 %v3235
        %3496 = vmatpush1.bf16.msra.mxu0 %v3234
        %3497 = vmatprep.subr.bf16.mxu0 %v3243
        %3498 = vmatpush1.bf16.msra.mxu0 %v3242
        %3499 = vmatprep.subr.bf16.mxu0 %v3251
        %3500 = vmatpush1.bf16.msra.mxu0 %v3250
        %3501 = vmatprep.subr.bf16.mxu0 %v3259
        %3502 = vmatpush1.bf16.msra.mxu0 %v3258
        %3503 = vmatprep.subr.bf16.mxu0 %v3267
        %3504 = vmatpush1.bf16.msra.mxu0 %v3266
        %3505 = vmatprep.subr.bf16.mxu0 %v3275
        %3506 = vmatpush1.bf16.msra.mxu0 %v3274
        %3507 = vmatprep.subr.bf16.mxu0 %v3283
        %3508 = vmatpush1.bf16.msra.mxu0 %v3282
        %3509 = vmatprep.subr.bf16.mxu0 %v3291
        %3510 = vmatpush1.bf16.msra.mxu0 %v3290
        %3511 = vmatprep.subr.bf16.mxu0 %v3299
        %3512 = vmatpush1.bf16.msra.mxu0 %v3298
        %3513 = vmatprep.subr.bf16.mxu0 %v3307
        %3514 = vmatpush1.bf16.msra.mxu0 %v3306
        %3515 = vmatprep.mubr.bf16.mxu0 %v2624
        %3516 = vmatmul.mubr.bf16.gmra.mrb[0].mxu0 %v2623
        %v3517 = vpop.f32.mrb[0].mxu0
        %v3518 = vadd.f32 %v2771, %v3517
        %v3519 = vpop.f32.mrb[0].mxu0
        %v3520 = vadd.f32 %v2775, %v3519
        %v3521 = vpop.f32.mrb[0].mxu0
        %v3522 = vadd.f32 %v2771, %v3521
        %v3523 = vpop.f32.mrb[0].mxu0
        %v3524 = vadd.f32 %v2775, %v3523
        %3525 = vdwg.mxu0
        %3526 = vmatprep.subr.bf16.mxu0 %v3189
        %3527 = vmatpush1.bf16.msra.mxu0 %v3188
        %3528 = vmatprep.subr.bf16.mxu0 %v3197
        %3529 = vmatpush1.bf16.msra.mxu0 %v3196
        %3530 = vmatprep.subr.bf16.mxu0 %v3205
        %3531 = vmatpush1.bf16.msra.mxu0 %v3204
        %3532 = vmatprep.subr.bf16.mxu0 %v3213
        %3533 = vmatpush1.bf16.msra.mxu0 %v3212
        %3534 = vmatprep.subr.bf16.mxu0 %v3221
        %3535 = vmatpush1.bf16.msra.mxu0 %v3220
        %3536 = vmatprep.subr.bf16.mxu0 %v3229
        %3537 = vmatpush1.bf16.msra.mxu0 %v3228
        %3538 = vmatprep.subr.bf16.mxu0 %v3237
        %3539 = vmatpush1.bf16.msra.mxu0 %v3236
        %3540 = vmatprep.subr.bf16.mxu0 %v3245
        %3541 = vmatpush1.bf16.msra.mxu0 %v3244
        %3542 = vmatprep.subr.bf16.mxu0 %v3253
        %3543 = vmatpush1.bf16.msra.mxu0 %v3252
        %3544 = vmatprep.subr.bf16.mxu0 %v3261
        %3545 = vmatpush1.bf16.msra.mxu0 %v3260
        %3546 = vmatprep.subr.bf16.mxu0 %v3269
        %3547 = vmatpush1.bf16.msra.mxu0 %v3268
        %3548 = vmatprep.subr.bf16.mxu0 %v3277
        %3549 = vmatpush1.bf16.msra.mxu0 %v3276
        %3550 = vmatprep.subr.bf16.mxu0 %v3285
        %3551 = vmatpush1.bf16.msra.mxu0 %v3284
        %3552 = vmatprep.subr.bf16.mxu0 %v3293
        %3553 = vmatpush1.bf16.msra.mxu0 %v3292
        %3554 = vmatprep.subr.bf16.mxu0 %v3301
        %3555 = vmatpush1.bf16.msra.mxu0 %v3300
        %3556 = vmatprep.subr.bf16.mxu0 %v3309
        %3557 = vmatpush1.bf16.msra.mxu0 %v3308
        %3558 = vmatprep.mubr.bf16.mxu0 %v2624
        %3559 = vmatmul.mubr.bf16.gmra.mrb[0].mxu0 %v2623
        %v3560 = vpop.f32.mrb[0].mxu0
        %v3561 = vadd.f32 %v2779, %v3560
        %v3562 = vpop.f32.mrb[0].mxu0
        %v3563 = vadd.f32 %v2783, %v3562
        %v3564 = vpop.f32.mrb[0].mxu0
        %v3565 = vadd.f32 %v2779, %v3564
        %v3566 = vpop.f32.mrb[0].mxu0
        %v3567 = vadd.f32 %v2783, %v3566
        %3568 = vdwg.mxu0
        %3569 = vmatprep.subr.bf16.mxu0 %v3191
        %3570 = vmatpush1.bf16.msra.mxu0 %v3190
        %3571 = vmatprep.subr.bf16.mxu0 %v3199
        %3572 = vmatpush1.bf16.msra.mxu0 %v3198
        %3573 = vmatprep.subr.bf16.mxu0 %v3207
        %3574 = vmatpush1.bf16.msra.mxu0 %v3206
        %3575 = vmatprep.subr.bf16.mxu0 %v3215
        %3576 = vmatpush1.bf16.msra.mxu0 %v3214
        %3577 = vmatprep.subr.bf16.mxu0 %v3223
        %3578 = vmatpush1.bf16.msra.mxu0 %v3222
        %3579 = vmatprep.subr.bf16.mxu0 %v3231
        %3580 = vmatpush1.bf16.msra.mxu0 %v3230
        %3581 = vmatprep.subr.bf16.mxu0 %v3239
        %3582 = vmatpush1.bf16.msra.mxu0 %v3238
        %3583 = vmatprep.subr.bf16.mxu0 %v3247
        %3584 = vmatpush1.bf16.msra.mxu0 %v3246
        %3585 = vmatprep.subr.bf16.mxu0 %v3255
        %3586 = vmatpush1.bf16.msra.mxu0 %v3254
        %3587 = vmatprep.subr.bf16.mxu0 %v3263
        %3588 = vmatpush1.bf16.msra.mxu0 %v3262
        %3589 = vmatprep.subr.bf16.mxu0 %v3271
        %3590 = vmatpush1.bf16.msra.mxu0 %v3270
        %3591 = vmatprep.subr.bf16.mxu0 %v3279
        %3592 = vmatpush1.bf16.msra.mxu0 %v3278
        %3593 = vmatprep.subr.bf16.mxu0 %v3287
        %3594 = vmatpush1.bf16.msra.mxu0 %v3286
        %3595 = vmatprep.subr.bf16.mxu0 %v3295
        %3596 = vmatpush1.bf16.msra.mxu0 %v3294
        %3597 = vmatprep.subr.bf16.mxu0 %v3303
        %3598 = vmatpush1.bf16.msra.mxu0 %v3302
        %3599 = vmatprep.subr.bf16.mxu0 %v3311
        %3600 = vmatpush1.bf16.msra.mxu0 %v3310
        %3601 = vmatprep.mubr.bf16.mxu0 %v2624
        %3602 = vmatmul.mubr.bf16.gmra.mrb[0].mxu0 %v2623
        %v3603 = vpop.f32.mrb[0].mxu0
        %v3604 = vadd.f32 %v2787, %v3603
        %v3605 = vpop.f32.mrb[0].mxu0
        %v3606 = vadd.f32 %v2791, %v3605
        %v3607 = vpop.f32.mrb[0].mxu0
        %v3608 = vadd.f32 %v2787, %v3607
        %v3609 = vpop.f32.mrb[0].mxu0
        %v3610 = vadd.f32 %v2791, %v3609
        %3611 = vdwg.mxu0
        %v3612 = vmul.f32 %v3475, 0.5
        %v3613 = vmul.f32 %v3477, 0.5
        %v3614 = vmul.f32 %v3518, 0.5
        %v3615 = vmul.f32 %v3520, 0.5
        %v3616 = vmul.f32 %v3561, 0.5
        %v3617 = vmul.f32 %v3563, 0.5
        %v3618 = vmul.f32 %v3604, 0.5
        %v3619 = vmul.f32 %v3606, 0.5
        %v3620 = vmul.f32 %v3479, 0.5
        %v3621 = vmul.f32 %v3481, 0.5
        %v3622 = vmul.f32 %v3522, 0.5
        %v3623 = vmul.f32 %v3524, 0.5
        %v3624 = vmul.f32 %v3565, 0.5
        %v3625 = vmul.f32 %v3567, 0.5
        %v3626 = vmul.f32 %v3608, 0.5
        %v3627 = vmul.f32 %v3610, 0.5
        %v3628 = vmul.f32 %v3475, 0.044715
        %v3629 = vmul.f32 %v3477, 0.044715
        %v3630 = vmul.f32 %v3518, 0.044715
        %v3631 = vmul.f32 %v3520, 0.044715
        %v3632 = vmul.f32 %v3561, 0.044715
        %v3633 = vmul.f32 %v3563, 0.044715
        %v3634 = vmul.f32 %v3604, 0.044715
        %v3635 = vmul.f32 %v3606, 0.044715
        %v3636 = vmul.f32 %v3479, 0.044715
        %v3637 = vmul.f32 %v3481, 0.044715
        %v3638 = vmul.f32 %v3522, 0.044715
        %v3639 = vmul.f32 %v3524, 0.044715
        %v3640 = vmul.f32 %v3565, 0.044715
        %v3641 = vmul.f32 %v3567, 0.044715
        %v3642 = vmul.f32 %v3608, 0.044715
        %v3643 = vmul.f32 %v3610, 0.044715
        %v3644 = vmul.f32 %v3628, %v3475
        %v3645 = vmul.f32 %v3629, %v3477
        %v3646 = vmul.f32 %v3630, %v3518
        %v3647 = vmul.f32 %v3631, %v3520
        %v3648 = vmul.f32 %v3632, %v3561
        %v3649 = vmul.f32 %v3633, %v3563
        %v3650 = vmul.f32 %v3634, %v3604
        %v3651 = vmul.f32 %v3635, %v3606
        %v3652 = vmul.f32 %v3636, %v3479
        %v3653 = vmul.f32 %v3637, %v3481
        %v3654 = vmul.f32 %v3638, %v3522
        %v3655 = vmul.f32 %v3639, %v3524
        %v3656 = vmul.f32 %v3640, %v3565
        %v3657 = vmul.f32 %v3641, %v3567
        %v3658 = vmul.f32 %v3642, %v3608
        %v3659 = vmul.f32 %v3643, %v3610
        %v3660 = vmul.f32 %v3644, %v3475
        %v3661 = vmul.f32 %v3645, %v3477
        %v3662 = vmul.f32 %v3646, %v3518
        %v3663 = vmul.f32 %v3647, %v3520
        %v3664 = vmul.f32 %v3648, %v3561
        %v3665 = vmul.f32 %v3649, %v3563
        %v3666 = vmul.f32 %v3650, %v3604
        %v3667 = vmul.f32 %v3651, %v3606
        %v3668 = vmul.f32 %v3652, %v3479
        %v3669 = vmul.f32 %v3653, %v3481
        %v3670 = vmul.f32 %v3654, %v3522
        %v3671 = vmul.f32 %v3655, %v3524
        %v3672 = vmul.f32 %v3656, %v3565
        %v3673 = vmul.f32 %v3657, %v3567
        %v3674 = vmul.f32 %v3658, %v3608
        %v3675 = vmul.f32 %v3659, %v3610
        %v3676 = vadd.f32 %v3475, %v3660
        %v3677 = vadd.f32 %v3477, %v3661
        %v3678 = vadd.f32 %v3518, %v3662
        %v3679 = vadd.f32 %v3520, %v3663
        %v3680 = vadd.f32 %v3561, %v3664
        %v3681 = vadd.f32 %v3563, %v3665
        %v3682 = vadd.f32 %v3604, %v3666
        %v3683 = vadd.f32 %v3606, %v3667
        %v3684 = vadd.f32 %v3479, %v3668
        %v3685 = vadd.f32 %v3481, %v3669
        %v3686 = vadd.f32 %v3522, %v3670
        %v3687 = vadd.f32 %v3524, %v3671
        %v3688 = vadd.f32 %v3565, %v3672
        %v3689 = vadd.f32 %v3567, %v3673
        %v3690 = vadd.f32 %v3608, %v3674
        %v3691 = vadd.f32 %v3610, %v3675
        %v3692 = vmul.f32 %v3676, 0.7978846
        %v3693 = vmul.f32 %v3677, 0.7978846
        %v3694 = vmul.f32 %v3678, 0.7978846
        %v3695 = vmul.f32 %v3679, 0.7978846
        %v3696 = vmul.f32 %v3680, 0.7978846
        %v3697 = vmul.f32 %v3681, 0.7978846
        %v3698 = vmul.f32 %v3682, 0.7978846
        %v3699 = vmul.f32 %v3683, 0.7978846
        %v3700 = vmul.f32 %v3684, 0.7978846
        %v3701 = vmul.f32 %v3685, 0.7978846
        %v3702 = vmul.f32 %v3686, 0.7978846
        %v3703 = vmul.f32 %v3687, 0.7978846
        %v3704 = vmul.f32 %v3688, 0.7978846
        %v3705 = vmul.f32 %v3689, 0.7978846
        %v3706 = vmul.f32 %v3690, 0.7978846
        %v3707 = vmul.f32 %v3691, 0.7978846
        %v3708 = vtanh.pop %v3692
        %v3709 = vtanh.pop %v3693
        %v3710 = vtanh.pop %v3694
        %v3711 = vtanh.pop %v3695
        %v3712 = vtanh.pop %v3696
        %v3713 = vtanh.pop %v3697
        %v3714 = vtanh.pop %v3698
        %v3715 = vtanh.pop %v3699
        %v3716 = vtanh.pop %v3700
        %v3717 = vtanh.pop %v3701
        %v3718 = vtanh.pop %v3702
        %v3719 = vtanh.pop %v3703
        %v3720 = vtanh.pop %v3704
        %v3721 = vtanh.pop %v3705
        %v3722 = vtanh.pop %v3706
        %v3723 = vtanh.pop %v3707
        %v3724 = vadd.f32 %v3708, 1.0
        %v3725 = vadd.f32 %v3709, 1.0
        %v3726 = vadd.f32 %v3710, 1.0
        %v3727 = vadd.f32 %v3711, 1.0
        %v3728 = vadd.f32 %v3712, 1.0
        %v3729 = vadd.f32 %v3713, 1.0
        %v3730 = vadd.f32 %v3714, 1.0
        %v3731 = vadd.f32 %v3715, 1.0
        %v3732 = vadd.f32 %v3716, 1.0
        %v3733 = vadd.f32 %v3717, 1.0
        %v3734 = vadd.f32 %v3718, 1.0
        %v3735 = vadd.f32 %v3719, 1.0
        %v3736 = vadd.f32 %v3720, 1.0
        %v3737 = vadd.f32 %v3721, 1.0
        %v3738 = vadd.f32 %v3722, 1.0
        %v3739 = vadd.f32 %v3723, 1.0
        %v3740 = vmul.f32 %v3612, %v3724
        %v3741 = vmul.f32 %v3613, %v3725
        %v3742 = vmul.f32 %v3614, %v3726
        %v3743 = vmul.f32 %v3615, %v3727
        %v3744 = vmul.f32 %v3616, %v3728
        %v3745 = vmul.f32 %v3617, %v3729
        %v3746 = vmul.f32 %v3618, %v3730
        %v3747 = vmul.f32 %v3619, %v3731
        %v3748 = vmul.f32 %v3620, %v3732
        %v3749 = vmul.f32 %v3621, %v3733
        %v3750 = vmul.f32 %v3622, %v3734
        %v3751 = vmul.f32 %v3623, %v3735
        %v3752 = vmul.f32 %v3624, %v3736
        %v3753 = vmul.f32 %v3625, %v3737
        %v3754 = vmul.f32 %v3626, %v3738
        %v3755 = vmul.f32 %v3627, %v3739
        %v3756 = vpack.c.bf16 %v3748, %v3740
        %v3757 = vpack.c.bf16 %v3749, %v3741
        %v3758 = vpack.c.bf16 %v3750, %v3742
        %v3759 = vpack.c.bf16 %v3751, %v3743
        %v3760 = vpack.c.bf16 %v3752, %v3744
        %v3761 = vpack.c.bf16 %v3753, %v3745
        %v3762 = vpack.c.bf16 %v3754, %v3746
        %v3763 = vpack.c.bf16 %v3755, %v3747
        %s3764 = smul.addr %s2625, 4
        %s3765 = scalar_lea.vmem [#allocation17], %s3764
        %v3766 = vld [vmem:[%s3765] sm:$0xff]
        %v3767 = vld [vmem:[%s3765 + $0x8] sm:$0xff]
        %v3768 = vld [vmem:[%s3765 + $0x10] sm:$0xff]
        %v3769 = vld [vmem:[%s3765 + $0x18] sm:$0xff]
        %v3770 = vld [vmem:[%s3765 + $0x20] sm:$0xff]
        %v3771 = vld [vmem:[%s3765 + $0x28] sm:$0xff]
        %v3772 = vld [vmem:[%s3765 + $0x30] sm:$0xff]
        %v3773 = vld [vmem:[%s3765 + $0x38] sm:$0xff]
        %v3774 = vld [vmem:[%s3765 + $0x40] sm:$0xff]
        %v3775 = vld [vmem:[%s3765 + $0x48] sm:$0xff]
        %v3776 = vld [vmem:[%s3765 + $0x50] sm:$0xff]
        %v3777 = vld [vmem:[%s3765 + $0x58] sm:$0xff]
        %v3778 = vld [vmem:[%s3765 + $0x60] sm:$0xff]
        %v3779 = vld [vmem:[%s3765 + $0x68] sm:$0xff]
        %v3780 = vld [vmem:[%s3765 + $0x70] sm:$0xff]
        %v3781 = vld [vmem:[%s3765 + $0x78] sm:$0xff]
        %v3782 = vld [vmem:[%s3765 + $0x80] sm:$0xff]
        %v3783 = vld [vmem:[%s3765 + $0x88] sm:$0xff]
        %v3784 = vld [vmem:[%s3765 + $0x90] sm:$0xff]
        %v3785 = vld [vmem:[%s3765 + $0x98] sm:$0xff]
        %v3786 = vld [vmem:[%s3765 + $0xa0] sm:$0xff]
        %v3787 = vld [vmem:[%s3765 + $0xa8] sm:$0xff]
        %v3788 = vld [vmem:[%s3765 + $0xb0] sm:$0xff]
        %v3789 = vld [vmem:[%s3765 + $0xb8] sm:$0xff]
        %v3790 = vld [vmem:[%s3765 + $0xc0] sm:$0xff]
        %v3791 = vld [vmem:[%s3765 + $0xc8] sm:$0xff]
        %v3792 = vld [vmem:[%s3765 + $0xd0] sm:$0xff]
        %v3793 = vld [vmem:[%s3765 + $0xd8] sm:$0xff]
        %v3794 = vld [vmem:[%s3765 + $0xe0] sm:$0xff]
        %v3795 = vld [vmem:[%s3765 + $0xe8] sm:$0xff]
        %v3796 = vld [vmem:[%s3765 + $0xf0] sm:$0xff]
        %v3797 = vld [vmem:[%s3765 + $0xf8] sm:$0xff]
        %v3798 = vld [vmem:[%s3765 + $0x100] sm:$0xff]
        %v3799 = vld [vmem:[%s3765 + $0x108] sm:$0xff]
        %v3800 = vld [vmem:[%s3765 + $0x110] sm:$0xff]
        %v3801 = vld [vmem:[%s3765 + $0x118] sm:$0xff]
        %v3802 = vld [vmem:[%s3765 + $0x120] sm:$0xff]
        %v3803 = vld [vmem:[%s3765 + $0x128] sm:$0xff]
        %v3804 = vld [vmem:[%s3765 + $0x130] sm:$0xff]
        %v3805 = vld [vmem:[%s3765 + $0x138] sm:$0xff]
        %v3806 = vld [vmem:[%s3765 + $0x140] sm:$0xff]
        %v3807 = vld [vmem:[%s3765 + $0x148] sm:$0xff]
        %v3808 = vld [vmem:[%s3765 + $0x150] sm:$0xff]
        %v3809 = vld [vmem:[%s3765 + $0x158] sm:$0xff]
        %v3810 = vld [vmem:[%s3765 + $0x160] sm:$0xff]
        %v3811 = vld [vmem:[%s3765 + $0x168] sm:$0xff]
        %v3812 = vld [vmem:[%s3765 + $0x170] sm:$0xff]
        %v3813 = vld [vmem:[%s3765 + $0x178] sm:$0xff]
        %v3814 = vld [vmem:[%s3765 + $0x180] sm:$0xff]
        %v3815 = vld [vmem:[%s3765 + $0x188] sm:$0xff]
        %v3816 = vld [vmem:[%s3765 + $0x190] sm:$0xff]
        %v3817 = vld [vmem:[%s3765 + $0x198] sm:$0xff]
        %v3818 = vld [vmem:[%s3765 + $0x1a0] sm:$0xff]
        %v3819 = vld [vmem:[%s3765 + $0x1a8] sm:$0xff]
        %v3820 = vld [vmem:[%s3765 + $0x1b0] sm:$0xff]
        %v3821 = vld [vmem:[%s3765 + $0x1b8] sm:$0xff]
        %v3822 = vld [vmem:[%s3765 + $0x1c0] sm:$0xff]
        %v3823 = vld [vmem:[%s3765 + $0x1c8] sm:$0xff]
        %v3824 = vld [vmem:[%s3765 + $0x1d0] sm:$0xff]
        %v3825 = vld [vmem:[%s3765 + $0x1d8] sm:$0xff]
        %v3826 = vld [vmem:[%s3765 + $0x1e0] sm:$0xff]
        %v3827 = vld [vmem:[%s3765 + $0x1e8] sm:$0xff]
        %v3828 = vld [vmem:[%s3765 + $0x1f0] sm:$0xff]
        %v3829 = vld [vmem:[%s3765 + $0x1f8] sm:$0xff]
        %v3830 = vld [vmem:[%s3765 + $0x200] sm:$0xff]
        %v3831 = vld [vmem:[%s3765 + $0x208] sm:$0xff]
        %v3832 = vld [vmem:[%s3765 + $0x210] sm:$0xff]
        %v3833 = vld [vmem:[%s3765 + $0x218] sm:$0xff]
        %v3834 = vld [vmem:[%s3765 + $0x220] sm:$0xff]
        %v3835 = vld [vmem:[%s3765 + $0x228] sm:$0xff]
        %v3836 = vld [vmem:[%s3765 + $0x230] sm:$0xff]
        %v3837 = vld [vmem:[%s3765 + $0x238] sm:$0xff]
        %v3838 = vld [vmem:[%s3765 + $0x240] sm:$0xff]
        %v3839 = vld [vmem:[%s3765 + $0x248] sm:$0xff]
        %v3840 = vld [vmem:[%s3765 + $0x250] sm:$0xff]
        %v3841 = vld [vmem:[%s3765 + $0x258] sm:$0xff]
        %v3842 = vld [vmem:[%s3765 + $0x260] sm:$0xff]
        %v3843 = vld [vmem:[%s3765 + $0x268] sm:$0xff]
        %v3844 = vld [vmem:[%s3765 + $0x270] sm:$0xff]
        %v3845 = vld [vmem:[%s3765 + $0x278] sm:$0xff]
        %v3846 = vld [vmem:[%s3765 + $0x280] sm:$0xff]
        %v3847 = vld [vmem:[%s3765 + $0x288] sm:$0xff]
        %v3848 = vld [vmem:[%s3765 + $0x290] sm:$0xff]
        %v3849 = vld [vmem:[%s3765 + $0x298] sm:$0xff]
        %v3850 = vld [vmem:[%s3765 + $0x2a0] sm:$0xff]
        %v3851 = vld [vmem:[%s3765 + $0x2a8] sm:$0xff]
        %v3852 = vld [vmem:[%s3765 + $0x2b0] sm:$0xff]
        %v3853 = vld [vmem:[%s3765 + $0x2b8] sm:$0xff]
        %v3854 = vld [vmem:[%s3765 + $0x2c0] sm:$0xff]
        %v3855 = vld [vmem:[%s3765 + $0x2c8] sm:$0xff]
        %v3856 = vld [vmem:[%s3765 + $0x2d0] sm:$0xff]
        %v3857 = vld [vmem:[%s3765 + $0x2d8] sm:$0xff]
        %v3858 = vld [vmem:[%s3765 + $0x2e0] sm:$0xff]
        %v3859 = vld [vmem:[%s3765 + $0x2e8] sm:$0xff]
        %v3860 = vld [vmem:[%s3765 + $0x2f0] sm:$0xff]
        %v3861 = vld [vmem:[%s3765 + $0x2f8] sm:$0xff]
        %v3862 = vld [vmem:[%s3765 + $0x300] sm:$0xff]
        %v3863 = vld [vmem:[%s3765 + $0x308] sm:$0xff]
        %v3864 = vld [vmem:[%s3765 + $0x310] sm:$0xff]
        %v3865 = vld [vmem:[%s3765 + $0x318] sm:$0xff]
        %v3866 = vld [vmem:[%s3765 + $0x320] sm:$0xff]
        %v3867 = vld [vmem:[%s3765 + $0x328] sm:$0xff]
        %v3868 = vld [vmem:[%s3765 + $0x330] sm:$0xff]
        %v3869 = vld [vmem:[%s3765 + $0x338] sm:$0xff]
        %v3870 = vld [vmem:[%s3765 + $0x340] sm:$0xff]
        %v3871 = vld [vmem:[%s3765 + $0x348] sm:$0xff]
        %v3872 = vld [vmem:[%s3765 + $0x350] sm:$0xff]
        %v3873 = vld [vmem:[%s3765 + $0x358] sm:$0xff]
        %v3874 = vld [vmem:[%s3765 + $0x360] sm:$0xff]
        %v3875 = vld [vmem:[%s3765 + $0x368] sm:$0xff]
        %v3876 = vld [vmem:[%s3765 + $0x370] sm:$0xff]
        %v3877 = vld [vmem:[%s3765 + $0x378] sm:$0xff]
        %v3878 = vld [vmem:[%s3765 + $0x380] sm:$0xff]
        %v3879 = vld [vmem:[%s3765 + $0x388] sm:$0xff]
        %v3880 = vld [vmem:[%s3765 + $0x390] sm:$0xff]
        %v3881 = vld [vmem:[%s3765 + $0x398] sm:$0xff]
        %v3882 = vld [vmem:[%s3765 + $0x3a0] sm:$0xff]
        %v3883 = vld [vmem:[%s3765 + $0x3a8] sm:$0xff]
        %v3884 = vld [vmem:[%s3765 + $0x3b0] sm:$0xff]
        %v3885 = vld [vmem:[%s3765 + $0x3b8] sm:$0xff]
        %v3886 = vld [vmem:[%s3765 + $0x3c0] sm:$0xff]
        %v3887 = vld [vmem:[%s3765 + $0x3c8] sm:$0xff]
        %v3888 = vld [vmem:[%s3765 + $0x3d0] sm:$0xff]
        %v3889 = vld [vmem:[%s3765 + $0x3d8] sm:$0xff]
        %v3890 = vld [vmem:[%s3765 + $0x3e0] sm:$0xff]
        %v3891 = vld [vmem:[%s3765 + $0x3e8] sm:$0xff]
        %v3892 = vld [vmem:[%s3765 + $0x3f0] sm:$0xff]
        %v3893 = vld [vmem:[%s3765 + $0x3f8] sm:$0xff]
        %s3894 = scalar_lea.vmem [#allocation19], %s789
        %v3895 = vld [vmem:[%s3894] sm:$0x3]
        %v3897 = vlaneseq
        %v3898 = vshrl.u32 %v3897, 7
        %v3899 = vsub.s32 0, %v3898
        %v3900 = vrot.slane %v3895, %v3899
        %v3901 = vlaneseq
        %v3902 = vshrl.u32 %v3901, 7
        %v3903 = vsub.s32 1, %v3902
        %v3904 = vrot.slane %v3895, %v3903
        %v4035 = vunpack.c.l.b16 %v3766
        %v4036 = vunpack.c.h.b16 %v3766
        %v4037 = vunpack.c.l.b16 %v3767
        %v4038 = vunpack.c.h.b16 %v3767
        %v4039 = vunpack.c.l.b16 %v3768
        %v4040 = vunpack.c.h.b16 %v3768
        %v4041 = vunpack.c.l.b16 %v3769
        %v4042 = vunpack.c.h.b16 %v3769
        %v4043 = vunpack.c.l.b16 %v3770
        %v4044 = vunpack.c.h.b16 %v3770
        %v4045 = vunpack.c.l.b16 %v3771
        %v4046 = vunpack.c.h.b16 %v3771
        %v4047 = vunpack.c.l.b16 %v3772
        %v4048 = vunpack.c.h.b16 %v3772
        %v4049 = vunpack.c.l.b16 %v3773
        %v4050 = vunpack.c.h.b16 %v3773
        %v4051 = vunpack.c.l.b16 %v3774
        %v4052 = vunpack.c.h.b16 %v3774
        %v4053 = vunpack.c.l.b16 %v3775
        %v4054 = vunpack.c.h.b16 %v3775
        %v4055 = vunpack.c.l.b16 %v3776
        %v4056 = vunpack.c.h.b16 %v3776
        %v4057 = vunpack.c.l.b16 %v3777
        %v4058 = vunpack.c.h.b16 %v3777
        %v4059 = vunpack.c.l.b16 %v3778
        %v4060 = vunpack.c.h.b16 %v3778
        %v4061 = vunpack.c.l.b16 %v3779
        %v4062 = vunpack.c.h.b16 %v3779
        %v4063 = vunpack.c.l.b16 %v3780
        %v4064 = vunpack.c.h.b16 %v3780
        %v4065 = vunpack.c.l.b16 %v3781
        %v4066 = vunpack.c.h.b16 %v3781
        %v4067 = vunpack.c.l.b16 %v3782
        %v4068 = vunpack.c.h.b16 %v3782
        %v4069 = vunpack.c.l.b16 %v3783
        %v4070 = vunpack.c.h.b16 %v3783
        %v4071 = vunpack.c.l.b16 %v3784
        %v4072 = vunpack.c.h.b16 %v3784
        %v4073 = vunpack.c.l.b16 %v3785
        %v4074 = vunpack.c.h.b16 %v3785
        %v4075 = vunpack.c.l.b16 %v3786
        %v4076 = vunpack.c.h.b16 %v3786
        %v4077 = vunpack.c.l.b16 %v3787
        %v4078 = vunpack.c.h.b16 %v3787
        %v4079 = vunpack.c.l.b16 %v3788
        %v4080 = vunpack.c.h.b16 %v3788
        %v4081 = vunpack.c.l.b16 %v3789
        %v4082 = vunpack.c.h.b16 %v3789
        %v4083 = vunpack.c.l.b16 %v3790
        %v4084 = vunpack.c.h.b16 %v3790
        %v4085 = vunpack.c.l.b16 %v3791
        %v4086 = vunpack.c.h.b16 %v3791
        %v4087 = vunpack.c.l.b16 %v3792
        %v4088 = vunpack.c.h.b16 %v3792
        %v4089 = vunpack.c.l.b16 %v3793
        %v4090 = vunpack.c.h.b16 %v3793
        %v4091 = vunpack.c.l.b16 %v3794
        %v4092 = vunpack.c.h.b16 %v3794
        %v4093 = vunpack.c.l.b16 %v3795
        %v4094 = vunpack.c.h.b16 %v3795
        %v4095 = vunpack.c.l.b16 %v3796
        %v4096 = vunpack.c.h.b16 %v3796
        %v4097 = vunpack.c.l.b16 %v3797
        %v4098 = vunpack.c.h.b16 %v3797
        %v4099 = vunpack.c.l.b16 %v3798
        %v4100 = vunpack.c.h.b16 %v3798
        %v4101 = vunpack.c.l.b16 %v3799
        %v4102 = vunpack.c.h.b16 %v3799
        %v4103 = vunpack.c.l.b16 %v3800
        %v4104 = vunpack.c.h.b16 %v3800
        %v4105 = vunpack.c.l.b16 %v3801
        %v4106 = vunpack.c.h.b16 %v3801
        %v4107 = vunpack.c.l.b16 %v3802
        %v4108 = vunpack.c.h.b16 %v3802
        %v4109 = vunpack.c.l.b16 %v3803
        %v4110 = vunpack.c.h.b16 %v3803
        %v4111 = vunpack.c.l.b16 %v3804
        %v4112 = vunpack.c.h.b16 %v3804
        %v4113 = vunpack.c.l.b16 %v3805
        %v4114 = vunpack.c.h.b16 %v3805
        %v4115 = vunpack.c.l.b16 %v3806
        %v4116 = vunpack.c.h.b16 %v3806
        %v4117 = vunpack.c.l.b16 %v3807
        %v4118 = vunpack.c.h.b16 %v3807
        %v4119 = vunpack.c.l.b16 %v3808
        %v4120 = vunpack.c.h.b16 %v3808
        %v4121 = vunpack.c.l.b16 %v3809
        %v4122 = vunpack.c.h.b16 %v3809
        %v4123 = vunpack.c.l.b16 %v3810
        %v4124 = vunpack.c.h.b16 %v3810
        %v4125 = vunpack.c.l.b16 %v3811
        %v4126 = vunpack.c.h.b16 %v3811
        %v4127 = vunpack.c.l.b16 %v3812
        %v4128 = vunpack.c.h.b16 %v3812
        %v4129 = vunpack.c.l.b16 %v3813
        %v4130 = vunpack.c.h.b16 %v3813
        %v4131 = vunpack.c.l.b16 %v3814
        %v4132 = vunpack.c.h.b16 %v3814
        %v4133 = vunpack.c.l.b16 %v3815
        %v4134 = vunpack.c.h.b16 %v3815
        %v4135 = vunpack.c.l.b16 %v3816
        %v4136 = vunpack.c.h.b16 %v3816
        %v4137 = vunpack.c.l.b16 %v3817
        %v4138 = vunpack.c.h.b16 %v3817
        %v4139 = vunpack.c.l.b16 %v3818
        %v4140 = vunpack.c.h.b16 %v3818
        %v4141 = vunpack.c.l.b16 %v3819
        %v4142 = vunpack.c.h.b16 %v3819
        %v4143 = vunpack.c.l.b16 %v3820
        %v4144 = vunpack.c.h.b16 %v3820
        %v4145 = vunpack.c.l.b16 %v3821
        %v4146 = vunpack.c.h.b16 %v3821
        %v4147 = vunpack.c.l.b16 %v3822
        %v4148 = vunpack.c.h.b16 %v3822
        %v4149 = vunpack.c.l.b16 %v3823
        %v4150 = vunpack.c.h.b16 %v3823
        %v4151 = vunpack.c.l.b16 %v3824
        %v4152 = vunpack.c.h.b16 %v3824
        %v4153 = vunpack.c.l.b16 %v3825
        %v4154 = vunpack.c.h.b16 %v3825
        %v4155 = vunpack.c.l.b16 %v3826
        %v4156 = vunpack.c.h.b16 %v3826
        %v4157 = vunpack.c.l.b16 %v3827
        %v4158 = vunpack.c.h.b16 %v3827
        %v4159 = vunpack.c.l.b16 %v3828
        %v4160 = vunpack.c.h.b16 %v3828
        %v4161 = vunpack.c.l.b16 %v3829
        %v4162 = vunpack.c.h.b16 %v3829
        %v4163 = vunpack.c.l.b16 %v3830
        %v4164 = vunpack.c.h.b16 %v3830
        %v4165 = vunpack.c.l.b16 %v3831
        %v4166 = vunpack.c.h.b16 %v3831
        %v4167 = vunpack.c.l.b16 %v3832
        %v4168 = vunpack.c.h.b16 %v3832
        %v4169 = vunpack.c.l.b16 %v3833
        %v4170 = vunpack.c.h.b16 %v3833
        %v4171 = vunpack.c.l.b16 %v3834
        %v4172 = vunpack.c.h.b16 %v3834
        %v4173 = vunpack.c.l.b16 %v3835
        %v4174 = vunpack.c.h.b16 %v3835
        %v4175 = vunpack.c.l.b16 %v3836
        %v4176 = vunpack.c.h.b16 %v3836
        %v4177 = vunpack.c.l.b16 %v3837
        %v4178 = vunpack.c.h.b16 %v3837
        %v4179 = vunpack.c.l.b16 %v3838
        %v4180 = vunpack.c.h.b16 %v3838
        %v4181 = vunpack.c.l.b16 %v3839
        %v4182 = vunpack.c.h.b16 %v3839
        %v4183 = vunpack.c.l.b16 %v3840
        %v4184 = vunpack.c.h.b16 %v3840
        %v4185 = vunpack.c.l.b16 %v3841
        %v4186 = vunpack.c.h.b16 %v3841
        %v4187 = vunpack.c.l.b16 %v3842
        %v4188 = vunpack.c.h.b16 %v3842
        %v4189 = vunpack.c.l.b16 %v3843
        %v4190 = vunpack.c.h.b16 %v3843
        %v4191 = vunpack.c.l.b16 %v3844
        %v4192 = vunpack.c.h.b16 %v3844
        %v4193 = vunpack.c.l.b16 %v3845
        %v4194 = vunpack.c.h.b16 %v3845
        %v4195 = vunpack.c.l.b16 %v3846
        %v4196 = vunpack.c.h.b16 %v3846
        %v4197 = vunpack.c.l.b16 %v3847
        %v4198 = vunpack.c.h.b16 %v3847
        %v4199 = vunpack.c.l.b16 %v3848
        %v4200 = vunpack.c.h.b16 %v3848
        %v4201 = vunpack.c.l.b16 %v3849
        %v4202 = vunpack.c.h.b16 %v3849
        %v4203 = vunpack.c.l.b16 %v3850
        %v4204 = vunpack.c.h.b16 %v3850
        %v4205 = vunpack.c.l.b16 %v3851
        %v4206 = vunpack.c.h.b16 %v3851
        %v4207 = vunpack.c.l.b16 %v3852
        %v4208 = vunpack.c.h.b16 %v3852
        %v4209 = vunpack.c.l.b16 %v3853
        %v4210 = vunpack.c.h.b16 %v3853
        %v4211 = vunpack.c.l.b16 %v3854
        %v4212 = vunpack.c.h.b16 %v3854
        %v4213 = vunpack.c.l.b16 %v3855
        %v4214 = vunpack.c.h.b16 %v3855
        %v4215 = vunpack.c.l.b16 %v3856
        %v4216 = vunpack.c.h.b16 %v3856
        %v4217 = vunpack.c.l.b16 %v3857
        %v4218 = vunpack.c.h.b16 %v3857
        %v4219 = vunpack.c.l.b16 %v3858
        %v4220 = vunpack.c.h.b16 %v3858
        %v4221 = vunpack.c.l.b16 %v3859
        %v4222 = vunpack.c.h.b16 %v3859
        %v4223 = vunpack.c.l.b16 %v3860
        %v4224 = vunpack.c.h.b16 %v3860
        %v4225 = vunpack.c.l.b16 %v3861
        %v4226 = vunpack.c.h.b16 %v3861
        %v4227 = vunpack.c.l.b16 %v3862
        %v4228 = vunpack.c.h.b16 %v3862
        %v4229 = vunpack.c.l.b16 %v3863
        %v4230 = vunpack.c.h.b16 %v3863
        %v4231 = vunpack.c.l.b16 %v3864
        %v4232 = vunpack.c.h.b16 %v3864
        %v4233 = vunpack.c.l.b16 %v3865
        %v4234 = vunpack.c.h.b16 %v3865
        %v4235 = vunpack.c.l.b16 %v3866
        %v4236 = vunpack.c.h.b16 %v3866
        %v4237 = vunpack.c.l.b16 %v3867
        %v4238 = vunpack.c.h.b16 %v3867
        %v4239 = vunpack.c.l.b16 %v3868
        %v4240 = vunpack.c.h.b16 %v3868
        %v4241 = vunpack.c.l.b16 %v3869
        %v4242 = vunpack.c.h.b16 %v3869
        %v4243 = vunpack.c.l.b16 %v3870
        %v4244 = vunpack.c.h.b16 %v3870
        %v4245 = vunpack.c.l.b16 %v3871
        %v4246 = vunpack.c.h.b16 %v3871
        %v4247 = vunpack.c.l.b16 %v3872
        %v4248 = vunpack.c.h.b16 %v3872
        %v4249 = vunpack.c.l.b16 %v3873
        %v4250 = vunpack.c.h.b16 %v3873
        %v4251 = vunpack.c.l.b16 %v3874
        %v4252 = vunpack.c.h.b16 %v3874
        %v4253 = vunpack.c.l.b16 %v3875
        %v4254 = vunpack.c.h.b16 %v3875
        %v4255 = vunpack.c.l.b16 %v3876
        %v4256 = vunpack.c.h.b16 %v3876
        %v4257 = vunpack.c.l.b16 %v3877
        %v4258 = vunpack.c.h.b16 %v3877
        %v4259 = vunpack.c.l.b16 %v3878
        %v4260 = vunpack.c.h.b16 %v3878
        %v4261 = vunpack.c.l.b16 %v3879
        %v4262 = vunpack.c.h.b16 %v3879
        %v4263 = vunpack.c.l.b16 %v3880
        %v4264 = vunpack.c.h.b16 %v3880
        %v4265 = vunpack.c.l.b16 %v3881
        %v4266 = vunpack.c.h.b16 %v3881
        %v4267 = vunpack.c.l.b16 %v3882
        %v4268 = vunpack.c.h.b16 %v3882
        %v4269 = vunpack.c.l.b16 %v3883
        %v4270 = vunpack.c.h.b16 %v3883
        %v4271 = vunpack.c.l.b16 %v3884
        %v4272 = vunpack.c.h.b16 %v3884
        %v4273 = vunpack.c.l.b16 %v3885
        %v4274 = vunpack.c.h.b16 %v3885
        %v4275 = vunpack.c.l.b16 %v3886
        %v4276 = vunpack.c.h.b16 %v3886
        %v4277 = vunpack.c.l.b16 %v3887
        %v4278 = vunpack.c.h.b16 %v3887
        %v4279 = vunpack.c.l.b16 %v3888
        %v4280 = vunpack.c.h.b16 %v3888
        %v4281 = vunpack.c.l.b16 %v3889
        %v4282 = vunpack.c.h.b16 %v3889
        %v4283 = vunpack.c.l.b16 %v3890
        %v4284 = vunpack.c.h.b16 %v3890
        %v4285 = vunpack.c.l.b16 %v3891
        %v4286 = vunpack.c.h.b16 %v3891
        %v4287 = vunpack.c.l.b16 %v3892
        %v4288 = vunpack.c.h.b16 %v3892
        %v4289 = vunpack.c.l.b16 %v3893
        %v4290 = vunpack.c.h.b16 %v3893
        %v4291 = vpack.c.b16 %v4037, %v4035
        %v4292 = vpack.c.b16 %v4038, %v4036
        %v4293 = vpack.c.b16 %v4041, %v4039
        %v4294 = vpack.c.b16 %v4042, %v4040
        %v4295 = vpack.c.b16 %v4045, %v4043
        %v4296 = vpack.c.b16 %v4046, %v4044
        %v4297 = vpack.c.b16 %v4049, %v4047
        %v4298 = vpack.c.b16 %v4050, %v4048
        %v4299 = vpack.c.b16 %v4053, %v4051
        %v4300 = vpack.c.b16 %v4054, %v4052
        %v4301 = vpack.c.b16 %v4057, %v4055
        %v4302 = vpack.c.b16 %v4058, %v4056
        %v4303 = vpack.c.b16 %v4061, %v4059
        %v4304 = vpack.c.b16 %v4062, %v4060
        %v4305 = vpack.c.b16 %v4065, %v4063
        %v4306 = vpack.c.b16 %v4066, %v4064
        %v4307 = vpack.c.b16 %v4069, %v4067
        %v4308 = vpack.c.b16 %v4070, %v4068
        %v4309 = vpack.c.b16 %v4073, %v4071
        %v4310 = vpack.c.b16 %v4074, %v4072
        %v4311 = vpack.c.b16 %v4077, %v4075
        %v4312 = vpack.c.b16 %v4078, %v4076
        %v4313 = vpack.c.b16 %v4081, %v4079
        %v4314 = vpack.c.b16 %v4082, %v4080
        %v4315 = vpack.c.b16 %v4085, %v4083
        %v4316 = vpack.c.b16 %v4086, %v4084
        %v4317 = vpack.c.b16 %v4089, %v4087
        %v4318 = vpack.c.b16 %v4090, %v4088
        %v4319 = vpack.c.b16 %v4093, %v4091
        %v4320 = vpack.c.b16 %v4094, %v4092
        %v4321 = vpack.c.b16 %v4097, %v4095
        %v4322 = vpack.c.b16 %v4098, %v4096
        %v4323 = vpack.c.b16 %v4101, %v4099
        %v4324 = vpack.c.b16 %v4102, %v4100
        %v4325 = vpack.c.b16 %v4105, %v4103
        %v4326 = vpack.c.b16 %v4106, %v4104
        %v4327 = vpack.c.b16 %v4109, %v4107
        %v4328 = vpack.c.b16 %v4110, %v4108
        %v4329 = vpack.c.b16 %v4113, %v4111
        %v4330 = vpack.c.b16 %v4114, %v4112
        %v4331 = vpack.c.b16 %v4117, %v4115
        %v4332 = vpack.c.b16 %v4118, %v4116
        %v4333 = vpack.c.b16 %v4121, %v4119
        %v4334 = vpack.c.b16 %v4122, %v4120
        %v4335 = vpack.c.b16 %v4125, %v4123
        %v4336 = vpack.c.b16 %v4126, %v4124
        %v4337 = vpack.c.b16 %v4129, %v4127
        %v4338 = vpack.c.b16 %v4130, %v4128
        %v4339 = vpack.c.b16 %v4133, %v4131
        %v4340 = vpack.c.b16 %v4134, %v4132
        %v4341 = vpack.c.b16 %v4137, %v4135
        %v4342 = vpack.c.b16 %v4138, %v4136
        %v4343 = vpack.c.b16 %v4141, %v4139
        %v4344 = vpack.c.b16 %v4142, %v4140
        %v4345 = vpack.c.b16 %v4145, %v4143
        %v4346 = vpack.c.b16 %v4146, %v4144
        %v4347 = vpack.c.b16 %v4149, %v4147
        %v4348 = vpack.c.b16 %v4150, %v4148
        %v4349 = vpack.c.b16 %v4153, %v4151
        %v4350 = vpack.c.b16 %v4154, %v4152
        %v4351 = vpack.c.b16 %v4157, %v4155
        %v4352 = vpack.c.b16 %v4158, %v4156
        %v4353 = vpack.c.b16 %v4161, %v4159
        %v4354 = vpack.c.b16 %v4162, %v4160
        %v4355 = vpack.c.b16 %v4165, %v4163
        %v4356 = vpack.c.b16 %v4166, %v4164
        %v4357 = vpack.c.b16 %v4169, %v4167
        %v4358 = vpack.c.b16 %v4170, %v4168
        %v4359 = vpack.c.b16 %v4173, %v4171
        %v4360 = vpack.c.b16 %v4174, %v4172
        %v4361 = vpack.c.b16 %v4177, %v4175
        %v4362 = vpack.c.b16 %v4178, %v4176
        %v4363 = vpack.c.b16 %v4181, %v4179
        %v4364 = vpack.c.b16 %v4182, %v4180
        %v4365 = vpack.c.b16 %v4185, %v4183
        %v4366 = vpack.c.b16 %v4186, %v4184
        %v4367 = vpack.c.b16 %v4189, %v4187
        %v4368 = vpack.c.b16 %v4190, %v4188
        %v4369 = vpack.c.b16 %v4193, %v4191
        %v4370 = vpack.c.b16 %v4194, %v4192
        %v4371 = vpack.c.b16 %v4197, %v4195
        %v4372 = vpack.c.b16 %v4198, %v4196
        %v4373 = vpack.c.b16 %v4201, %v4199
        %v4374 = vpack.c.b16 %v4202, %v4200
        %v4375 = vpack.c.b16 %v4205, %v4203
        %v4376 = vpack.c.b16 %v4206, %v4204
        %v4377 = vpack.c.b16 %v4209, %v4207
        %v4378 = vpack.c.b16 %v4210, %v4208
        %v4379 = vpack.c.b16 %v4213, %v4211
        %v4380 = vpack.c.b16 %v4214, %v4212
        %v4381 = vpack.c.b16 %v4217, %v4215
        %v4382 = vpack.c.b16 %v4218, %v4216
        %v4383 = vpack.c.b16 %v4221, %v4219
        %v4384 = vpack.c.b16 %v4222, %v4220
        %v4385 = vpack.c.b16 %v4225, %v4223
        %v4386 = vpack.c.b16 %v4226, %v4224
        %v4387 = vpack.c.b16 %v4229, %v4227
        %v4388 = vpack.c.b16 %v4230, %v4228
        %v4389 = vpack.c.b16 %v4233, %v4231
        %v4390 = vpack.c.b16 %v4234, %v4232
        %v4391 = vpack.c.b16 %v4237, %v4235
        %v4392 = vpack.c.b16 %v4238, %v4236
        %v4393 = vpack.c.b16 %v4241, %v4239
        %v4394 = vpack.c.b16 %v4242, %v4240
        %v4395 = vpack.c.b16 %v4245, %v4243
        %v4396 = vpack.c.b16 %v4246, %v4244
        %v4397 = vpack.c.b16 %v4249, %v4247
        %v4398 = vpack.c.b16 %v4250, %v4248
        %v4399 = vpack.c.b16 %v4253, %v4251
        %v4400 = vpack.c.b16 %v4254, %v4252
        %v4401 = vpack.c.b16 %v4257, %v4255
        %v4402 = vpack.c.b16 %v4258, %v4256
        %v4403 = vpack.c.b16 %v4261, %v4259
        %v4404 = vpack.c.b16 %v4262, %v4260
        %v4405 = vpack.c.b16 %v4265, %v4263
        %v4406 = vpack.c.b16 %v4266, %v4264
        %v4407 = vpack.c.b16 %v4269, %v4267
        %v4408 = vpack.c.b16 %v4270, %v4268
        %v4409 = vpack.c.b16 %v4273, %v4271
        %v4410 = vpack.c.b16 %v4274, %v4272
        %v4411 = vpack.c.b16 %v4277, %v4275
        %v4412 = vpack.c.b16 %v4278, %v4276
        %v4413 = vpack.c.b16 %v4281, %v4279
        %v4414 = vpack.c.b16 %v4282, %v4280
        %v4415 = vpack.c.b16 %v4285, %v4283
        %v4416 = vpack.c.b16 %v4286, %v4284
        %v4417 = vpack.c.b16 %v4289, %v4287
        %v4418 = vpack.c.b16 %v4290, %v4288
        %4547 = vmatprep.subr.bf16.mxu0 %v4292
        %4548 = vmatpush1.bf16.msra.mxu0 %v4291
        %4549 = vmatprep.subr.bf16.mxu0 %v4294
        %4550 = vmatpush1.bf16.msra.mxu0 %v4293
        %4551 = vmatprep.subr.bf16.mxu0 %v4296
        %4552 = vmatpush1.bf16.msra.mxu0 %v4295
        %4553 = vmatprep.subr.bf16.mxu0 %v4298
        %4554 = vmatpush1.bf16.msra.mxu0 %v4297
        %4555 = vmatprep.subr.bf16.mxu0 %v4300
        %4556 = vmatpush1.bf16.msra.mxu0 %v4299
        %4557 = vmatprep.subr.bf16.mxu0 %v4302
        %4558 = vmatpush1.bf16.msra.mxu0 %v4301
        %4559 = vmatprep.subr.bf16.mxu0 %v4304
        %4560 = vmatpush1.bf16.msra.mxu0 %v4303
        %4561 = vmatprep.subr.bf16.mxu0 %v4306
        %4562 = vmatpush1.bf16.msra.mxu0 %v4305
        %4563 = vmatprep.subr.bf16.mxu0 %v4308
        %4564 = vmatpush1.bf16.msra.mxu0 %v4307
        %4565 = vmatprep.subr.bf16.mxu0 %v4310
        %4566 = vmatpush1.bf16.msra.mxu0 %v4309
        %4567 = vmatprep.subr.bf16.mxu0 %v4312
        %4568 = vmatpush1.bf16.msra.mxu0 %v4311
        %4569 = vmatprep.subr.bf16.mxu0 %v4314
        %4570 = vmatpush1.bf16.msra.mxu0 %v4313
        %4571 = vmatprep.subr.bf16.mxu0 %v4316
        %4572 = vmatpush1.bf16.msra.mxu0 %v4315
        %4573 = vmatprep.subr.bf16.mxu0 %v4318
        %4574 = vmatpush1.bf16.msra.mxu0 %v4317
        %4575 = vmatprep.subr.bf16.mxu0 %v4320
        %4576 = vmatpush1.bf16.msra.mxu0 %v4319
        %4577 = vmatprep.subr.bf16.mxu0 %v4322
        %4578 = vmatpush1.bf16.msra.mxu0 %v4321
        %4579 = vmatprep.mubr.bf16.mxu0 %v3757
        %4580 = vmatmul.mubr.bf16.gmra.mrb[0].mxu0 %v3756
        %v4581 = vpop.f32.mrb[0].mxu0
        %v4582 = vadd.f32 %v3900, %v4581
        %v4583 = vpop.f32.mrb[0].mxu0
        %v4584 = vadd.f32 %v3904, %v4583
        %v4585 = vpop.f32.mrb[0].mxu0
        %v4586 = vadd.f32 %v3900, %v4585
        %v4587 = vpop.f32.mrb[0].mxu0
        %v4588 = vadd.f32 %v3904, %v4587
        %4589 = vdwg.mxu0
        %4590 = vmatprep.subr.bf16.mxu0 %v4324
        %4591 = vmatpush1.bf16.msra.mxu0 %v4323
        %4592 = vmatprep.subr.bf16.mxu0 %v4326
        %4593 = vmatpush1.bf16.msra.mxu0 %v4325
        %4594 = vmatprep.subr.bf16.mxu0 %v4328
        %4595 = vmatpush1.bf16.msra.mxu0 %v4327
        %4596 = vmatprep.subr.bf16.mxu0 %v4330
        %4597 = vmatpush1.bf16.msra.mxu0 %v4329
        %4598 = vmatprep.subr.bf16.mxu0 %v4332
        %4599 = vmatpush1.bf16.msra.mxu0 %v4331
        %4600 = vmatprep.subr.bf16.mxu0 %v4334
        %4601 = vmatpush1.bf16.msra.mxu0 %v4333
        %4602 = vmatprep.subr.bf16.mxu0 %v4336
        %4603 = vmatpush1.bf16.msra.mxu0 %v4335
        %4604 = vmatprep.subr.bf16.mxu0 %v4338
        %4605 = vmatpush1.bf16.msra.mxu0 %v4337
        %4606 = vmatprep.subr.bf16.mxu0 %v4340
        %4607 = vmatpush1.bf16.msra.mxu0 %v4339
        %4608 = vmatprep.subr.bf16.mxu0 %v4342
        %4609 = vmatpush1.bf16.msra.mxu0 %v4341
        %4610 = vmatprep.subr.bf16.mxu0 %v4344
        %4611 = vmatpush1.bf16.msra.mxu0 %v4343
        %4612 = vmatprep.subr.bf16.mxu0 %v4346
        %4613 = vmatpush1.bf16.msra.mxu0 %v4345
        %4614 = vmatprep.subr.bf16.mxu0 %v4348
        %4615 = vmatpush1.bf16.msra.mxu0 %v4347
        %4616 = vmatprep.subr.bf16.mxu0 %v4350
        %4617 = vmatpush1.bf16.msra.mxu0 %v4349
        %4618 = vmatprep.subr.bf16.mxu0 %v4352
        %4619 = vmatpush1.bf16.msra.mxu0 %v4351
        %4620 = vmatprep.subr.bf16.mxu0 %v4354
        %4621 = vmatpush1.bf16.msra.mxu0 %v4353
        %4622 = vmatprep.mubr.bf16.mxu0 %v3759
        %4623 = vmatmul.mubr.bf16.gmra.mrb[0].mxu0 %v3758
        %v4624 = vpop.f32.mrb[0].mxu0
        %v4625 = vadd.f32 %v4582, %v4624
        %v4626 = vpop.f32.mrb[0].mxu0
        %v4627 = vadd.f32 %v4584, %v4626
        %v4628 = vpop.f32.mrb[0].mxu0
        %v4629 = vadd.f32 %v4586, %v4628
        %v4630 = vpop.f32.mrb[0].mxu0
        %v4631 = vadd.f32 %v4588, %v4630
        %4632 = vdwg.mxu0
        %4633 = vmatprep.subr.bf16.mxu0 %v4356
        %4634 = vmatpush1.bf16.msra.mxu0 %v4355
        %4635 = vmatprep.subr.bf16.mxu0 %v4358
        %4636 = vmatpush1.bf16.msra.mxu0 %v4357
        %4637 = vmatprep.subr.bf16.mxu0 %v4360
        %4638 = vmatpush1.bf16.msra.mxu0 %v4359
        %4639 = vmatprep.subr.bf16.mxu0 %v4362
        %4640 = vmatpush1.bf16.msra.mxu0 %v4361
        %4641 = vmatprep.subr.bf16.mxu0 %v4364
        %4642 = vmatpush1.bf16.msra.mxu0 %v4363
        %4643 = vmatprep.subr.bf16.mxu0 %v4366
        %4644 = vmatpush1.bf16.msra.mxu0 %v4365
        %4645 = vmatprep.subr.bf16.mxu0 %v4368
        %4646 = vmatpush1.bf16.msra.mxu0 %v4367
        %4647 = vmatprep.subr.bf16.mxu0 %v4370
        %4648 = vmatpush1.bf16.msra.mxu0 %v4369
        %4649 = vmatprep.subr.bf16.mxu0 %v4372
        %4650 = vmatpush1.bf16.msra.mxu0 %v4371
        %4651 = vmatprep.subr.bf16.mxu0 %v4374
        %4652 = vmatpush1.bf16.msra.mxu0 %v4373
        %4653 = vmatprep.subr.bf16.mxu0 %v4376
        %4654 = vmatpush1.bf16.msra.mxu0 %v4375
        %4655 = vmatprep.subr.bf16.mxu0 %v4378
        %4656 = vmatpush1.bf16.msra.mxu0 %v4377
        %4657 = vmatprep.subr.bf16.mxu0 %v4380
        %4658 = vmatpush1.bf16.msra.mxu0 %v4379
        %4659 = vmatprep.subr.bf16.mxu0 %v4382
        %4660 = vmatpush1.bf16.msra.mxu0 %v4381
        %4661 = vmatprep.subr.bf16.mxu0 %v4384
        %4662 = vmatpush1.bf16.msra.mxu0 %v4383
        %4663 = vmatprep.subr.bf16.mxu0 %v4386
        %4664 = vmatpush1.bf16.msra.mxu0 %v4385
        %4665 = vmatprep.mubr.bf16.mxu0 %v3761
        %4666 = vmatmul.mubr.bf16.gmra.mrb[0].mxu0 %v3760
        %v4667 = vpop.f32.mrb[0].mxu0
        %v4668 = vadd.f32 %v4625, %v4667
        %v4669 = vpop.f32.mrb[0].mxu0
        %v4670 = vadd.f32 %v4627, %v4669
        %v4671 = vpop.f32.mrb[0].mxu0
        %v4672 = vadd.f32 %v4629, %v4671
        %v4673 = vpop.f32.mrb[0].mxu0
        %v4674 = vadd.f32 %v4631, %v4673
        %4675 = vdwg.mxu0
        %4676 = vmatprep.subr.bf16.mxu0 %v4388
        %4677 = vmatpush1.bf16.msra.mxu0 %v4387
        %4678 = vmatprep.subr.bf16.mxu0 %v4390
        %4679 = vmatpush1.bf16.msra.mxu0 %v4389
        %4680 = vmatprep.subr.bf16.mxu0 %v4392
        %4681 = vmatpush1.bf16.msra.mxu0 %v4391
        %4682 = vmatprep.subr.bf16.mxu0 %v4394
        %4683 = vmatpush1.bf16.msra.mxu0 %v4393
        %4684 = vmatprep.subr.bf16.mxu0 %v4396
        %4685 = vmatpush1.bf16.msra.mxu0 %v4395
        %4686 = vmatprep.subr.bf16.mxu0 %v4398
        %4687 = vmatpush1.bf16.msra.mxu0 %v4397
        %4688 = vmatprep.subr.bf16.mxu0 %v4400
        %4689 = vmatpush1.bf16.msra.mxu0 %v4399
        %4690 = vmatprep.subr.bf16.mxu0 %v4402
        %4691 = vmatpush1.bf16.msra.mxu0 %v4401
        %4692 = vmatprep.subr.bf16.mxu0 %v4404
        %4693 = vmatpush1.bf16.msra.mxu0 %v4403
        %4694 = vmatprep.subr.bf16.mxu0 %v4406
        %4695 = vmatpush1.bf16.msra.mxu0 %v4405
        %4696 = vmatprep.subr.bf16.mxu0 %v4408
        %4697 = vmatpush1.bf16.msra.mxu0 %v4407
        %4698 = vmatprep.subr.bf16.mxu0 %v4410
        %4699 = vmatpush1.bf16.msra.mxu0 %v4409
        %4700 = vmatprep.subr.bf16.mxu0 %v4412
        %4701 = vmatpush1.bf16.msra.mxu0 %v4411
        %4702 = vmatprep.subr.bf16.mxu0 %v4414
        %4703 = vmatpush1.bf16.msra.mxu0 %v4413
        %4704 = vmatprep.subr.bf16.mxu0 %v4416
        %4705 = vmatpush1.bf16.msra.mxu0 %v4415
        %4706 = vmatprep.subr.bf16.mxu0 %v4418
        %4707 = vmatpush1.bf16.msra.mxu0 %v4417
        %4708 = vmatprep.mubr.bf16.mxu0 %v3763
        %4709 = vmatmul.mubr.bf16.gmra.mrb[0].mxu0 %v3762
        %v4710 = vpop.f32.mrb[0].mxu0
        %v4711 = vadd.f32 %v4668, %v4710
        %v4712 = vpop.f32.mrb[0].mxu0
        %v4713 = vadd.f32 %v4670, %v4712
        %v4714 = vpop.f32.mrb[0].mxu0
        %v4715 = vadd.f32 %v4672, %v4714
        %v4716 = vpop.f32.mrb[0].mxu0
        %v4717 = vadd.f32 %v4674, %v4716
        %4718 = vdwg.mxu0
        %v4719 = vadd.f32 %v2549, %v4711
        %v4720 = vadd.f32 %v2550, %v4713
        %v4721 = vadd.f32 %v2551, %v4715
        %v4722 = vadd.f32 %v2552, %v4717
        %4723 = vst [vmem:[#allocation2] sm:$0xff] %v4719
        %4724 = vst [vmem:[#allocation2 + $0x8] sm:$0xff] %v4720
        %4725 = vst [vmem:[#allocation2 + $0x10] sm:$0xf] %v4721
        %4726 = vst [vmem:[#allocation2 + $0x18] sm:$0xf] %v4722
        %p4727 = scmp.eq.s32.totalorder %s39, 3
        // Predicated region
        $region141: #{biot_forward.3} parent=79 // pred_check
          %p4728 = pneg %p4727
        $region142: #{biot_forward.3} parent=79 // pred_check_branch
          %4730 = sbr.rel (%p4728) target = $region144
        $region143: #{biot_forward.3} parent=79 // pred_region
          %v4731 = vsel %vm797, %v4721, 0.0
          %v4732 = vadd.f32 %v4719, %v4731
          %v4733 = vrot.slane %v4732, 4
          %v4734 = vadd.f32 %v4732, %v4733
          %v4735 = vrot.slane %v4734, 2
          %v4736 = vadd.f32 %v4734, %v4735
          %v4737 = vrot.slane %v4736, 1
          %v4738 = vadd.f32 %v4736, %v4737
          %v4739 = vsel %vm797, %v4722, 0.0
          %v4740 = vadd.f32 %v4720, %v4739
          %v4741 = vrot.slane %v4740, 4
          %v4742 = vadd.f32 %v4740, %v4741
          %v4743 = vrot.slane %v4742, 2
          %v4744 = vadd.f32 %v4742, %v4743
          %v4745 = vrot.slane %v4744, 1
          %v4746 = vadd.f32 %v4744, %v4745
          %v4747 = vrcp.pop 12.0
          %v4748 = vmul.f32 %v4738, %v4747
          %v4749 = vmul.f32 %v4746, %v4747
          %vm4750 = vcmp.gt.f32.partialorder %v4748, 0.0
          %vm4751 = vcmp.gt.f32.partialorder %v4749, 0.0
          %v4752 = vmul.f32 %v4748, 1.442695
          %v4753 = vpow.pop %v4752
          %v4754 = vmul.f32 %v4749, 1.442695
          %v4755 = vpow.pop %v4754
          %v4756 = vsub.f32 %v4753, 1.0
          %v4757 = vsub.f32 %v4755, 1.0
          %v4758 = vsel %vm4750, %v4748, %v4756
          %v4759 = vsel %vm4751, %v4749, %v4757
          %v4760 = vld [vmem:[#allocation22] sm:$0xff]
          %v4761 = vld [vmem:[#allocation22 + $0x8] sm:$0xff]
          %v4762 = vld [vmem:[#allocation22 + $0x10] sm:$0xff]
          %v4763 = vld [vmem:[#allocation22 + $0x18] sm:$0xff]
          %v4764 = vld [vmem:[#allocation22 + $0x20] sm:$0xff]
          %v4765 = vld [vmem:[#allocation22 + $0x28] sm:$0xff]
          %v4766 = vld [vmem:[#allocation22 + $0x30] sm:$0xff]
          %v4767 = vld [vmem:[#allocation22 + $0x38] sm:$0xff]
          %v4768 = vld [vmem:[#allocation22 + $0x40] sm:$0xff]
          %v4769 = vld [vmem:[#allocation22 + $0x48] sm:$0xff]
          %v4770 = vld [vmem:[#allocation22 + $0x50] sm:$0xff]
          %v4771 = vld [vmem:[#allocation22 + $0x58] sm:$0xff]
          %v4772 = vld [vmem:[#allocation22 + $0x60] sm:$0xff]
          %v4773 = vld [vmem:[#allocation22 + $0x68] sm:$0xff]
          %v4774 = vld [vmem:[#allocation22 + $0x70] sm:$0xff]
          %v4775 = vld [vmem:[#allocation22 + $0x78] sm:$0xff]
          %v4776 = vld [vmem:[#allocation22 + $0x80] sm:$0xff]
          %v4777 = vld [vmem:[#allocation22 + $0x88] sm:$0xff]
          %v4778 = vld [vmem:[#allocation22 + $0x90] sm:$0xff]
          %v4779 = vld [vmem:[#allocation22 + $0x98] sm:$0xff]
          %v4780 = vld [vmem:[#allocation22 + $0xa0] sm:$0xff]
          %v4781 = vld [vmem:[#allocation22 + $0xa8] sm:$0xff]
          %v4782 = vld [vmem:[#allocation22 + $0xb0] sm:$0xff]
          %v4783 = vld [vmem:[#allocation22 + $0xb8] sm:$0xff]
          %v4784 = vld [vmem:[#allocation22 + $0xc0] sm:$0xff]
          %v4785 = vld [vmem:[#allocation22 + $0xc8] sm:$0xff]
          %v4786 = vld [vmem:[#allocation22 + $0xd0] sm:$0xff]
          %v4787 = vld [vmem:[#allocation22 + $0xd8] sm:$0xff]
          %v4788 = vld [vmem:[#allocation22 + $0xe0] sm:$0xff]
          %v4789 = vld [vmem:[#allocation22 + $0xe8] sm:$0xff]
          %v4790 = vld [vmem:[#allocation22 + $0xf0] sm:$0xff]
          %v4791 = vld [vmem:[#allocation22 + $0xf8] sm:$0xff]
          %v4792 = vld [vmem:[#allocation23] sm:$0x1]
          %4793 = vmatprep.subr.mxu0 0.0
          %4794 = vmatpush1.msra.mxu0 %v4760
          %4795 = vmatprep.subr.mxu0 0.0
          %4796 = vmatpush1.msra.mxu0 %v4761
          %4797 = vmatprep.subr.mxu0 0.0
          %4798 = vmatpush1.msra.mxu0 %v4762
          %4799 = vmatprep.subr.mxu0 0.0
          %4800 = vmatpush1.msra.mxu0 %v4763
          %4801 = vmatprep.subr.mxu0 0.0
          %4802 = vmatpush1.msra.mxu0 %v4764
          %4803 = vmatprep.subr.mxu0 0.0
          %4804 = vmatpush1.msra.mxu0 %v4765
          %4805 = vmatprep.subr.mxu0 0.0
          %4806 = vmatpush1.msra.mxu0 %v4766
          %4807 = vmatprep.subr.mxu0 0.0
          %4808 = vmatpush1.msra.mxu0 %v4767
          %4809 = vmatprep.subr.mxu0 0.0
          %4810 = vmatpush1.msra.mxu0 %v4768
          %4811 = vmatprep.subr.mxu0 0.0
          %4812 = vmatpush1.msra.mxu0 %v4769
          %4813 = vmatprep.subr.mxu0 0.0
          %4814 = vmatpush1.msra.mxu0 %v4770
          %4815 = vmatprep.subr.mxu0 0.0
          %4816 = vmatpush1.msra.mxu0 %v4771
          %4817 = vmatprep.subr.mxu0 0.0
          %4818 = vmatpush1.msra.mxu0 %v4772
          %4819 = vmatprep.subr.mxu0 0.0
          %4820 = vmatpush1.msra.mxu0 %v4773
          %4821 = vmatprep.subr.mxu0 0.0
          %4822 = vmatpush1.msra.mxu0 %v4774
          %4823 = vmatprep.subr.mxu0 0.0
          %4824 = vmatpush1.msra.mxu0 %v4775
          %4825 = vmatprep.subr.mxu0 0.0
          %4826 = vmatpush1.msra.mxu0 %v4776
          %4827 = vmatprep.subr.mxu0 0.0
          %4828 = vmatpush1.msra.mxu0 %v4777
          %4829 = vmatprep.subr.mxu0 0.0
          %4830 = vmatpush1.msra.mxu0 %v4778
          %4831 = vmatprep.subr.mxu0 0.0
          %4832 = vmatpush1.msra.mxu0 %v4779
          %4833 = vmatprep.subr.mxu0 0.0
          %4834 = vmatpush1.msra.mxu0 %v4780
          %4835 = vmatprep.subr.mxu0 0.0
          %4836 = vmatpush1.msra.mxu0 %v4781
          %4837 = vmatprep.subr.mxu0 0.0
          %4838 = vmatpush1.msra.mxu0 %v4782
          %4839 = vmatprep.subr.mxu0 0.0
          %4840 = vmatpush1.msra.mxu0 %v4783
          %4841 = vmatprep.subr.mxu0 0.0
          %4842 = vmatpush1.msra.mxu0 %v4784
          %4843 = vmatprep.subr.mxu0 0.0
          %4844 = vmatpush1.msra.mxu0 %v4785
          %4845 = vmatprep.subr.mxu0 0.0
          %4846 = vmatpush1.msra.mxu0 %v4786
          %4847 = vmatprep.subr.mxu0 0.0
          %4848 = vmatpush1.msra.mxu0 %v4787
          %4849 = vmatprep.subr.mxu0 0.0
          %4850 = vmatpush1.msra.mxu0 %v4788
          %4851 = vmatprep.subr.mxu0 0.0
          %4852 = vmatpush1.msra.mxu0 %v4789
          %4853 = vmatprep.subr.mxu0 0.0
          %4854 = vmatpush1.msra.mxu0 %v4790
          %4855 = vmatprep.subr.mxu0 0.0
          %4856 = vmatpush1.msra.mxu0 %v4791
          %4857 = vmatprep.mubr.f32.mxu0 %v4759
          %4858 = vmatmul.mubr.f32.gmra.mrb[0].mxu0 %v4758
          %v4859 = vpop.f32.mrb[0].mxu0
          %v4860 = vadd.f32 %v4792, %v4859
          %v4861 = vpop.f32.mrb[0].mxu0
          %4862 = vdwg.mxu0
          %v4863 = vlaneseq
          %v4864 = vshrl.u32 %v4863, 7
          %v4865 = vsub.s32 0, %v4864
          %v4866 = vrot.slane %v4860, %v4865
          %4867 = vst [vmem:[%s706] sm:$0xff] %v4866
        $region144: #{biot_forward.3} parent=79 // pred_fallthru
          _
        %p4868 = scmp.lt.s32.totalorder %s38, 1
        %s4869 = scalar_select %p4868, %s38, 1
        %s4870 = smul.addr %s4869, 8
        %s4871 = scalar_lea.vmem %s15, %s4870
        // Predicated region
        $region145: #{biot_forward.3} parent=79 // pred_check
          %p4872 = pneg %p384
        $region146: #{biot_forward.3} parent=79 // pred_check_branch
          %4874 = sbr.rel (%p4872) target = $region148
        $region147: #{biot_forward.3} parent=79 // pred_region
          _
        $region148: #{biot_forward.3} parent=79 // pred_fallthru
          _
      $region80: #{biot_forward.3} parent=5 // pred_fallthru
        _
      %p4875 = scmp.le.s32.totalorder 2, %s29
      // Predicated region
      $region149: #{biot_forward.3} parent=5 // pred_check
        %p4876 = pneg %p4875
      $region150: #{biot_forward.3} parent=5 // pred_check_branch
        %4878 = sbr.rel (%p4876) target = $region152
      $region151: #{biot_forward.3} parent=5 // pred_region
        %s4879 = ssub.s32 %s29, 2
        // Predicated region
        $region153: #{biot_forward.3} parent=151 // pred_check
          %p4880 = pneg %p390
        $region154: #{biot_forward.3} parent=151 // pred_check_branch
          %4882 = sbr.rel (%p4880) target = $region156
        $region155: #{biot_forward.3} parent=151 // pred_region
          %p4883 = scmp.lt.s32.totalorder %s40, 1
          %s4884 = scalar_select %p4883, %s40, 1
          %s4885 = smul.addr %s4884, 8
          %s4886 = scalar_lea.vmem %s15, %s4885
        $region156: #{biot_forward.3} parent=151 // pred_fallthru
          _
      $region152: #{biot_forward.3} parent=5 // pred_fallthru
        _
    $region6: #{biot_forward.3} parent=1 // loop_footer
      %s33 = sadd.s32 1, %s29
    $region7: #{biot_forward.3} parent=1 // loop_footer_branch
      %28 = sbr.rel target = $region3
    $region8: #{biot_forward.3} parent=1 // loop_exit
      _
    %4887 = vsyncpa [#allocation4], 1
    %s4888 = scalar_lea.sflag [#allocation4], 1
    %4889 = vsyncpa %s4888, 1
    %4890 = vsyncpa [#allocation6], 1
    %4891 = vsyncpa [#allocation9], 1
    %4892 = vsyncpa [#allocation12], 1
    %4893 = vsyncpa [#allocation15], 1
    %4894 = vsyncpa [#allocation18], 1
    %4895 = vsyncpa [#allocation21], 1
    %4896 = vsyncpa [#allocation24], 1

</llo_original>
